<compile_context>
chip_gen: v7x
topology: tpu7x:2x2x1
jax: 0.10.0
libtpu: 0.0.40
codegen_flags: <defaults>
</compile_context>

<pallas_src>
import math

import jax
import jax.numpy as jnp
from jax.experimental import pallas as pl
from jax.experimental.pallas import tpu as pltpu

# ----------------------------- small MistralConfig -----------------------------
VOCAB = 64
HIDDEN = 32
INTERMEDIATE = 64
NUM_Q_HEADS = 4
NUM_KV_HEADS = 2
HEAD = HIDDEN // NUM_Q_HEADS                 # 8
NUM_KV_GROUPS = NUM_Q_HEADS // NUM_KV_HEADS  # 2
KV_DIM = NUM_KV_HEADS * HEAD                 # 16
NUM_LAYERS = 2
MAX_POS = 64
ROPE_THETA = 10000.0
PAD_TOKEN_ID = 0
RMS_EPS = 1e-6

BATCH = 2
SEQ = 8
TOKENS = BATCH * SEQ                         # 16
assert SEQ & (SEQ - 1) == 0                  # power of two (mask uses a shift)

Q_W = NUM_Q_HEADS * HEAD                     # 32
PROJ_W = 2 * Q_W + 3 * KV_DIM                # 112 = [q | q_rot | k | k_rot | v]
NEG_BIG = -1e30                              # cross-sequence additive bias


# ----------------------------- shared math helpers -----------------------------
def _rmsnorm(h, w):
    var = jnp.mean(h * h, axis=-1, keepdims=True)
    return (h * jax.lax.rsqrt(var + RMS_EPS)) * w


def _exact_gelu(x):
    # torch.nn.functional.gelu default (erf-based, approximate='none')
    return 0.5 * x * (1.0 + jax.lax.erf(x * (1.0 / math.sqrt(2.0))))


# ----------------------------- the fused Pallas kernel -----------------------------
def mistral_fused_kernel(xin_ref, w_in_ref, wproj_ref, wo_ref, w_post_ref,
                         wgu_ref, wd_ref, w_final_ref, out_ref):
    f32 = jnp.float32
    xin = xin_ref[...]                              # (T, 3H) = [hidden | cos | sin]
    h = xin[:, :HIDDEN]                             # (T, H)
    cos_q = xin[:, HIDDEN:2 * HIDDEN]               # (T, 32) cos tiled per q head
    sin_q = xin[:, 2 * HIDDEN:3 * HIDDEN]
    cos_k = cos_q[:, :KV_DIM]                       # (T, 16) same table tiled per kv head
    sin_k = sin_q[:, :KV_DIM]

    # Block-diagonal additive mask over the flattened token axis, built in-kernel:
    #   within-sequence: the reference's 1.0 (key<=query) / 0.0 additive bias
    #   cross-sequence : -1e30, so exp underflows to exact 0 (== per-sequence softmax)
    row = jax.lax.broadcasted_iota(jnp.int32, (TOKENS, TOKENS), 0)
    col = jax.lax.broadcasted_iota(jnp.int32, (TOKENS, TOKENS), 1)
    shift = SEQ.bit_length() - 1
    same_seq = (row >> shift) == (col >> shift)
    inside = jnp.where(col <= row, 1.0, 0.0).astype(f32)
    add_mask = jnp.where(same_seq, inside, jnp.float32(NEG_BIG))       # (T, T)

    scale = 1.0 / math.sqrt(HEAD)

    for li in range(NUM_LAYERS):                    # static unroll over the 2 layers
        # ---------------- attention ----------------
        xn = _rmsnorm(h, w_in_ref[li])                                  # (T, H)

        # ONE fused projection matmul: [q | q_rot | k | k_rot | v] (GQA kv not replicated)
        proj = jnp.dot(xn, wproj_ref[li], preferred_element_type=f32)   # (T, 112)

        # RoPE with rotate-half folded into the *_rot weights -> two VPU multiplies.
        q = proj[:, 0:Q_W] * cos_q + proj[:, Q_W:2 * Q_W] * sin_q       # (T, 32)
        k = (proj[:, 2 * Q_W:2 * Q_W + KV_DIM] * cos_k
             + proj[:, 2 * Q_W + KV_DIM:2 * Q_W + 2 * KV_DIM] * sin_k)  # (T, 16)
        v = proj[:, 2 * Q_W + 2 * KV_DIM:PROJ_W]                        # (T, 16)

        # Head-batched (N, T, HEAD); GQA group broadcast via lane slices (kv = n // 2).
        q3 = jnp.stack([q[:, n * HEAD:(n + 1) * HEAD]
                        for n in range(NUM_Q_HEADS)], axis=0)           # (4, T, 8)
        k3 = jnp.stack([k[:, (n // NUM_KV_GROUPS) * HEAD:
                             (n // NUM_KV_GROUPS + 1) * HEAD]
                        for n in range(NUM_Q_HEADS)], axis=0)           # (4, T, 8)
        v3 = jnp.stack([v[:, (n // NUM_KV_GROUPS) * HEAD:
                             (n // NUM_KV_GROUPS + 1) * HEAD]
                        for n in range(NUM_Q_HEADS)], axis=0)           # (4, T, 8)

        # Single all-token score / softmax / context over the block-diagonal mask.
        scores = (jnp.einsum('nsd,ntd->nst', q3, k3,
                             preferred_element_type=f32) * scale + add_mask)  # (4,T,T)
        m = jnp.max(scores, axis=-1, keepdims=True)
        e = jnp.exp(scores - m)
        l = jnp.sum(e, axis=-1, keepdims=True)
        p = e * pl.reciprocal(l, approx=True)                           # (4, T, T)
        ctx = jnp.einsum('nst,ntd->nsd', p, v3, preferred_element_type=f32)  # (4,T,8)

        # o_proj as ONE matmul: concat heads back along lanes -> (T, 32) @ (32, 32).
        ctx2d = jnp.concatenate([ctx[n] for n in range(NUM_Q_HEADS)], axis=-1)
        h = h + jnp.dot(ctx2d, wo_ref[li], preferred_element_type=f32)

        # ---------------- MLP (gate & up fused into one (32,128) matmul) ----------------
        xn2 = _rmsnorm(h, w_post_ref[li])
        gu = jnp.dot(xn2, wgu_ref[li], preferred_element_type=f32)      # (T, 128)
        inter = _exact_gelu(gu[:, :INTERMEDIATE]) * gu[:, INTERMEDIATE:]
        h = h + jnp.dot(inter, wd_ref[li], preferred_element_type=f32)  # (T, H)

    # ---------------- final RMSNorm ----------------
    out_ref[...] = _rmsnorm(h, w_final_ref[...])


# ----------------------------- wrapper-side weight prep -----------------------------
def rope_tables(seq_len):
    theta = 1.0 / (ROPE_THETA ** (jnp.arange(0, HEAD, 2, dtype=jnp.float32) / HEAD))
    theta = jnp.concatenate([theta, theta], axis=-1)               # (HEAD,)
    pos = jnp.arange(MAX_POS, dtype=jnp.float32)
    pm = jnp.outer(pos, theta)                                     # (MAX_POS, HEAD)
    position_ids = jnp.arange(seq_len)                             # past_kv_len = 0
    return jnp.cos(pm)[position_ids], jnp.sin(pm)[position_ids]    # (S, HEAD) each


def _rotate_half_heads(w, n_heads):
    # w: torch-layout (out, in) projection weight.  Returns W' such that
    # x @ W'^T == rotate_half(x @ W^T): per-head rows permuted / negated.
    wh = w.reshape(n_heads, HEAD, HIDDEN)
    half = HEAD // 2
    rot = jnp.concatenate([-wh[:, half:, :], wh[:, :half, :]], axis=1)
    return rot.reshape(n_heads * HEAD, HIDDEN)


def prepare_kernel_weights(layers, final_norm_w):
    wproj_l, wo_l, wgu_l, wd_l, w_in_l, w_post_l = [], [], [], [], [], []
    for p in layers:
        wq_rot = _rotate_half_heads(p["wq"], NUM_Q_HEADS)
        wk_rot = _rotate_half_heads(p["wk"], NUM_KV_HEADS)
        # fused (in, out) projection: [q | q_rot | k | k_rot | v] -> (32, 112)
        wproj_l.append(jnp.concatenate(
            [p["wq"].T, wq_rot.T, p["wk"].T, wk_rot.T, p["wv"].T], axis=1))
        wo_l.append(p["wo"].T)                                         # (32, 32) head-major in
        wgu_l.append(jnp.concatenate([p["wg"].T, p["wu"].T], axis=1))  # (32, 128)
        wd_l.append(p["wd"].T)                                         # (64, 32)
        w_in_l.append(p["w_in"].reshape(1, HIDDEN))
        w_post_l.append(p["w_post"].reshape(1, HIDDEN))

    stack = lambda xs: jnp.stack(xs, axis=0)
    return {
        "wproj": stack(wproj_l), "wo": stack(wo_l),
        "wgu": stack(wgu_l), "wd": stack(wd_l),
        "w_in": stack(w_in_l), "w_post": stack(w_post_l),
        "w_final": final_norm_w.reshape(1, HIDDEN),
    }


def init_params(key):
    def normal(k, shape):
        return 0.02 * jax.random.normal(k, shape, dtype=jnp.float32)

    keys = jax.random.split(key, 1 + NUM_LAYERS)
    embed = normal(keys[0], (VOCAB, HIDDEN))
    embed = embed.at[PAD_TOKEN_ID].set(0.0)   # nn.Embedding padding_idx row is zero

    layers = []
    for li in range(NUM_LAYERS):
        lk = jax.random.split(keys[1 + li], 7)
        layers.append({
            # torch layout (out_features, in_features)
            "wq": normal(lk[0], (HIDDEN, HIDDEN)),
            "wk": normal(lk[1], (KV_DIM, HIDDEN)),
            "wv": normal(lk[2], (KV_DIM, HIDDEN)),
            "wo": normal(lk[3], (HIDDEN, HIDDEN)),
            "wg": normal(lk[4], (INTERMEDIATE, HIDDEN)),
            "wu": normal(lk[5], (INTERMEDIATE, HIDDEN)),
            "wd": normal(lk[6], (HIDDEN, INTERMEDIATE)),
            "w_in": jnp.ones((HIDDEN,), jnp.float32),
            "w_post": jnp.ones((HIDDEN,), jnp.float32),
        })
    final_norm_w = jnp.ones((HIDDEN,), jnp.float32)
    return {"embed": embed, "layers": layers, "final_norm": final_norm_w,
            "kernel": prepare_kernel_weights(layers, final_norm_w)}


# ----------------------------- model forward (one pallas_call) -----------------------------
def mistral_model_forward(input_ids, params):
    B, S = input_ids.shape
    assert (B, S) == (BATCH, SEQ)
    # glue: embedding gather + rope tables in plain JAX (tiny, no tiling needed)
    hidden = params["embed"][input_ids].astype(jnp.float32).reshape(B * S, HIDDEN)
    cos, sin = rope_tables(S)                                 # (S, HEAD)
    cos_q = jnp.tile(cos, (B, NUM_Q_HEADS))                   # (T, 32) lane-tiled per head
    sin_q = jnp.tile(sin, (B, NUM_Q_HEADS))
    x_in = jnp.concatenate([hidden, cos_q, sin_q], axis=1)    # (T, 96): one input DMA
    kp = params["kernel"]

    per_layer_macs = (TOKENS * (HIDDEN * PROJ_W + HIDDEN * HIDDEN
                                + HIDDEN * 2 * INTERMEDIATE + INTERMEDIATE * HIDDEN)
                      + 2 * NUM_Q_HEADS * TOKENS * TOKENS * HEAD)
    cost = pl.CostEstimate(flops=2 * NUM_LAYERS * per_layer_macs,
                           transcendentals=12_000,
                           bytes_accessed=128_000)
    vmem_spec = lambda: pl.BlockSpec(memory_space=pltpu.MemorySpace.VMEM)

    out_flat = pl.pallas_call(
        mistral_fused_kernel,
        out_shape=jax.ShapeDtypeStruct((B * S, HIDDEN), jnp.float32),
        in_specs=[vmem_spec() for _ in range(8)],
        out_specs=vmem_spec(),
        cost_estimate=cost,
        # no grid: all activations + stacked layer weights fit comfortably in VMEM.
    )(x_in, kp["w_in"], kp["wproj"], kp["wo"], kp["w_post"],
      kp["wgu"], kp["wd"], kp["w_final"])
    return out_flat.reshape(B, S, HIDDEN)                     # last_hidden_state


# ----------------------------- pure-JAX reference (mirrors the torch code) -----------------------------
def _rope_ref(t, cos, sin):
    half = HEAD // 2
    rot = jnp.concatenate([-t[..., half:], t[..., :half]], axis=-1)
    return t * cos + rot * sin


def reference_forward(input_ids, params):
    B, S = input_ids.shape
    h = params["embed"][input_ids].astype(jnp.float32)              # (B, S, H)
    cos, sin = rope_tables(S)
    i = jnp.arange(S)
    mask = (i[None, :] <= i[:, None]).astype(jnp.float32)           # additive 1/0 mask
    scale = 1.0 / math.sqrt(HEAD)
    for p in params["layers"]:
        xn = _rmsnorm(h, p["w_in"])
        q = xn @ p["wq"].T
        k = xn @ p["wk"].T
        v = xn @ p["wv"].T
        q = q.reshape(B, S, NUM_Q_HEADS, HEAD).transpose(0, 2, 1, 3)
        k = k.reshape(B, S, NUM_KV_HEADS, HEAD).transpose(0, 2, 1, 3)
        v = v.reshape(B, S, NUM_KV_HEADS, HEAD).transpose(0, 2, 1, 3)
        q = _rope_ref(q, cos, sin)
        k = _rope_ref(k, cos, sin)
        k = jnp.repeat(k, NUM_KV_GROUPS, axis=1)
        v = jnp.repeat(v, NUM_KV_GROUPS, axis=1)
        scores = jnp.einsum('bnsd,bntd->bnst', q, k) * scale + mask
        w = jax.nn.softmax(scores, axis=-1)
        ctx = jnp.einsum('bnst,bntd->bnsd', w, v)
        attn = ctx.transpose(0, 2, 1, 3).reshape(B, S, HIDDEN) @ p["wo"].T
        h = h + attn
        xn2 = _rmsnorm(h, p["w_post"])
        gate = xn2 @ p["wg"].T
        up = xn2 @ p["wu"].T
        h = h + (_exact_gelu(gate) * up) @ p["wd"].T
    return _rmsnorm(h, params["final_norm"])


# ----------------------------- main -----------------------------
if __name__ == "__main__":
    key = jax.random.PRNGKey(0)
    pkey, ikey = jax.random.split(key)
    params = init_params(pkey)
    input_ids = jax.random.randint(ikey, (BATCH, SEQ), minval=1, maxval=VOCAB,
                                   dtype=jnp.int32)

    out = mistral_model_forward(input_ids, params)
    out = jax.block_until_ready(out)

    assert out.shape == (BATCH, SEQ, HIDDEN)
    assert bool(jnp.all(jnp.isfinite(out)))

    ref = reference_forward(input_ids, params)
    max_err = float(jnp.max(jnp.abs(out - ref)))
    assert max_err < 1e-2, f"kernel/reference mismatch, max abs err = {max_err}"

    print("KERNEL_OK")
</pallas_src>

<mosaic_0001>
module attributes {stable_mosaic.version = 11 : i64} {
  func.func @mistral_fused_kernel(%arg0: memref<16x96xf32, #tpu.memory_space<vmem>>, %arg1: memref<2x1x32xf32, #tpu.memory_space<vmem>>, %arg2: memref<2x32x112xf32, #tpu.memory_space<vmem>>, %arg3: memref<2x32x32xf32, #tpu.memory_space<vmem>>, %arg4: memref<2x1x32xf32, #tpu.memory_space<vmem>>, %arg5: memref<2x32x128xf32, #tpu.memory_space<vmem>>, %arg6: memref<2x64x32xf32, #tpu.memory_space<vmem>>, %arg7: memref<1x32xf32, #tpu.memory_space<vmem>>, %arg8: memref<16x32xf32, #tpu.memory_space<vmem>>) attributes {dimension_semantics = [], scalar_prefetch = 0 : i64, scratch_operands = 0 : i64, tpu.core_type = #tpu.core_type<tc>} {
    %c0 = arith.constant 0 : index
    %c0_0 = arith.constant 0 : index
    %0 = vector.load %arg0[%c0, %c0_0] : memref<16x96xf32, #tpu.memory_space<vmem>>, vector<16x96xf32>
    %1 = vector.extract_strided_slice %0 {offsets = [0, 0], sizes = [16, 32], strides = [1, 1]} : vector<16x96xf32> to vector<16x32xf32>
    %2 = vector.extract_strided_slice %0 {offsets = [0, 32], sizes = [16, 32], strides = [1, 1]} : vector<16x96xf32> to vector<16x32xf32>
    %3 = vector.extract_strided_slice %0 {offsets = [0, 64], sizes = [16, 32], strides = [1, 1]} : vector<16x96xf32> to vector<16x32xf32>
    %4 = vector.extract_strided_slice %2 {offsets = [0, 0], sizes = [16, 16], strides = [1, 1]} : vector<16x32xf32> to vector<16x16xf32>
    %5 = vector.extract_strided_slice %3 {offsets = [0, 0], sizes = [16, 16], strides = [1, 1]} : vector<16x32xf32> to vector<16x16xf32>
    %6 = tpu.iota {dimensions = array<i32: 0>} : vector<16x16xi32>
    %7 = tpu.iota {dimensions = array<i32: 1>} : vector<16x16xi32>
    %c3_i32 = arith.constant 3 : i32
    %8 = vector.broadcast %c3_i32 : i32 to vector<16x16xi32>
    %9 = arith.shrsi %6, %8 : vector<16x16xi32>
    %c3_i32_1 = arith.constant 3 : i32
    %10 = vector.broadcast %c3_i32_1 : i32 to vector<16x16xi32>
    %11 = arith.shrsi %7, %10 : vector<16x16xi32>
    %12 = arith.cmpi eq, %9, %11 : vector<16x16xi32>
    %13 = arith.cmpi sle, %7, %6 : vector<16x16xi32>
    %cst = arith.constant 1.000000e+00 : f32
    %cst_2 = arith.constant 0.000000e+00 : f32
    %14 = vector.broadcast %cst : f32 to vector<16x16xf32>
    %15 = vector.broadcast %cst_2 : f32 to vector<16x16xf32>
    %16 = arith.select %13, %14, %15 : vector<16x16xi1>, vector<16x16xf32>
    %cst_3 = arith.constant -1.000000e+30 : f32
    %17 = vector.broadcast %cst_3 : f32 to vector<16x16xf32>
    %18 = arith.select %12, %16, %17 : vector<16x16xi1>, vector<16x16xf32>
    %c0_4 = arith.constant 0 : index
    %c0_5 = arith.constant 0 : index
    %c0_6 = arith.constant 0 : index
    %19 = vector.load %arg1[%c0_4, %c0_5, %c0_6] : memref<2x1x32xf32, #tpu.memory_space<vmem>>, vector<1x1x32xf32>
    %20 = vector.shape_cast %19 : vector<1x1x32xf32> to vector<1x32xf32>
    %21 = arith.mulf %1, %1 : vector<16x32xf32>
    %cst_7 = arith.constant dense<0.000000e+00> : vector<16xf32>
    %22 = vector.multi_reduction <add>, %21, %cst_7 [1] : vector<16x32xf32> to vector<16xf32>
    %23 = vector.shape_cast %22 : vector<16xf32> to vector<16x1xf32>
    %cst_8 = arith.constant 3.200000e+01 : f32
    %24 = vector.broadcast %cst_8 : f32 to vector<16x1xf32>
    %25 = arith.divf %23, %24 : vector<16x1xf32>
    %cst_9 = arith.constant 9.99999997E-7 : f32
    %26 = vector.broadcast %cst_9 : f32 to vector<16x1xf32>
    %27 = arith.addf %25, %26 : vector<16x1xf32>
    %28 = math.rsqrt %27 : vector<16x1xf32>
    %29 = vector.broadcast %28 : vector<16x1xf32> to vector<16x32xf32>
    %30 = arith.mulf %1, %29 : vector<16x32xf32>
    %31 = vector.broadcast %20 : vector<1x32xf32> to vector<16x32xf32>
    %32 = arith.mulf %30, %31 : vector<16x32xf32>
    %c0_10 = arith.constant 0 : index
    %c0_11 = arith.constant 0 : index
    %c0_12 = arith.constant 0 : index
    %33 = vector.load %arg2[%c0_10, %c0_11, %c0_12] : memref<2x32x112xf32, #tpu.memory_space<vmem>>, vector<1x32x112xf32>
    %34 = vector.shape_cast %33 : vector<1x32x112xf32> to vector<32x112xf32>
    %cst_13 = arith.constant dense<0.000000e+00> : vector<16x112xf32>
    %35 = tpu.matmul %32, %34, %cst_13 {dimension_numbers = #tpu.dot_dimension_numbers<[1], [0], [0], [1], [0, 0, 1, 1], [], []>} : vector<16x32xf32>, vector<32x112xf32>, vector<16x112xf32> -> vector<16x112xf32>
    %36 = vector.extract_strided_slice %35 {offsets = [0, 0], sizes = [16, 32], strides = [1, 1]} : vector<16x112xf32> to vector<16x32xf32>
    %37 = arith.mulf %36, %2 : vector<16x32xf32>
    %38 = vector.extract_strided_slice %35 {offsets = [0, 32], sizes = [16, 32], strides = [1, 1]} : vector<16x112xf32> to vector<16x32xf32>
    %39 = arith.mulf %38, %3 : vector<16x32xf32>
    %40 = arith.addf %37, %39 : vector<16x32xf32>
    %41 = vector.extract_strided_slice %35 {offsets = [0, 64], sizes = [16, 16], strides = [1, 1]} : vector<16x112xf32> to vector<16x16xf32>
    %42 = arith.mulf %41, %4 : vector<16x16xf32>
    %43 = vector.extract_strided_slice %35 {offsets = [0, 80], sizes = [16, 16], strides = [1, 1]} : vector<16x112xf32> to vector<16x16xf32>
    %44 = arith.mulf %43, %5 : vector<16x16xf32>
    %45 = arith.addf %42, %44 : vector<16x16xf32>
    %46 = vector.extract_strided_slice %35 {offsets = [0, 96], sizes = [16, 16], strides = [1, 1]} : vector<16x112xf32> to vector<16x16xf32>
    %47 = vector.extract_strided_slice %40 {offsets = [0, 0], sizes = [16, 8], strides = [1, 1]} : vector<16x32xf32> to vector<16x8xf32>
    %48 = vector.extract_strided_slice %40 {offsets = [0, 8], sizes = [16, 8], strides = [1, 1]} : vector<16x32xf32> to vector<16x8xf32>
    %49 = vector.extract_strided_slice %40 {offsets = [0, 16], sizes = [16, 8], strides = [1, 1]} : vector<16x32xf32> to vector<16x8xf32>
    %50 = vector.extract_strided_slice %40 {offsets = [0, 24], sizes = [16, 8], strides = [1, 1]} : vector<16x32xf32> to vector<16x8xf32>
    %51 = vector.shape_cast %47 : vector<16x8xf32> to vector<1x16x8xf32>
    %52 = vector.shape_cast %48 : vector<16x8xf32> to vector<1x16x8xf32>
    %53 = vector.shape_cast %49 : vector<16x8xf32> to vector<1x16x8xf32>
    %54 = vector.shape_cast %50 : vector<16x8xf32> to vector<1x16x8xf32>
    %55 = tpu.concatenate %51, %52, %53, %54 in 0 : vector<1x16x8xf32>, vector<1x16x8xf32>, vector<1x16x8xf32>, vector<1x16x8xf32> -> vector<4x16x8xf32>
    %56 = vector.extract_strided_slice %45 {offsets = [0, 0], sizes = [16, 8], strides = [1, 1]} : vector<16x16xf32> to vector<16x8xf32>
    %57 = vector.extract_strided_slice %45 {offsets = [0, 0], sizes = [16, 8], strides = [1, 1]} : vector<16x16xf32> to vector<16x8xf32>
    %58 = vector.extract_strided_slice %45 {offsets = [0, 8], sizes = [16, 8], strides = [1, 1]} : vector<16x16xf32> to vector<16x8xf32>
    %59 = vector.extract_strided_slice %45 {offsets = [0, 8], sizes = [16, 8], strides = [1, 1]} : vector<16x16xf32> to vector<16x8xf32>
    %60 = vector.shape_cast %56 : vector<16x8xf32> to vector<1x16x8xf32>
    %61 = vector.shape_cast %57 : vector<16x8xf32> to vector<1x16x8xf32>
    %62 = vector.shape_cast %58 : vector<16x8xf32> to vector<1x16x8xf32>
    %63 = vector.shape_cast %59 : vector<16x8xf32> to vector<1x16x8xf32>
    %64 = tpu.concatenate %60, %61, %62, %63 in 0 : vector<1x16x8xf32>, vector<1x16x8xf32>, vector<1x16x8xf32>, vector<1x16x8xf32> -> vector<4x16x8xf32>
    %65 = vector.extract_strided_slice %46 {offsets = [0, 0], sizes = [16, 8], strides = [1, 1]} : vector<16x16xf32> to vector<16x8xf32>
    %66 = vector.extract_strided_slice %46 {offsets = [0, 0], sizes = [16, 8], strides = [1, 1]} : vector<16x16xf32> to vector<16x8xf32>
    %67 = vector.extract_strided_slice %46 {offsets = [0, 8], sizes = [16, 8], strides = [1, 1]} : vector<16x16xf32> to vector<16x8xf32>
    %68 = vector.extract_strided_slice %46 {offsets = [0, 8], sizes = [16, 8], strides = [1, 1]} : vector<16x16xf32> to vector<16x8xf32>
    %69 = vector.shape_cast %65 : vector<16x8xf32> to vector<1x16x8xf32>
    %70 = vector.shape_cast %66 : vector<16x8xf32> to vector<1x16x8xf32>
    %71 = vector.shape_cast %67 : vector<16x8xf32> to vector<1x16x8xf32>
    %72 = vector.shape_cast %68 : vector<16x8xf32> to vector<1x16x8xf32>
    %73 = tpu.concatenate %69, %70, %71, %72 in 0 : vector<1x16x8xf32>, vector<1x16x8xf32>, vector<1x16x8xf32>, vector<1x16x8xf32> -> vector<4x16x8xf32>
    "tpu.trace_start"() <{level = 10 : i32, message = "nsd,ntd->nst"}> : () -> ()
    %cst_14 = arith.constant dense<0.000000e+00> : vector<4x16x16xf32>
    %74 = tpu.matmul %55, %64, %cst_14 {dimension_numbers = #tpu.dot_dimension_numbers<[2], [2], [1], [1], [0, 0, 0, 1, 1, 1], [0], [0]>} : vector<4x16x8xf32>, vector<4x16x8xf32>, vector<4x16x16xf32> -> vector<4x16x16xf32>
    "tpu.trace_stop"() : () -> ()
    %cst_15 = arith.constant 0.353553385 : f32
    %75 = vector.broadcast %cst_15 : f32 to vector<4x16x16xf32>
    %76 = arith.mulf %74, %75 : vector<4x16x16xf32>
    %77 = vector.shape_cast %18 : vector<16x16xf32> to vector<1x16x16xf32>
    %78 = vector.broadcast %77 : vector<1x16x16xf32> to vector<4x16x16xf32>
    %79 = arith.addf %76, %78 : vector<4x16x16xf32>
    %cst_16 = arith.constant dense<0xFF800000> : vector<4x16xf32>
    %80 = vector.multi_reduction <maximumf>, %79, %cst_16 [2] : vector<4x16x16xf32> to vector<4x16xf32>
    %81 = vector.shape_cast %80 : vector<4x16xf32> to vector<4x16x1xf32>
    %82 = vector.broadcast %81 : vector<4x16x1xf32> to vector<4x16x16xf32>
    %83 = arith.subf %79, %82 : vector<4x16x16xf32>
    %84 = math.exp %83 : vector<4x16x16xf32>
    %cst_17 = arith.constant dense<0.000000e+00> : vector<4x16xf32>
    %85 = vector.multi_reduction <add>, %84, %cst_17 [2] : vector<4x16x16xf32> to vector<4x16xf32>
    %86 = vector.shape_cast %85 : vector<4x16xf32> to vector<4x16x1xf32>
    %87 = tpu.reciprocal %86 {approx = true} : vector<4x16x1xf32> -> vector<4x16x1xf32>
    %88 = vector.broadcast %87 : vector<4x16x1xf32> to vector<4x16x16xf32>
    %89 = arith.mulf %84, %88 : vector<4x16x16xf32>
    "tpu.trace_start"() <{level = 10 : i32, message = "nst,ntd->nsd"}> : () -> ()
    %cst_18 = arith.constant dense<0.000000e+00> : vector<4x16x8xf32>
    %90 = tpu.matmul %89, %73, %cst_18 {dimension_numbers = #tpu.dot_dimension_numbers<[2], [1], [1], [2], [0, 0, 0, 1, 1, 2], [0], [0]>} : vector<4x16x16xf32>, vector<4x16x8xf32>, vector<4x16x8xf32> -> vector<4x16x8xf32>
    "tpu.trace_stop"() : () -> ()
    %91 = vector.extract_strided_slice %90 {offsets = [0, 0, 0], sizes = [1, 16, 8], strides = [1, 1, 1]} : vector<4x16x8xf32> to vector<1x16x8xf32>
    %92 = vector.shape_cast %91 : vector<1x16x8xf32> to vector<16x8xf32>
    %93 = vector.extract_strided_slice %90 {offsets = [1, 0, 0], sizes = [1, 16, 8], strides = [1, 1, 1]} : vector<4x16x8xf32> to vector<1x16x8xf32>
    %94 = vector.shape_cast %93 : vector<1x16x8xf32> to vector<16x8xf32>
    %95 = vector.extract_strided_slice %90 {offsets = [2, 0, 0], sizes = [1, 16, 8], strides = [1, 1, 1]} : vector<4x16x8xf32> to vector<1x16x8xf32>
    %96 = vector.shape_cast %95 : vector<1x16x8xf32> to vector<16x8xf32>
    %97 = vector.extract_strided_slice %90 {offsets = [3, 0, 0], sizes = [1, 16, 8], strides = [1, 1, 1]} : vector<4x16x8xf32> to vector<1x16x8xf32>
    %98 = vector.shape_cast %97 : vector<1x16x8xf32> to vector<16x8xf32>
    %99 = tpu.concatenate %92, %94, %96, %98 in 1 : vector<16x8xf32>, vector<16x8xf32>, vector<16x8xf32>, vector<16x8xf32> -> vector<16x32xf32>
    %c0_19 = arith.constant 0 : index
    %c0_20 = arith.constant 0 : index
    %c0_21 = arith.constant 0 : index
    %100 = vector.load %arg3[%c0_19, %c0_20, %c0_21] : memref<2x32x32xf32, #tpu.memory_space<vmem>>, vector<1x32x32xf32>
    %101 = vector.shape_cast %100 : vector<1x32x32xf32> to vector<32x32xf32>
    %cst_22 = arith.constant dense<0.000000e+00> : vector<16x32xf32>
    %102 = tpu.matmul %99, %101, %cst_22 {dimension_numbers = #tpu.dot_dimension_numbers<[1], [0], [0], [1], [0, 0, 1, 1], [], []>} : vector<16x32xf32>, vector<32x32xf32>, vector<16x32xf32> -> vector<16x32xf32>
    %103 = arith.addf %1, %102 : vector<16x32xf32>
    %c0_23 = arith.constant 0 : index
    %c0_24 = arith.constant 0 : index
    %c0_25 = arith.constant 0 : index
    %104 = vector.load %arg4[%c0_23, %c0_24, %c0_25] : memref<2x1x32xf32, #tpu.memory_space<vmem>>, vector<1x1x32xf32>
    %105 = vector.shape_cast %104 : vector<1x1x32xf32> to vector<1x32xf32>
    %106 = arith.mulf %103, %103 : vector<16x32xf32>
    %cst_26 = arith.constant dense<0.000000e+00> : vector<16xf32>
    %107 = vector.multi_reduction <add>, %106, %cst_26 [1] : vector<16x32xf32> to vector<16xf32>
    %108 = vector.shape_cast %107 : vector<16xf32> to vector<16x1xf32>
    %cst_27 = arith.constant 3.200000e+01 : f32
    %109 = vector.broadcast %cst_27 : f32 to vector<16x1xf32>
    %110 = arith.divf %108, %109 : vector<16x1xf32>
    %cst_28 = arith.constant 9.99999997E-7 : f32
    %111 = vector.broadcast %cst_28 : f32 to vector<16x1xf32>
    %112 = arith.addf %110, %111 : vector<16x1xf32>
    %113 = math.rsqrt %112 : vector<16x1xf32>
    %114 = vector.broadcast %113 : vector<16x1xf32> to vector<16x32xf32>
    %115 = arith.mulf %103, %114 : vector<16x32xf32>
    %116 = vector.broadcast %105 : vector<1x32xf32> to vector<16x32xf32>
    %117 = arith.mulf %115, %116 : vector<16x32xf32>
    %c0_29 = arith.constant 0 : index
    %c0_30 = arith.constant 0 : index
    %c0_31 = arith.constant 0 : index
    %118 = vector.load %arg5[%c0_29, %c0_30, %c0_31] : memref<2x32x128xf32, #tpu.memory_space<vmem>>, vector<1x32x128xf32>
    %119 = vector.shape_cast %118 : vector<1x32x128xf32> to vector<32x128xf32>
    %cst_32 = arith.constant dense<0.000000e+00> : vector<16x128xf32>
    %120 = tpu.matmul %117, %119, %cst_32 {dimension_numbers = #tpu.dot_dimension_numbers<[1], [0], [0], [1], [0, 0, 1, 1], [], []>} : vector<16x32xf32>, vector<32x128xf32>, vector<16x128xf32> -> vector<16x128xf32>
    %121 = vector.extract_strided_slice %120 {offsets = [0, 0], sizes = [16, 64], strides = [1, 1]} : vector<16x128xf32> to vector<16x64xf32>
    %cst_33 = arith.constant 5.000000e-01 : f32
    %122 = vector.broadcast %cst_33 : f32 to vector<16x64xf32>
    %123 = arith.mulf %122, %121 : vector<16x64xf32>
    %cst_34 = arith.constant 0.707106769 : f32
    %124 = vector.broadcast %cst_34 : f32 to vector<16x64xf32>
    %125 = arith.mulf %121, %124 : vector<16x64xf32>
    %126 = math.erf %125 : vector<16x64xf32>
    %cst_35 = arith.constant 1.000000e+00 : f32
    %127 = vector.broadcast %cst_35 : f32 to vector<16x64xf32>
    %128 = arith.addf %127, %126 : vector<16x64xf32>
    %129 = arith.mulf %123, %128 : vector<16x64xf32>
    %130 = vector.extract_strided_slice %120 {offsets = [0, 64], sizes = [16, 64], strides = [1, 1]} : vector<16x128xf32> to vector<16x64xf32>
    %131 = arith.mulf %129, %130 : vector<16x64xf32>
    %c0_36 = arith.constant 0 : index
    %c0_37 = arith.constant 0 : index
    %c0_38 = arith.constant 0 : index
    %132 = vector.load %arg6[%c0_36, %c0_37, %c0_38] : memref<2x64x32xf32, #tpu.memory_space<vmem>>, vector<1x64x32xf32>
    %133 = vector.shape_cast %132 : vector<1x64x32xf32> to vector<64x32xf32>
    %cst_39 = arith.constant dense<0.000000e+00> : vector<16x32xf32>
    %134 = tpu.matmul %131, %133, %cst_39 {dimension_numbers = #tpu.dot_dimension_numbers<[1], [0], [0], [1], [0, 0, 1, 1], [], []>} : vector<16x64xf32>, vector<64x32xf32>, vector<16x32xf32> -> vector<16x32xf32>
    %135 = arith.addf %103, %134 : vector<16x32xf32>
    %c1 = arith.constant 1 : index
    %c0_40 = arith.constant 0 : index
    %c0_41 = arith.constant 0 : index
    %136 = vector.load %arg1[%c1, %c0_40, %c0_41] : memref<2x1x32xf32, #tpu.memory_space<vmem>>, vector<1x1x32xf32>
    %137 = vector.shape_cast %136 : vector<1x1x32xf32> to vector<1x32xf32>
    %138 = arith.mulf %135, %135 : vector<16x32xf32>
    %cst_42 = arith.constant dense<0.000000e+00> : vector<16xf32>
    %139 = vector.multi_reduction <add>, %138, %cst_42 [1] : vector<16x32xf32> to vector<16xf32>
    %140 = vector.shape_cast %139 : vector<16xf32> to vector<16x1xf32>
    %cst_43 = arith.constant 3.200000e+01 : f32
    %141 = vector.broadcast %cst_43 : f32 to vector<16x1xf32>
    %142 = arith.divf %140, %141 : vector<16x1xf32>
    %cst_44 = arith.constant 9.99999997E-7 : f32
    %143 = vector.broadcast %cst_44 : f32 to vector<16x1xf32>
    %144 = arith.addf %142, %143 : vector<16x1xf32>
    %145 = math.rsqrt %144 : vector<16x1xf32>
    %146 = vector.broadcast %145 : vector<16x1xf32> to vector<16x32xf32>
    %147 = arith.mulf %135, %146 : vector<16x32xf32>
    %148 = vector.broadcast %137 : vector<1x32xf32> to vector<16x32xf32>
    %149 = arith.mulf %147, %148 : vector<16x32xf32>
    %c1_45 = arith.constant 1 : index
    %c0_46 = arith.constant 0 : index
    %c0_47 = arith.constant 0 : index
    %150 = vector.load %arg2[%c1_45, %c0_46, %c0_47] : memref<2x32x112xf32, #tpu.memory_space<vmem>>, vector<1x32x112xf32>
    %151 = vector.shape_cast %150 : vector<1x32x112xf32> to vector<32x112xf32>
    %cst_48 = arith.constant dense<0.000000e+00> : vector<16x112xf32>
    %152 = tpu.matmul %149, %151, %cst_48 {dimension_numbers = #tpu.dot_dimension_numbers<[1], [0], [0], [1], [0, 0, 1, 1], [], []>} : vector<16x32xf32>, vector<32x112xf32>, vector<16x112xf32> -> vector<16x112xf32>
    %153 = vector.extract_strided_slice %152 {offsets = [0, 0], sizes = [16, 32], strides = [1, 1]} : vector<16x112xf32> to vector<16x32xf32>
    %154 = arith.mulf %153, %2 : vector<16x32xf32>
    %155 = vector.extract_strided_slice %152 {offsets = [0, 32], sizes = [16, 32], strides = [1, 1]} : vector<16x112xf32> to vector<16x32xf32>
    %156 = arith.mulf %155, %3 : vector<16x32xf32>
    %157 = arith.addf %154, %156 : vector<16x32xf32>
    %158 = vector.extract_strided_slice %152 {offsets = [0, 64], sizes = [16, 16], strides = [1, 1]} : vector<16x112xf32> to vector<16x16xf32>
    %159 = arith.mulf %158, %4 : vector<16x16xf32>
    %160 = vector.extract_strided_slice %152 {offsets = [0, 80], sizes = [16, 16], strides = [1, 1]} : vector<16x112xf32> to vector<16x16xf32>
    %161 = arith.mulf %160, %5 : vector<16x16xf32>
    %162 = arith.addf %159, %161 : vector<16x16xf32>
    %163 = vector.extract_strided_slice %152 {offsets = [0, 96], sizes = [16, 16], strides = [1, 1]} : vector<16x112xf32> to vector<16x16xf32>
    %164 = vector.extract_strided_slice %157 {offsets = [0, 0], sizes = [16, 8], strides = [1, 1]} : vector<16x32xf32> to vector<16x8xf32>
    %165 = vector.extract_strided_slice %157 {offsets = [0, 8], sizes = [16, 8], strides = [1, 1]} : vector<16x32xf32> to vector<16x8xf32>
    %166 = vector.extract_strided_slice %157 {offsets = [0, 16], sizes = [16, 8], strides = [1, 1]} : vector<16x32xf32> to vector<16x8xf32>
    %167 = vector.extract_strided_slice %157 {offsets = [0, 24], sizes = [16, 8], strides = [1, 1]} : vector<16x32xf32> to vector<16x8xf32>
    %168 = vector.shape_cast %164 : vector<16x8xf32> to vector<1x16x8xf32>
    %169 = vector.shape_cast %165 : vector<16x8xf32> to vector<1x16x8xf32>
    %170 = vector.shape_cast %166 : vector<16x8xf32> to vector<1x16x8xf32>
    %171 = vector.shape_cast %167 : vector<16x8xf32> to vector<1x16x8xf32>
    %172 = tpu.concatenate %168, %169, %170, %171 in 0 : vector<1x16x8xf32>, vector<1x16x8xf32>, vector<1x16x8xf32>, vector<1x16x8xf32> -> vector<4x16x8xf32>
    %173 = vector.extract_strided_slice %162 {offsets = [0, 0], sizes = [16, 8], strides = [1, 1]} : vector<16x16xf32> to vector<16x8xf32>
    %174 = vector.extract_strided_slice %162 {offsets = [0, 0], sizes = [16, 8], strides = [1, 1]} : vector<16x16xf32> to vector<16x8xf32>
    %175 = vector.extract_strided_slice %162 {offsets = [0, 8], sizes = [16, 8], strides = [1, 1]} : vector<16x16xf32> to vector<16x8xf32>
    %176 = vector.extract_strided_slice %162 {offsets = [0, 8], sizes = [16, 8], strides = [1, 1]} : vector<16x16xf32> to vector<16x8xf32>
    %177 = vector.shape_cast %173 : vector<16x8xf32> to vector<1x16x8xf32>
    %178 = vector.shape_cast %174 : vector<16x8xf32> to vector<1x16x8xf32>
    %179 = vector.shape_cast %175 : vector<16x8xf32> to vector<1x16x8xf32>
    %180 = vector.shape_cast %176 : vector<16x8xf32> to vector<1x16x8xf32>
    %181 = tpu.concatenate %177, %178, %179, %180 in 0 : vector<1x16x8xf32>, vector<1x16x8xf32>, vector<1x16x8xf32>, vector<1x16x8xf32> -> vector<4x16x8xf32>
    %182 = vector.extract_strided_slice %163 {offsets = [0, 0], sizes = [16, 8], strides = [1, 1]} : vector<16x16xf32> to vector<16x8xf32>
    %183 = vector.extract_strided_slice %163 {offsets = [0, 0], sizes = [16, 8], strides = [1, 1]} : vector<16x16xf32> to vector<16x8xf32>
    %184 = vector.extract_strided_slice %163 {offsets = [0, 8], sizes = [16, 8], strides = [1, 1]} : vector<16x16xf32> to vector<16x8xf32>
    %185 = vector.extract_strided_slice %163 {offsets = [0, 8], sizes = [16, 8], strides = [1, 1]} : vector<16x16xf32> to vector<16x8xf32>
    %186 = vector.shape_cast %182 : vector<16x8xf32> to vector<1x16x8xf32>
    %187 = vector.shape_cast %183 : vector<16x8xf32> to vector<1x16x8xf32>
    %188 = vector.shape_cast %184 : vector<16x8xf32> to vector<1x16x8xf32>
    %189 = vector.shape_cast %185 : vector<16x8xf32> to vector<1x16x8xf32>
    %190 = tpu.concatenate %186, %187, %188, %189 in 0 : vector<1x16x8xf32>, vector<1x16x8xf32>, vector<1x16x8xf32>, vector<1x16x8xf32> -> vector<4x16x8xf32>
    "tpu.trace_start"() <{level = 10 : i32, message = "nsd,ntd->nst"}> : () -> ()
    %cst_49 = arith.constant dense<0.000000e+00> : vector<4x16x16xf32>
    %191 = tpu.matmul %172, %181, %cst_49 {dimension_numbers = #tpu.dot_dimension_numbers<[2], [2], [1], [1], [0, 0, 0, 1, 1, 1], [0], [0]>} : vector<4x16x8xf32>, vector<4x16x8xf32>, vector<4x16x16xf32> -> vector<4x16x16xf32>
    "tpu.trace_stop"() : () -> ()
    %cst_50 = arith.constant 0.353553385 : f32
    %192 = vector.broadcast %cst_50 : f32 to vector<4x16x16xf32>
    %193 = arith.mulf %191, %192 : vector<4x16x16xf32>
    %194 = vector.shape_cast %18 : vector<16x16xf32> to vector<1x16x16xf32>
    %195 = vector.broadcast %194 : vector<1x16x16xf32> to vector<4x16x16xf32>
    %196 = arith.addf %193, %195 : vector<4x16x16xf32>
    %cst_51 = arith.constant dense<0xFF800000> : vector<4x16xf32>
    %197 = vector.multi_reduction <maximumf>, %196, %cst_51 [2] : vector<4x16x16xf32> to vector<4x16xf32>
    %198 = vector.shape_cast %197 : vector<4x16xf32> to vector<4x16x1xf32>
    %199 = vector.broadcast %198 : vector<4x16x1xf32> to vector<4x16x16xf32>
    %200 = arith.subf %196, %199 : vector<4x16x16xf32>
    %201 = math.exp %200 : vector<4x16x16xf32>
    %cst_52 = arith.constant dense<0.000000e+00> : vector<4x16xf32>
    %202 = vector.multi_reduction <add>, %201, %cst_52 [2] : vector<4x16x16xf32> to vector<4x16xf32>
    %203 = vector.shape_cast %202 : vector<4x16xf32> to vector<4x16x1xf32>
    %204 = tpu.reciprocal %203 {approx = true} : vector<4x16x1xf32> -> vector<4x16x1xf32>
    %205 = vector.broadcast %204 : vector<4x16x1xf32> to vector<4x16x16xf32>
    %206 = arith.mulf %201, %205 : vector<4x16x16xf32>
    "tpu.trace_start"() <{level = 10 : i32, message = "nst,ntd->nsd"}> : () -> ()
    %cst_53 = arith.constant dense<0.000000e+00> : vector<4x16x8xf32>
    %207 = tpu.matmul %206, %190, %cst_53 {dimension_numbers = #tpu.dot_dimension_numbers<[2], [1], [1], [2], [0, 0, 0, 1, 1, 2], [0], [0]>} : vector<4x16x16xf32>, vector<4x16x8xf32>, vector<4x16x8xf32> -> vector<4x16x8xf32>
    "tpu.trace_stop"() : () -> ()
    %208 = vector.extract_strided_slice %207 {offsets = [0, 0, 0], sizes = [1, 16, 8], strides = [1, 1, 1]} : vector<4x16x8xf32> to vector<1x16x8xf32>
    %209 = vector.shape_cast %208 : vector<1x16x8xf32> to vector<16x8xf32>
    %210 = vector.extract_strided_slice %207 {offsets = [1, 0, 0], sizes = [1, 16, 8], strides = [1, 1, 1]} : vector<4x16x8xf32> to vector<1x16x8xf32>
    %211 = vector.shape_cast %210 : vector<1x16x8xf32> to vector<16x8xf32>
    %212 = vector.extract_strided_slice %207 {offsets = [2, 0, 0], sizes = [1, 16, 8], strides = [1, 1, 1]} : vector<4x16x8xf32> to vector<1x16x8xf32>
    %213 = vector.shape_cast %212 : vector<1x16x8xf32> to vector<16x8xf32>
    %214 = vector.extract_strided_slice %207 {offsets = [3, 0, 0], sizes = [1, 16, 8], strides = [1, 1, 1]} : vector<4x16x8xf32> to vector<1x16x8xf32>
    %215 = vector.shape_cast %214 : vector<1x16x8xf32> to vector<16x8xf32>
    %216 = tpu.concatenate %209, %211, %213, %215 in 1 : vector<16x8xf32>, vector<16x8xf32>, vector<16x8xf32>, vector<16x8xf32> -> vector<16x32xf32>
    %c1_54 = arith.constant 1 : index
    %c0_55 = arith.constant 0 : index
    %c0_56 = arith.constant 0 : index
    %217 = vector.load %arg3[%c1_54, %c0_55, %c0_56] : memref<2x32x32xf32, #tpu.memory_space<vmem>>, vector<1x32x32xf32>
    %218 = vector.shape_cast %217 : vector<1x32x32xf32> to vector<32x32xf32>
    %cst_57 = arith.constant dense<0.000000e+00> : vector<16x32xf32>
    %219 = tpu.matmul %216, %218, %cst_57 {dimension_numbers = #tpu.dot_dimension_numbers<[1], [0], [0], [1], [0, 0, 1, 1], [], []>} : vector<16x32xf32>, vector<32x32xf32>, vector<16x32xf32> -> vector<16x32xf32>
    %220 = arith.addf %135, %219 : vector<16x32xf32>
    %c1_58 = arith.constant 1 : index
    %c0_59 = arith.constant 0 : index
    %c0_60 = arith.constant 0 : index
    %221 = vector.load %arg4[%c1_58, %c0_59, %c0_60] : memref<2x1x32xf32, #tpu.memory_space<vmem>>, vector<1x1x32xf32>
    %222 = vector.shape_cast %221 : vector<1x1x32xf32> to vector<1x32xf32>
    %223 = arith.mulf %220, %220 : vector<16x32xf32>
    %cst_61 = arith.constant dense<0.000000e+00> : vector<16xf32>
    %224 = vector.multi_reduction <add>, %223, %cst_61 [1] : vector<16x32xf32> to vector<16xf32>
    %225 = vector.shape_cast %224 : vector<16xf32> to vector<16x1xf32>
    %cst_62 = arith.constant 3.200000e+01 : f32
    %226 = vector.broadcast %cst_62 : f32 to vector<16x1xf32>
    %227 = arith.divf %225, %226 : vector<16x1xf32>
    %cst_63 = arith.constant 9.99999997E-7 : f32
    %228 = vector.broadcast %cst_63 : f32 to vector<16x1xf32>
    %229 = arith.addf %227, %228 : vector<16x1xf32>
    %230 = math.rsqrt %229 : vector<16x1xf32>
    %231 = vector.broadcast %230 : vector<16x1xf32> to vector<16x32xf32>
    %232 = arith.mulf %220, %231 : vector<16x32xf32>
    %233 = vector.broadcast %222 : vector<1x32xf32> to vector<16x32xf32>
    %234 = arith.mulf %232, %233 : vector<16x32xf32>
    %c1_64 = arith.constant 1 : index
    %c0_65 = arith.constant 0 : index
    %c0_66 = arith.constant 0 : index
    %235 = vector.load %arg5[%c1_64, %c0_65, %c0_66] : memref<2x32x128xf32, #tpu.memory_space<vmem>>, vector<1x32x128xf32>
    %236 = vector.shape_cast %235 : vector<1x32x128xf32> to vector<32x128xf32>
    %cst_67 = arith.constant dense<0.000000e+00> : vector<16x128xf32>
    %237 = tpu.matmul %234, %236, %cst_67 {dimension_numbers = #tpu.dot_dimension_numbers<[1], [0], [0], [1], [0, 0, 1, 1], [], []>} : vector<16x32xf32>, vector<32x128xf32>, vector<16x128xf32> -> vector<16x128xf32>
    %238 = vector.extract_strided_slice %237 {offsets = [0, 0], sizes = [16, 64], strides = [1, 1]} : vector<16x128xf32> to vector<16x64xf32>
    %cst_68 = arith.constant 5.000000e-01 : f32
    %239 = vector.broadcast %cst_68 : f32 to vector<16x64xf32>
    %240 = arith.mulf %239, %238 : vector<16x64xf32>
    %cst_69 = arith.constant 0.707106769 : f32
    %241 = vector.broadcast %cst_69 : f32 to vector<16x64xf32>
    %242 = arith.mulf %238, %241 : vector<16x64xf32>
    %243 = math.erf %242 : vector<16x64xf32>
    %cst_70 = arith.constant 1.000000e+00 : f32
    %244 = vector.broadcast %cst_70 : f32 to vector<16x64xf32>
    %245 = arith.addf %244, %243 : vector<16x64xf32>
    %246 = arith.mulf %240, %245 : vector<16x64xf32>
    %247 = vector.extract_strided_slice %237 {offsets = [0, 64], sizes = [16, 64], strides = [1, 1]} : vector<16x128xf32> to vector<16x64xf32>
    %248 = arith.mulf %246, %247 : vector<16x64xf32>
    %c1_71 = arith.constant 1 : index
    %c0_72 = arith.constant 0 : index
    %c0_73 = arith.constant 0 : index
    %249 = vector.load %arg6[%c1_71, %c0_72, %c0_73] : memref<2x64x32xf32, #tpu.memory_space<vmem>>, vector<1x64x32xf32>
    %250 = vector.shape_cast %249 : vector<1x64x32xf32> to vector<64x32xf32>
    %cst_74 = arith.constant dense<0.000000e+00> : vector<16x32xf32>
    %251 = tpu.matmul %248, %250, %cst_74 {dimension_numbers = #tpu.dot_dimension_numbers<[1], [0], [0], [1], [0, 0, 1, 1], [], []>} : vector<16x64xf32>, vector<64x32xf32>, vector<16x32xf32> -> vector<16x32xf32>
    %252 = arith.addf %220, %251 : vector<16x32xf32>
    %c0_75 = arith.constant 0 : index
    %c0_76 = arith.constant 0 : index
    %253 = vector.load %arg7[%c0_75, %c0_76] : memref<1x32xf32, #tpu.memory_space<vmem>>, vector<1x32xf32>
    %254 = arith.mulf %252, %252 : vector<16x32xf32>
    %cst_77 = arith.constant dense<0.000000e+00> : vector<16xf32>
    %255 = vector.multi_reduction <add>, %254, %cst_77 [1] : vector<16x32xf32> to vector<16xf32>
    %256 = vector.shape_cast %255 : vector<16xf32> to vector<16x1xf32>
    %cst_78 = arith.constant 3.200000e+01 : f32
    %257 = vector.broadcast %cst_78 : f32 to vector<16x1xf32>
    %258 = arith.divf %256, %257 : vector<16x1xf32>
    %cst_79 = arith.constant 9.99999997E-7 : f32
    %259 = vector.broadcast %cst_79 : f32 to vector<16x1xf32>
    %260 = arith.addf %258, %259 : vector<16x1xf32>
    %261 = math.rsqrt %260 : vector<16x1xf32>
    %262 = vector.broadcast %261 : vector<16x1xf32> to vector<16x32xf32>
    %263 = arith.mulf %252, %262 : vector<16x32xf32>
    %264 = vector.broadcast %253 : vector<1x32xf32> to vector<16x32xf32>
    %265 = arith.mulf %263, %264 : vector<16x32xf32>
    %c0_80 = arith.constant 0 : index
    %c0_81 = arith.constant 0 : index
    %266 = vector.load %arg8[%c0_80, %c0_81] : memref<16x32xf32, #tpu.memory_space<vmem>>, vector<16x32xf32>
    tpu.vector_store %arg8[%c0_80, %c0_81], %265 {strides = array<i32>} : memref<16x32xf32, #tpu.memory_space<vmem>>, vector<16x32xf32>,
    return
  }
}

</mosaic_0001>

<llo_original>
// kernel: tpu_custom_call.1
$region0: #{tpu_custom_call.1}
  #allocation0 [shape = 'u32[]', space=smem, size = 0x4, offset = 0x4, fixed_abs, tag = 'smem constant byte address 0x4 - core index']
  #allocation1 [shape = 'u32[144,128]{1,0:T(1,128)}', space=vmem, size = 0x12000, scoped, tag = 'internal scratch']
  %s0 = inlined_call_operand.hbm [shape: f32[16,96], index: 0, kind: input, shape index: {}]
  %s1 = inlined_call_operand.vmem [shape: f32[2,1,32], index: 1, kind: input, shape index: {}]
  %s2 = inlined_call_operand.vmem [shape: f32[2,32,112], index: 2, kind: input, shape index: {}]
  %s3 = inlined_call_operand.vmem [shape: f32[2,32,32], index: 3, kind: input, shape index: {}]
  %s4 = inlined_call_operand.vmem [shape: f32[2,1,32], index: 4, kind: input, shape index: {}]
  %s5 = inlined_call_operand.vmem [shape: f32[2,32,128], index: 5, kind: input, shape index: {}]
  %s6 = inlined_call_operand.vmem [shape: f32[2,64,32], index: 6, kind: input, shape index: {}]
  %s7 = inlined_call_operand.vmem [shape: f32[1,32], index: 7, kind: input, shape index: {}]
  %s8 = inlined_call_operand.hbm [shape: f32[16,32], index: 8, kind: output, shape index: {}]
  %s9 = sld [smem:[#allocation0]]
  $region46: #{tpu_custom_call.1} parent=0
    _
  %s11 = ssub.s32 1, %s9
  %s12 = scalar_select 0, %s11, %s9
  $region1: #{tpu_custom_call.1} parent=0
    #allocation2 [shape = 'u8[8192]{0}', space=vmem, size = 0x2000, scoped, tag = 'input window, operand 0, single buffered']
    #allocation3 [shape = 's32[1]{0}', space=sflag, size = 0x4, scoped, tag = 'scoped memory for tpu_custom_call.1']
    #allocation4 [shape = 's32[1]{0}', space=sflag, size = 0x4, scoped, tag = 'scoped memory for tpu_custom_call.1']
    #allocation5 [shape = 'u8[8192]{0}', space=vmem, size = 0x2000, scoped, tag = 'output window, operand 0, single buffered']
    %13 = vsyncpa [#allocation3], 0
    %14 = vsyncpa [#allocation4], 0
    // Predicated region
    $region2: #{tpu_custom_call.1} parent=1 // pred_check
      _
    $region3: #{tpu_custom_call.1} parent=1 // pred_check_branch
      %16 = sbr.rel (0) target = $region5
    $region4: #{tpu_custom_call.1} parent=1 // pred_region
      %s18 = ssub.s32 256, 256
      %19 = vsyncadd [#allocation3], %s18
      %s20 = sshll.u32 [#allocation2], 4
      %s21 = int_to_ptr.vmem [resolvable:$true] %s20
      %26 = dma.hbm_to_vmem [thread:$0]  %s0, 256, %s21, [#allocation3], 128, 128, 8
    $region5: #{tpu_custom_call.1} parent=1 // pred_fallthru
      _
    // Predicated region
    $region6: #{tpu_custom_call.1} parent=1 // pred_check
      _
    $region7: #{tpu_custom_call.1} parent=1 // pred_check_branch
      %28 = sbr.rel (0) target = $region9
    $region8: #{tpu_custom_call.1} parent=1 // pred_region
      _
    $region9: #{tpu_custom_call.1} parent=1 // pred_fallthru
      _
    // Predicated region
    $region10: #{tpu_custom_call.1} parent=1 // pred_check
      _
    $region11: #{tpu_custom_call.1} parent=1 // pred_check_branch
      %30 = sbr.rel (0) target = $region13
    $region12: #{tpu_custom_call.1} parent=1 // pred_region
      _
    $region13: #{tpu_custom_call.1} parent=1 // pred_fallthru
      _
    // Predicated region
    $region14: #{tpu_custom_call.1} parent=1 // pred_check
      _
    $region15: #{tpu_custom_call.1} parent=1 // pred_check_branch
      %32 = sbr.rel (0) target = $region17
    $region16: #{tpu_custom_call.1} parent=1 // pred_region
      _
    $region17: #{tpu_custom_call.1} parent=1 // pred_fallthru
      _
    // Predicated region
    $region18: #{tpu_custom_call.1} parent=1 // pred_check
      _
    $region19: #{tpu_custom_call.1} parent=1 // pred_check_branch
      %34 = sbr.rel (0) target = $region21
    $region20: #{tpu_custom_call.1} parent=1 // pred_region
      _
    $region21: #{tpu_custom_call.1} parent=1 // pred_fallthru
      _
    // Predicated region
    $region22: #{tpu_custom_call.1} parent=1 // pred_check
      _
    $region23: #{tpu_custom_call.1} parent=1 // pred_check_branch
      %36 = sbr.rel (0) target = $region25
    $region24: #{tpu_custom_call.1} parent=1 // pred_region
      _
    $region25: #{tpu_custom_call.1} parent=1 // pred_fallthru
      _
    // Predicated region
    $region26: #{tpu_custom_call.1} parent=1 // pred_check
      _
    $region27: #{tpu_custom_call.1} parent=1 // pred_check_branch
      %38 = sbr.rel (0) target = $region29
    $region28: #{tpu_custom_call.1} parent=1 // pred_region
      _
    $region29: #{tpu_custom_call.1} parent=1 // pred_fallthru
      _
    // Predicated region
    $region30: #{tpu_custom_call.1} parent=1 // pred_check
      _
    $region31: #{tpu_custom_call.1} parent=1 // pred_check_branch
      %40 = sbr.rel (0) target = $region33
    $region32: #{tpu_custom_call.1} parent=1 // pred_region
      _
    $region33: #{tpu_custom_call.1} parent=1 // pred_fallthru
      _
    // Predicated region
    $region34: #{tpu_custom_call.1} parent=1 // pred_check
      _
    $region35: #{tpu_custom_call.1} parent=1 // pred_check_branch
      %42 = sbr.rel (0) target = $region37
    $region36: #{tpu_custom_call.1} parent=1 // pred_region
      %43 = dma.done [#allocation3], 256
    $region37: #{tpu_custom_call.1} parent=1 // pred_fallthru
      _
    %v44 = vld [vmem:[#allocation2] sm:$0xff]
    %v45 = vld [vmem:[#allocation2 + $0x8] sm:$0xff]
    %v46 = vlaneseq
    %v47 = vshrl.u32 %v46, 7
    %v48 = vadd.s32 %v47, 8
    %v49 = vlaneseq
    %v50 = vand.u32 %v49, 127
    %v51 = vshra.s32 %v47, 3
    %v52 = vshra.s32 %v48, 3
    %v53 = vshra.s32 %v50, 3
    %vm54 = vcmp.eq.s32.totalorder %v51, %v53
    %vm55 = vcmp.eq.s32.totalorder %v52, %v53
    %vm56 = vcmp.le.s32.totalorder %v50, %v47
    %vm57 = vcmp.le.s32.totalorder %v50, %v48
    %v58 = vsel %vm56, 1.0, 0.0
    %v59 = vsel %vm57, 1.0, 0.0
    %v60 = vsel %vm54, %v58, -1e+30
    %v61 = vsel %vm55, %v59, -1e+30
    %v62 = vld [vmem:[%s1] sm:$0x1]
    %v63 = vmul.f32 %v44, %v44
    %v64 = vmul.f32 %v45, %v45
    %vm65 = vcmask 261120
    %v66 = vsel %vm65, %v63, 0.0
    %67 = vadd.xlane.f32.xlu0 %v66
    %v68 = vpop.xlane.xlu0 %67
    %v69 = vsel %vm65, %v64, 0.0
    %70 = vadd.xlane.f32.xlu0 %v69
    %v71 = vpop.xlane.xlu0 %70
    %v72 = vrcp.pop 32.0
    %v73 = vmul.f32 %v68, %v72
    %v74 = vmul.f32 %v71, %v72
    %v75 = vadd.f32 %v73, 1e-06
    %v76 = vadd.f32 %v74, 1e-06
    %v77 = vrsqrt.pop %v75
    %v78 = vrsqrt.pop %v76
    %v79 = vmul.f32 %v44, %v77
    %v80 = vmul.f32 %v45, %v78
    %v82 = vlaneseq
    %v83 = vshrl.u32 %v82, 7
    %v84 = vsub.s32 0, %v83
    %v85 = vrot.slane %v62, %v84
    %v87 = vmul.f32 %v79, %v85
    %v88 = vmul.f32 %v80, %v85
    %v89 = vld [vmem:[%s2] sm:$0xff]
    %v90 = vld [vmem:[%s2 + $0x8] sm:$0xff]
    %v91 = vld [vmem:[%s2 + $0x10] sm:$0xff]
    %v92 = vld [vmem:[%s2 + $0x18] sm:$0xff]
    %v94 = vsel %vm65, %v87, 0
    %v97 = vsel %vm65, %v88, 0
    %99 = vmatprep.subr.mxu0 0.0
    %100 = vmatpush1.msra.mxu0 %v89
    %101 = vmatprep.subr.mxu0 0.0
    %102 = vmatpush1.msra.mxu0 %v90
    %103 = vmatprep.subr.mxu0 0.0
    %104 = vmatpush1.msra.mxu0 %v91
    %105 = vmatprep.subr.mxu0 0.0
    %106 = vmatpush1.msra.mxu0 %v92
    %107 = vmatprep.subr.mxu0 0.0
    %108 = vmatpush1.msra.mxu0 0.0
    %109 = vmatprep.subr.mxu0 0.0
    %110 = vmatpush1.msra.mxu0 0.0
    %111 = vmatprep.subr.mxu0 0.0
    %112 = vmatpush1.msra.mxu0 0.0
    %113 = vmatprep.subr.mxu0 0.0
    %114 = vmatpush1.msra.mxu0 0.0
    %115 = vmatprep.subr.mxu0 0.0
    %116 = vmatpush1.msra.mxu0 0.0
    %117 = vmatprep.subr.mxu0 0.0
    %118 = vmatpush1.msra.mxu0 0.0
    %119 = vmatprep.subr.mxu0 0.0
    %120 = vmatpush1.msra.mxu0 0.0
    %121 = vmatprep.subr.mxu0 0.0
    %122 = vmatpush1.msra.mxu0 0.0
    %123 = vmatprep.subr.mxu0 0.0
    %124 = vmatpush1.msra.mxu0 0.0
    %125 = vmatprep.subr.mxu0 0.0
    %126 = vmatpush1.msra.mxu0 0.0
    %127 = vmatprep.subr.mxu0 0.0
    %128 = vmatpush1.msra.mxu0 0.0
    %129 = vmatprep.subr.mxu0 0.0
    %130 = vmatpush1.msra.mxu0 0.0
    %131 = vmatprep.subr.mxu0 0.0
    %132 = vmatpush1.msra.mxu0 0.0
    %133 = vmatprep.subr.mxu0 0.0
    %134 = vmatpush1.msra.mxu0 0.0
    %135 = vmatprep.subr.mxu0 0.0
    %136 = vmatpush1.msra.mxu0 0.0
    %137 = vmatprep.subr.mxu0 0.0
    %138 = vmatpush1.msra.mxu0 0.0
    %139 = vmatprep.subr.mxu0 0.0
    %140 = vmatpush1.msra.mxu0 0.0
    %141 = vmatprep.subr.mxu0 0.0
    %142 = vmatpush1.msra.mxu0 0.0
    %143 = vmatprep.subr.mxu0 0.0
    %144 = vmatpush1.msra.mxu0 0.0
    %145 = vmatprep.subr.mxu0 0.0
    %146 = vmatpush1.msra.mxu0 0.0
    %147 = vmatprep.subr.mxu0 0.0
    %148 = vmatpush1.msra.mxu0 0.0
    %149 = vmatprep.subr.mxu0 0.0
    %150 = vmatpush1.msra.mxu0 0.0
    %151 = vmatprep.subr.mxu0 0.0
    %152 = vmatpush1.msra.mxu0 0.0
    %153 = vmatprep.subr.mxu0 0.0
    %154 = vmatpush1.msra.mxu0 0.0
    %155 = vmatprep.subr.mxu0 0.0
    %156 = vmatpush1.msra.mxu0 0.0
    %157 = vmatprep.subr.mxu0 0.0
    %158 = vmatpush1.msra.mxu0 0.0
    %159 = vmatprep.subr.mxu0 0.0
    %160 = vmatpush1.msra.mxu0 0.0
    %161 = vmatprep.subr.mxu0 0.0
    %162 = vmatpush1.msra.mxu0 0.0
    %163 = vmatprep.mubr.f32.mxu0 0.0
    %164 = vmatmul.mubr.f32.gmra.mrb[0].mxu0 %v94
    %v165 = vpop.f32.mrb[0].mxu0
    %v166 = vadd.f32 0.0, %v165
    %v167 = vpop.f32.mrb[0].mxu0
    %168 = vmatprep.mubr.f32.mxu0 0.0
    %169 = vmatmul.mubr.f32.gmra.mrb[0].mxu0 %v97
    %v170 = vpop.f32.mrb[0].mxu0
    %v171 = vadd.f32 0.0, %v170
    %v172 = vpop.f32.mrb[0].mxu0
    %173 = vdwg.mxu0
    %176 = vrot.lane.b32.xlu0 %v44, 96
    %v177 = vpop.permute.xlu0 %176
    %178 = vrot.lane.b32.xlu0 %v45, 96
    %v179 = vpop.permute.xlu0 %178
    %v182 = vmul.f32 %v166, %v177
    %v183 = vmul.f32 %v171, %v179
    %186 = vrot.lane.b32.xlu0 %v182, 96
    %v187 = vpop.permute.xlu0 %186
    %188 = vrot.lane.b32.xlu0 %v183, 96
    %v189 = vpop.permute.xlu0 %188
    %v192 = vadd.f32 %v182, %v187
    %v193 = vadd.f32 %v183, %v189
    %194 = vrot.lane.b32.xlu0 %v44, 32
    %v195 = vpop.permute.xlu0 %194
    %196 = vrot.lane.b32.xlu0 %v45, 32
    %v197 = vpop.permute.xlu0 %196
    %v200 = vmul.f32 %v166, %v195
    %v201 = vmul.f32 %v171, %v197
    %202 = vrot.lane.b32.xlu0 %v44, 16
    %v203 = vpop.permute.xlu0 %202
    %204 = vrot.lane.b32.xlu0 %v45, 16
    %v205 = vpop.permute.xlu0 %204
    %v208 = vmul.f32 %v166, %v203
    %v209 = vmul.f32 %v171, %v205
    %212 = vrot.lane.b32.xlu0 %v208, 112
    %v213 = vpop.permute.xlu0 %212
    %214 = vrot.lane.b32.xlu0 %v209, 112
    %v215 = vpop.permute.xlu0 %214
    %v218 = vadd.f32 %v200, %v213
    %v219 = vadd.f32 %v201, %v215
    %222 = vrot.lane.b32.xlu0 %v192, 120
    %v223 = vpop.permute.xlu0 %222
    %224 = vrot.lane.b32.xlu0 %v193, 120
    %v225 = vpop.permute.xlu0 %224
    %226 = vrot.lane.b32.xlu0 %v192, 112
    %v227 = vpop.permute.xlu0 %226
    %228 = vrot.lane.b32.xlu0 %v193, 112
    %v229 = vpop.permute.xlu0 %228
    %230 = vrot.lane.b32.xlu0 %v192, 104
    %v231 = vpop.permute.xlu0 %230
    %232 = vrot.lane.b32.xlu0 %v193, 104
    %v233 = vpop.permute.xlu0 %232
    %236 = vrot.lane.b32.xlu0 %v218, 120
    %v237 = vpop.permute.xlu0 %236
    %238 = vrot.lane.b32.xlu0 %v219, 120
    %v239 = vpop.permute.xlu0 %238
    %242 = vrot.lane.b32.xlu0 %v166, 120
    %v243 = vpop.permute.xlu0 %242
    %244 = vrot.lane.b32.xlu0 %v171, 120
    %v245 = vpop.permute.xlu0 %244
    %246 = vrot.lane.b32.xlu0 %v218, 64
    %v247 = vpop.permute.xlu0 %246
    %248 = vrot.lane.b32.xlu0 %v219, 64
    %v249 = vpop.permute.xlu0 %248
    %vm250 = vcmask 64512
    %v251 = vsel %vm250, %v192, 0
    %v253 = vsel %vm250, %v193, 0
    %v255 = vsel %vm250, %v247, 0
    %v257 = vsel %vm250, %v249, 0
    %259 = vmatprep.subr.mxu0 0.0
    %260 = vmatpush1.xpose.msra.mxu0 %v255
    %261 = vmatprep.subr.mxu0 0.0
    %262 = vmatpush1.xpose.msra.mxu0 %v257
    %263 = vmatprep.subr.mxu0 0.0
    %264 = vmatpush1.xpose.msra.mxu0 0.0
    %265 = vmatprep.subr.mxu0 0.0
    %266 = vmatpush1.xpose.msra.mxu0 0.0
    %267 = vmatprep.subr.mxu0 0.0
    %268 = vmatpush1.xpose.msra.mxu0 0.0
    %269 = vmatprep.subr.mxu0 0.0
    %270 = vmatpush1.xpose.msra.mxu0 0.0
    %271 = vmatprep.subr.mxu0 0.0
    %272 = vmatpush1.xpose.msra.mxu0 0.0
    %273 = vmatprep.subr.mxu0 0.0
    %274 = vmatpush1.xpose.msra.mxu0 0.0
    %275 = vmatprep.subr.mxu0 0.0
    %276 = vmatpush1.xpose.msra.mxu0 0.0
    %277 = vmatprep.subr.mxu0 0.0
    %278 = vmatpush1.xpose.msra.mxu0 0.0
    %279 = vmatprep.subr.mxu0 0.0
    %280 = vmatpush1.xpose.msra.mxu0 0.0
    %281 = vmatprep.subr.mxu0 0.0
    %282 = vmatpush1.xpose.msra.mxu0 0.0
    %283 = vmatprep.subr.mxu0 0.0
    %284 = vmatpush1.xpose.msra.mxu0 0.0
    %285 = vmatprep.subr.mxu0 0.0
    %286 = vmatpush1.xpose.msra.mxu0 0.0
    %287 = vmatprep.subr.mxu0 0.0
    %288 = vmatpush1.xpose.msra.mxu0 0.0
    %289 = vmatprep.subr.mxu0 0.0
    %290 = vmatpush1.xpose.msra.mxu0 0.0
    %291 = vmatprep.subr.mxu0 0.0
    %292 = vmatpush1.xpose.msra.mxu0 0.0
    %293 = vmatprep.subr.mxu0 0.0
    %294 = vmatpush1.xpose.msra.mxu0 0.0
    %295 = vmatprep.subr.mxu0 0.0
    %296 = vmatpush1.xpose.msra.mxu0 0.0
    %297 = vmatprep.subr.mxu0 0.0
    %298 = vmatpush1.xpose.msra.mxu0 0.0
    %299 = vmatprep.subr.mxu0 0.0
    %300 = vmatpush1.xpose.msra.mxu0 0.0
    %301 = vmatprep.subr.mxu0 0.0
    %302 = vmatpush1.xpose.msra.mxu0 0.0
    %303 = vmatprep.subr.mxu0 0.0
    %304 = vmatpush1.xpose.msra.mxu0 0.0
    %305 = vmatprep.subr.mxu0 0.0
    %306 = vmatpush1.xpose.msra.mxu0 0.0
    %307 = vmatprep.subr.mxu0 0.0
    %308 = vmatpush1.xpose.msra.mxu0 0.0
    %309 = vmatprep.subr.mxu0 0.0
    %310 = vmatpush1.xpose.msra.mxu0 0.0
    %311 = vmatprep.subr.mxu0 0.0
    %312 = vmatpush1.xpose.msra.mxu0 0.0
    %313 = vmatprep.subr.mxu0 0.0
    %314 = vmatpush1.xpose.msra.mxu0 0.0
    %315 = vmatprep.subr.mxu0 0.0
    %316 = vmatpush1.xpose.msra.mxu0 0.0
    %317 = vmatprep.subr.mxu0 0.0
    %318 = vmatpush1.xpose.msra.mxu0 0.0
    %319 = vmatprep.subr.mxu0 0.0
    %320 = vmatpush1.xpose.msra.mxu0 0.0
    %321 = vmatprep.subr.mxu0 0.0
    %322 = vmatpush1.xpose.msra.mxu0 0.0
    %323 = vmatprep.mubr.f32.mxu0 0.0
    %324 = vmatmul.mubr.f32.gmra.mrb[0].mxu0 %v251
    %v325 = vpop.f32.mrb[0].mxu0
    %v326 = vadd.f32 0.0, %v325
    %v327 = vpop.f32.mrb[0].mxu0
    %328 = vmatprep.mubr.f32.mxu0 0.0
    %329 = vmatmul.mubr.f32.gmra.mrb[0].mxu0 %v253
    %v330 = vpop.f32.mrb[0].mxu0
    %v331 = vadd.f32 0.0, %v330
    %v332 = vpop.f32.mrb[0].mxu0
    %333 = vdwg.mxu0
    %v334 = vsel %vm250, %v223, 0
    %v336 = vsel %vm250, %v225, 0
    %338 = vmatprep.subr.mxu0 0.0
    %339 = vmatpush1.xpose.msra.mxu0 %v255
    %340 = vmatprep.subr.mxu0 0.0
    %341 = vmatpush1.xpose.msra.mxu0 %v257
    %342 = vmatprep.subr.mxu0 0.0
    %343 = vmatpush1.xpose.msra.mxu0 0.0
    %344 = vmatprep.subr.mxu0 0.0
    %345 = vmatpush1.xpose.msra.mxu0 0.0
    %346 = vmatprep.subr.mxu0 0.0
    %347 = vmatpush1.xpose.msra.mxu0 0.0
    %348 = vmatprep.subr.mxu0 0.0
    %349 = vmatpush1.xpose.msra.mxu0 0.0
    %350 = vmatprep.subr.mxu0 0.0
    %351 = vmatpush1.xpose.msra.mxu0 0.0
    %352 = vmatprep.subr.mxu0 0.0
    %353 = vmatpush1.xpose.msra.mxu0 0.0
    %354 = vmatprep.subr.mxu0 0.0
    %355 = vmatpush1.xpose.msra.mxu0 0.0
    %356 = vmatprep.subr.mxu0 0.0
    %357 = vmatpush1.xpose.msra.mxu0 0.0
    %358 = vmatprep.subr.mxu0 0.0
    %359 = vmatpush1.xpose.msra.mxu0 0.0
    %360 = vmatprep.subr.mxu0 0.0
    %361 = vmatpush1.xpose.msra.mxu0 0.0
    %362 = vmatprep.subr.mxu0 0.0
    %363 = vmatpush1.xpose.msra.mxu0 0.0
    %364 = vmatprep.subr.mxu0 0.0
    %365 = vmatpush1.xpose.msra.mxu0 0.0
    %366 = vmatprep.subr.mxu0 0.0
    %367 = vmatpush1.xpose.msra.mxu0 0.0
    %368 = vmatprep.subr.mxu0 0.0
    %369 = vmatpush1.xpose.msra.mxu0 0.0
    %370 = vmatprep.subr.mxu0 0.0
    %371 = vmatpush1.xpose.msra.mxu0 0.0
    %372 = vmatprep.subr.mxu0 0.0
    %373 = vmatpush1.xpose.msra.mxu0 0.0
    %374 = vmatprep.subr.mxu0 0.0
    %375 = vmatpush1.xpose.msra.mxu0 0.0
    %376 = vmatprep.subr.mxu0 0.0
    %377 = vmatpush1.xpose.msra.mxu0 0.0
    %378 = vmatprep.subr.mxu0 0.0
    %379 = vmatpush1.xpose.msra.mxu0 0.0
    %380 = vmatprep.subr.mxu0 0.0
    %381 = vmatpush1.xpose.msra.mxu0 0.0
    %382 = vmatprep.subr.mxu0 0.0
    %383 = vmatpush1.xpose.msra.mxu0 0.0
    %384 = vmatprep.subr.mxu0 0.0
    %385 = vmatpush1.xpose.msra.mxu0 0.0
    %386 = vmatprep.subr.mxu0 0.0
    %387 = vmatpush1.xpose.msra.mxu0 0.0
    %388 = vmatprep.subr.mxu0 0.0
    %389 = vmatpush1.xpose.msra.mxu0 0.0
    %390 = vmatprep.subr.mxu0 0.0
    %391 = vmatpush1.xpose.msra.mxu0 0.0
    %392 = vmatprep.subr.mxu0 0.0
    %393 = vmatpush1.xpose.msra.mxu0 0.0
    %394 = vmatprep.subr.mxu0 0.0
    %395 = vmatpush1.xpose.msra.mxu0 0.0
    %396 = vmatprep.subr.mxu0 0.0
    %397 = vmatpush1.xpose.msra.mxu0 0.0
    %398 = vmatprep.subr.mxu0 0.0
    %399 = vmatpush1.xpose.msra.mxu0 0.0
    %400 = vmatprep.subr.mxu0 0.0
    %401 = vmatpush1.xpose.msra.mxu0 0.0
    %402 = vmatprep.mubr.f32.mxu0 0.0
    %403 = vmatmul.mubr.f32.gmra.mrb[0].mxu0 %v334
    %v404 = vpop.f32.mrb[0].mxu0
    %v405 = vadd.f32 0.0, %v404
    %v406 = vpop.f32.mrb[0].mxu0
    %407 = vmatprep.mubr.f32.mxu0 0.0
    %408 = vmatmul.mubr.f32.gmra.mrb[0].mxu0 %v336
    %v409 = vpop.f32.mrb[0].mxu0
    %v410 = vadd.f32 0.0, %v409
    %v411 = vpop.f32.mrb[0].mxu0
    %412 = vdwg.mxu0
    %413 = vrot.lane.b32.xlu0 %v237, 64
    %v414 = vpop.permute.xlu0 %413
    %415 = vrot.lane.b32.xlu0 %v239, 64
    %v416 = vpop.permute.xlu0 %415
    %v417 = vsel %vm250, %v227, 0
    %v419 = vsel %vm250, %v229, 0
    %v421 = vsel %vm250, %v414, 0
    %v423 = vsel %vm250, %v416, 0
    %425 = vmatprep.subr.mxu0 0.0
    %426 = vmatpush1.xpose.msra.mxu0 %v421
    %427 = vmatprep.subr.mxu0 0.0
    %428 = vmatpush1.xpose.msra.mxu0 %v423
    %429 = vmatprep.subr.mxu0 0.0
    %430 = vmatpush1.xpose.msra.mxu0 0.0
    %431 = vmatprep.subr.mxu0 0.0
    %432 = vmatpush1.xpose.msra.mxu0 0.0
    %433 = vmatprep.subr.mxu0 0.0
    %434 = vmatpush1.xpose.msra.mxu0 0.0
    %435 = vmatprep.subr.mxu0 0.0
    %436 = vmatpush1.xpose.msra.mxu0 0.0
    %437 = vmatprep.subr.mxu0 0.0
    %438 = vmatpush1.xpose.msra.mxu0 0.0
    %439 = vmatprep.subr.mxu0 0.0
    %440 = vmatpush1.xpose.msra.mxu0 0.0
    %441 = vmatprep.subr.mxu0 0.0
    %442 = vmatpush1.xpose.msra.mxu0 0.0
    %443 = vmatprep.subr.mxu0 0.0
    %444 = vmatpush1.xpose.msra.mxu0 0.0
    %445 = vmatprep.subr.mxu0 0.0
    %446 = vmatpush1.xpose.msra.mxu0 0.0
    %447 = vmatprep.subr.mxu0 0.0
    %448 = vmatpush1.xpose.msra.mxu0 0.0
    %449 = vmatprep.subr.mxu0 0.0
    %450 = vmatpush1.xpose.msra.mxu0 0.0
    %451 = vmatprep.subr.mxu0 0.0
    %452 = vmatpush1.xpose.msra.mxu0 0.0
    %453 = vmatprep.subr.mxu0 0.0
    %454 = vmatpush1.xpose.msra.mxu0 0.0
    %455 = vmatprep.subr.mxu0 0.0
    %456 = vmatpush1.xpose.msra.mxu0 0.0
    %457 = vmatprep.subr.mxu0 0.0
    %458 = vmatpush1.xpose.msra.mxu0 0.0
    %459 = vmatprep.subr.mxu0 0.0
    %460 = vmatpush1.xpose.msra.mxu0 0.0
    %461 = vmatprep.subr.mxu0 0.0
    %462 = vmatpush1.xpose.msra.mxu0 0.0
    %463 = vmatprep.subr.mxu0 0.0
    %464 = vmatpush1.xpose.msra.mxu0 0.0
    %465 = vmatprep.subr.mxu0 0.0
    %466 = vmatpush1.xpose.msra.mxu0 0.0
    %467 = vmatprep.subr.mxu0 0.0
    %468 = vmatpush1.xpose.msra.mxu0 0.0
    %469 = vmatprep.subr.mxu0 0.0
    %470 = vmatpush1.xpose.msra.mxu0 0.0
    %471 = vmatprep.subr.mxu0 0.0
    %472 = vmatpush1.xpose.msra.mxu0 0.0
    %473 = vmatprep.subr.mxu0 0.0
    %474 = vmatpush1.xpose.msra.mxu0 0.0
    %475 = vmatprep.subr.mxu0 0.0
    %476 = vmatpush1.xpose.msra.mxu0 0.0
    %477 = vmatprep.subr.mxu0 0.0
    %478 = vmatpush1.xpose.msra.mxu0 0.0
    %479 = vmatprep.subr.mxu0 0.0
    %480 = vmatpush1.xpose.msra.mxu0 0.0
    %481 = vmatprep.subr.mxu0 0.0
    %482 = vmatpush1.xpose.msra.mxu0 0.0
    %483 = vmatprep.subr.mxu0 0.0
    %484 = vmatpush1.xpose.msra.mxu0 0.0
    %485 = vmatprep.subr.mxu0 0.0
    %486 = vmatpush1.xpose.msra.mxu0 0.0
    %487 = vmatprep.subr.mxu0 0.0
    %488 = vmatpush1.xpose.msra.mxu0 0.0
    %489 = vmatprep.mubr.f32.mxu0 0.0
    %490 = vmatmul.mubr.f32.gmra.mrb[0].mxu0 %v417
    %v491 = vpop.f32.mrb[0].mxu0
    %v492 = vadd.f32 0.0, %v491
    %v493 = vpop.f32.mrb[0].mxu0
    %494 = vmatprep.mubr.f32.mxu0 0.0
    %495 = vmatmul.mubr.f32.gmra.mrb[0].mxu0 %v419
    %v496 = vpop.f32.mrb[0].mxu0
    %v497 = vadd.f32 0.0, %v496
    %v498 = vpop.f32.mrb[0].mxu0
    %499 = vdwg.mxu0
    %v500 = vsel %vm250, %v231, 0
    %v502 = vsel %vm250, %v233, 0
    %504 = vmatprep.subr.mxu0 0.0
    %505 = vmatpush1.xpose.msra.mxu0 %v421
    %506 = vmatprep.subr.mxu0 0.0
    %507 = vmatpush1.xpose.msra.mxu0 %v423
    %508 = vmatprep.subr.mxu0 0.0
    %509 = vmatpush1.xpose.msra.mxu0 0.0
    %510 = vmatprep.subr.mxu0 0.0
    %511 = vmatpush1.xpose.msra.mxu0 0.0
    %512 = vmatprep.subr.mxu0 0.0
    %513 = vmatpush1.xpose.msra.mxu0 0.0
    %514 = vmatprep.subr.mxu0 0.0
    %515 = vmatpush1.xpose.msra.mxu0 0.0
    %516 = vmatprep.subr.mxu0 0.0
    %517 = vmatpush1.xpose.msra.mxu0 0.0
    %518 = vmatprep.subr.mxu0 0.0
    %519 = vmatpush1.xpose.msra.mxu0 0.0
    %520 = vmatprep.subr.mxu0 0.0
    %521 = vmatpush1.xpose.msra.mxu0 0.0
    %522 = vmatprep.subr.mxu0 0.0
    %523 = vmatpush1.xpose.msra.mxu0 0.0
    %524 = vmatprep.subr.mxu0 0.0
    %525 = vmatpush1.xpose.msra.mxu0 0.0
    %526 = vmatprep.subr.mxu0 0.0
    %527 = vmatpush1.xpose.msra.mxu0 0.0
    %528 = vmatprep.subr.mxu0 0.0
    %529 = vmatpush1.xpose.msra.mxu0 0.0
    %530 = vmatprep.subr.mxu0 0.0
    %531 = vmatpush1.xpose.msra.mxu0 0.0
    %532 = vmatprep.subr.mxu0 0.0
    %533 = vmatpush1.xpose.msra.mxu0 0.0
    %534 = vmatprep.subr.mxu0 0.0
    %535 = vmatpush1.xpose.msra.mxu0 0.0
    %536 = vmatprep.subr.mxu0 0.0
    %537 = vmatpush1.xpose.msra.mxu0 0.0
    %538 = vmatprep.subr.mxu0 0.0
    %539 = vmatpush1.xpose.msra.mxu0 0.0
    %540 = vmatprep.subr.mxu0 0.0
    %541 = vmatpush1.xpose.msra.mxu0 0.0
    %542 = vmatprep.subr.mxu0 0.0
    %543 = vmatpush1.xpose.msra.mxu0 0.0
    %544 = vmatprep.subr.mxu0 0.0
    %545 = vmatpush1.xpose.msra.mxu0 0.0
    %546 = vmatprep.subr.mxu0 0.0
    %547 = vmatpush1.xpose.msra.mxu0 0.0
    %548 = vmatprep.subr.mxu0 0.0
    %549 = vmatpush1.xpose.msra.mxu0 0.0
    %550 = vmatprep.subr.mxu0 0.0
    %551 = vmatpush1.xpose.msra.mxu0 0.0
    %552 = vmatprep.subr.mxu0 0.0
    %553 = vmatpush1.xpose.msra.mxu0 0.0
    %554 = vmatprep.subr.mxu0 0.0
    %555 = vmatpush1.xpose.msra.mxu0 0.0
    %556 = vmatprep.subr.mxu0 0.0
    %557 = vmatpush1.xpose.msra.mxu0 0.0
    %558 = vmatprep.subr.mxu0 0.0
    %559 = vmatpush1.xpose.msra.mxu0 0.0
    %560 = vmatprep.subr.mxu0 0.0
    %561 = vmatpush1.xpose.msra.mxu0 0.0
    %562 = vmatprep.subr.mxu0 0.0
    %563 = vmatpush1.xpose.msra.mxu0 0.0
    %564 = vmatprep.subr.mxu0 0.0
    %565 = vmatpush1.xpose.msra.mxu0 0.0
    %566 = vmatprep.subr.mxu0 0.0
    %567 = vmatpush1.xpose.msra.mxu0 0.0
    %568 = vmatprep.mubr.f32.mxu0 0.0
    %569 = vmatmul.mubr.f32.gmra.mrb[0].mxu0 %v500
    %v570 = vpop.f32.mrb[0].mxu0
    %v571 = vadd.f32 0.0, %v570
    %v572 = vpop.f32.mrb[0].mxu0
    %573 = vmatprep.mubr.f32.mxu0 0.0
    %574 = vmatmul.mubr.f32.gmra.mrb[0].mxu0 %v502
    %v575 = vpop.f32.mrb[0].mxu0
    %v576 = vadd.f32 0.0, %v575
    %v577 = vpop.f32.mrb[0].mxu0
    %578 = vdwg.mxu0
    %v579 = vmul.f32 %v326, 0.35355338
    %v580 = vmul.f32 %v331, 0.35355338
    %v581 = vmul.f32 %v405, 0.35355338
    %v582 = vmul.f32 %v410, 0.35355338
    %v583 = vmul.f32 %v492, 0.35355338
    %v584 = vmul.f32 %v497, 0.35355338
    %v585 = vmul.f32 %v571, 0.35355338
    %v586 = vmul.f32 %v576, 0.35355338
    %v587 = vadd.f32 %v579, %v60
    %v588 = vadd.f32 %v580, %v61
    %v589 = vadd.f32 %v581, %v60
    %v590 = vadd.f32 %v582, %v61
    %v591 = vadd.f32 %v583, %v60
    %v592 = vadd.f32 %v584, %v61
    %v593 = vadd.f32 %v585, %v60
    %v594 = vadd.f32 %v586, %v61
    %vm595 = vcmask 130048
    %v596 = vsel %vm595, %v587, -inf
    %597 = vmax.xlane.f32.xlu0 %v596
    %v598 = vpop.xlane.xlu0 %597
    %v599 = vsel %vm595, %v588, -inf
    %600 = vmax.xlane.f32.xlu0 %v599
    %v601 = vpop.xlane.xlu0 %600
    %v602 = vsel %vm595, %v589, -inf
    %603 = vmax.xlane.f32.xlu0 %v602
    %v604 = vpop.xlane.xlu0 %603
    %v605 = vsel %vm595, %v590, -inf
    %606 = vmax.xlane.f32.xlu0 %v605
    %v607 = vpop.xlane.xlu0 %606
    %v608 = vsel %vm595, %v591, -inf
    %609 = vmax.xlane.f32.xlu0 %v608
    %v610 = vpop.xlane.xlu0 %609
    %v611 = vsel %vm595, %v592, -inf
    %612 = vmax.xlane.f32.xlu0 %v611
    %v613 = vpop.xlane.xlu0 %612
    %v614 = vsel %vm595, %v593, -inf
    %615 = vmax.xlane.f32.xlu0 %v614
    %v616 = vpop.xlane.xlu0 %615
    %v617 = vsel %vm595, %v594, -inf
    %618 = vmax.xlane.f32.xlu0 %v617
    %v619 = vpop.xlane.xlu0 %618
    %v620 = vsub.f32 %v587, %v598
    %v621 = vsub.f32 %v588, %v601
    %v622 = vsub.f32 %v589, %v604
    %v623 = vsub.f32 %v590, %v607
    %v624 = vsub.f32 %v591, %v610
    %v625 = vsub.f32 %v592, %v613
    %v626 = vsub.f32 %v593, %v616
    %v627 = vsub.f32 %v594, %v619
    %v628 = vmul.f32 %v620, 1.442695
    %v629 = vpow.pop %v628
    %v630 = vmul.f32 %v621, 1.442695
    %v631 = vpow.pop %v630
    %v632 = vmul.f32 %v622, 1.442695
    %v633 = vpow.pop %v632
    %v634 = vmul.f32 %v623, 1.442695
    %v635 = vpow.pop %v634
    %v636 = vmul.f32 %v624, 1.442695
    %v637 = vpow.pop %v636
    %v638 = vmul.f32 %v625, 1.442695
    %v639 = vpow.pop %v638
    %v640 = vmul.f32 %v626, 1.442695
    %v641 = vpow.pop %v640
    %v642 = vmul.f32 %v627, 1.442695
    %v643 = vpow.pop %v642
    %v644 = vsel %vm595, %v629, 0.0
    %645 = vadd.xlane.f32.xlu0 %v644
    %v646 = vpop.xlane.xlu0 %645
    %v647 = vsel %vm595, %v631, 0.0
    %648 = vadd.xlane.f32.xlu0 %v647
    %v649 = vpop.xlane.xlu0 %648
    %v650 = vsel %vm595, %v633, 0.0
    %651 = vadd.xlane.f32.xlu0 %v650
    %v652 = vpop.xlane.xlu0 %651
    %v653 = vsel %vm595, %v635, 0.0
    %654 = vadd.xlane.f32.xlu0 %v653
    %v655 = vpop.xlane.xlu0 %654
    %v656 = vsel %vm595, %v637, 0.0
    %657 = vadd.xlane.f32.xlu0 %v656
    %v658 = vpop.xlane.xlu0 %657
    %v659 = vsel %vm595, %v639, 0.0
    %660 = vadd.xlane.f32.xlu0 %v659
    %v661 = vpop.xlane.xlu0 %660
    %v662 = vsel %vm595, %v641, 0.0
    %663 = vadd.xlane.f32.xlu0 %v662
    %v664 = vpop.xlane.xlu0 %663
    %v665 = vsel %vm595, %v643, 0.0
    %666 = vadd.xlane.f32.xlu0 %v665
    %v667 = vpop.xlane.xlu0 %666
    %v668 = vrcp.pop %v646
    %v669 = vrcp.pop %v649
    %v670 = vrcp.pop %v652
    %v671 = vrcp.pop %v655
    %v672 = vrcp.pop %v658
    %v673 = vrcp.pop %v661
    %v674 = vrcp.pop %v664
    %v675 = vrcp.pop %v667
    %v676 = vmul.f32 %v629, %v668
    %v677 = vmul.f32 %v631, %v669
    %v678 = vmul.f32 %v633, %v670
    %v679 = vmul.f32 %v635, %v671
    %v680 = vmul.f32 %v637, %v672
    %v681 = vmul.f32 %v639, %v673
    %v682 = vmul.f32 %v641, %v674
    %v683 = vmul.f32 %v643, %v675
    %684 = vrot.lane.b32.xlu0 %v166, 32
    %v685 = vpop.permute.xlu0 %684
    %686 = vrot.lane.b32.xlu0 %v171, 32
    %v687 = vpop.permute.xlu0 %686
    %v691 = vsel %vm595, %v676, 0
    %v694 = vsel %vm595, %v677, 0
    %696 = vmatprep.subr.mxu0 0.0
    %697 = vmatpush1.msra.mxu0 %v685
    %698 = vmatprep.subr.mxu0 0.0
    %699 = vmatpush1.msra.mxu0 %v687
    %700 = vmatprep.subr.mxu0 0.0
    %701 = vmatpush1.msra.mxu0 0.0
    %702 = vmatprep.subr.mxu0 0.0
    %703 = vmatpush1.msra.mxu0 0.0
    %704 = vmatprep.subr.mxu0 0.0
    %705 = vmatpush1.msra.mxu0 0.0
    %706 = vmatprep.subr.mxu0 0.0
    %707 = vmatpush1.msra.mxu0 0.0
    %708 = vmatprep.subr.mxu0 0.0
    %709 = vmatpush1.msra.mxu0 0.0
    %710 = vmatprep.subr.mxu0 0.0
    %711 = vmatpush1.msra.mxu0 0.0
    %712 = vmatprep.subr.mxu0 0.0
    %713 = vmatpush1.msra.mxu0 0.0
    %714 = vmatprep.subr.mxu0 0.0
    %715 = vmatpush1.msra.mxu0 0.0
    %716 = vmatprep.subr.mxu0 0.0
    %717 = vmatpush1.msra.mxu0 0.0
    %718 = vmatprep.subr.mxu0 0.0
    %719 = vmatpush1.msra.mxu0 0.0
    %720 = vmatprep.subr.mxu0 0.0
    %721 = vmatpush1.msra.mxu0 0.0
    %722 = vmatprep.subr.mxu0 0.0
    %723 = vmatpush1.msra.mxu0 0.0
    %724 = vmatprep.subr.mxu0 0.0
    %725 = vmatpush1.msra.mxu0 0.0
    %726 = vmatprep.subr.mxu0 0.0
    %727 = vmatpush1.msra.mxu0 0.0
    %728 = vmatprep.subr.mxu0 0.0
    %729 = vmatpush1.msra.mxu0 0.0
    %730 = vmatprep.subr.mxu0 0.0
    %731 = vmatpush1.msra.mxu0 0.0
    %732 = vmatprep.subr.mxu0 0.0
    %733 = vmatpush1.msra.mxu0 0.0
    %734 = vmatprep.subr.mxu0 0.0
    %735 = vmatpush1.msra.mxu0 0.0
    %736 = vmatprep.subr.mxu0 0.0
    %737 = vmatpush1.msra.mxu0 0.0
    %738 = vmatprep.subr.mxu0 0.0
    %739 = vmatpush1.msra.mxu0 0.0
    %740 = vmatprep.subr.mxu0 0.0
    %741 = vmatpush1.msra.mxu0 0.0
    %742 = vmatprep.subr.mxu0 0.0
    %743 = vmatpush1.msra.mxu0 0.0
    %744 = vmatprep.subr.mxu0 0.0
    %745 = vmatpush1.msra.mxu0 0.0
    %746 = vmatprep.subr.mxu0 0.0
    %747 = vmatpush1.msra.mxu0 0.0
    %748 = vmatprep.subr.mxu0 0.0
    %749 = vmatpush1.msra.mxu0 0.0
    %750 = vmatprep.subr.mxu0 0.0
    %751 = vmatpush1.msra.mxu0 0.0
    %752 = vmatprep.subr.mxu0 0.0
    %753 = vmatpush1.msra.mxu0 0.0
    %754 = vmatprep.subr.mxu0 0.0
    %755 = vmatpush1.msra.mxu0 0.0
    %756 = vmatprep.subr.mxu0 0.0
    %757 = vmatpush1.msra.mxu0 0.0
    %758 = vmatprep.subr.mxu0 0.0
    %759 = vmatpush1.msra.mxu0 0.0
    %760 = vmatprep.mubr.f32.mxu0 0.0
    %761 = vmatmul.mubr.f32.gmra.mrb[0].mxu0 %v691
    %v762 = vpop.f32.mrb[0].mxu0
    %v763 = vadd.f32 0.0, %v762
    %v764 = vpop.f32.mrb[0].mxu0
    %765 = vmatprep.mubr.f32.mxu0 0.0
    %766 = vmatmul.mubr.f32.gmra.mrb[0].mxu0 %v694
    %v767 = vpop.f32.mrb[0].mxu0
    %v768 = vadd.f32 0.0, %v767
    %v769 = vpop.f32.mrb[0].mxu0
    %770 = vdwg.mxu0
    %v772 = vsel %vm595, %v678, 0
    %v775 = vsel %vm595, %v679, 0
    %777 = vmatprep.subr.mxu0 0.0
    %778 = vmatpush1.msra.mxu0 %v685
    %779 = vmatprep.subr.mxu0 0.0
    %780 = vmatpush1.msra.mxu0 %v687
    %781 = vmatprep.subr.mxu0 0.0
    %782 = vmatpush1.msra.mxu0 0.0
    %783 = vmatprep.subr.mxu0 0.0
    %784 = vmatpush1.msra.mxu0 0.0
    %785 = vmatprep.subr.mxu0 0.0
    %786 = vmatpush1.msra.mxu0 0.0
    %787 = vmatprep.subr.mxu0 0.0
    %788 = vmatpush1.msra.mxu0 0.0
    %789 = vmatprep.subr.mxu0 0.0
    %790 = vmatpush1.msra.mxu0 0.0
    %791 = vmatprep.subr.mxu0 0.0
    %792 = vmatpush1.msra.mxu0 0.0
    %793 = vmatprep.subr.mxu0 0.0
    %794 = vmatpush1.msra.mxu0 0.0
    %795 = vmatprep.subr.mxu0 0.0
    %796 = vmatpush1.msra.mxu0 0.0
    %797 = vmatprep.subr.mxu0 0.0
    %798 = vmatpush1.msra.mxu0 0.0
    %799 = vmatprep.subr.mxu0 0.0
    %800 = vmatpush1.msra.mxu0 0.0
    %801 = vmatprep.subr.mxu0 0.0
    %802 = vmatpush1.msra.mxu0 0.0
    %803 = vmatprep.subr.mxu0 0.0
    %804 = vmatpush1.msra.mxu0 0.0
    %805 = vmatprep.subr.mxu0 0.0
    %806 = vmatpush1.msra.mxu0 0.0
    %807 = vmatprep.subr.mxu0 0.0
    %808 = vmatpush1.msra.mxu0 0.0
    %809 = vmatprep.subr.mxu0 0.0
    %810 = vmatpush1.msra.mxu0 0.0
    %811 = vmatprep.subr.mxu0 0.0
    %812 = vmatpush1.msra.mxu0 0.0
    %813 = vmatprep.subr.mxu0 0.0
    %814 = vmatpush1.msra.mxu0 0.0
    %815 = vmatprep.subr.mxu0 0.0
    %816 = vmatpush1.msra.mxu0 0.0
    %817 = vmatprep.subr.mxu0 0.0
    %818 = vmatpush1.msra.mxu0 0.0
    %819 = vmatprep.subr.mxu0 0.0
    %820 = vmatpush1.msra.mxu0 0.0
    %821 = vmatprep.subr.mxu0 0.0
    %822 = vmatpush1.msra.mxu0 0.0
    %823 = vmatprep.subr.mxu0 0.0
    %824 = vmatpush1.msra.mxu0 0.0
    %825 = vmatprep.subr.mxu0 0.0
    %826 = vmatpush1.msra.mxu0 0.0
    %827 = vmatprep.subr.mxu0 0.0
    %828 = vmatpush1.msra.mxu0 0.0
    %829 = vmatprep.subr.mxu0 0.0
    %830 = vmatpush1.msra.mxu0 0.0
    %831 = vmatprep.subr.mxu0 0.0
    %832 = vmatpush1.msra.mxu0 0.0
    %833 = vmatprep.subr.mxu0 0.0
    %834 = vmatpush1.msra.mxu0 0.0
    %835 = vmatprep.subr.mxu0 0.0
    %836 = vmatpush1.msra.mxu0 0.0
    %837 = vmatprep.subr.mxu0 0.0
    %838 = vmatpush1.msra.mxu0 0.0
    %839 = vmatprep.subr.mxu0 0.0
    %840 = vmatpush1.msra.mxu0 0.0
    %841 = vmatprep.mubr.f32.mxu0 0.0
    %842 = vmatmul.mubr.f32.gmra.mrb[0].mxu0 %v772
    %v843 = vpop.f32.mrb[0].mxu0
    %v844 = vadd.f32 0.0, %v843
    %v845 = vpop.f32.mrb[0].mxu0
    %846 = vmatprep.mubr.f32.mxu0 0.0
    %847 = vmatmul.mubr.f32.gmra.mrb[0].mxu0 %v775
    %v848 = vpop.f32.mrb[0].mxu0
    %v849 = vadd.f32 0.0, %v848
    %v850 = vpop.f32.mrb[0].mxu0
    %851 = vdwg.mxu0
    %852 = vrot.lane.b32.xlu0 %v243, 32
    %v853 = vpop.permute.xlu0 %852
    %854 = vrot.lane.b32.xlu0 %v245, 32
    %v855 = vpop.permute.xlu0 %854
    %v859 = vsel %vm595, %v680, 0
    %v862 = vsel %vm595, %v681, 0
    %864 = vmatprep.subr.mxu0 0.0
    %865 = vmatpush1.msra.mxu0 %v853
    %866 = vmatprep.subr.mxu0 0.0
    %867 = vmatpush1.msra.mxu0 %v855
    %868 = vmatprep.subr.mxu0 0.0
    %869 = vmatpush1.msra.mxu0 0.0
    %870 = vmatprep.subr.mxu0 0.0
    %871 = vmatpush1.msra.mxu0 0.0
    %872 = vmatprep.subr.mxu0 0.0
    %873 = vmatpush1.msra.mxu0 0.0
    %874 = vmatprep.subr.mxu0 0.0
    %875 = vmatpush1.msra.mxu0 0.0
    %876 = vmatprep.subr.mxu0 0.0
    %877 = vmatpush1.msra.mxu0 0.0
    %878 = vmatprep.subr.mxu0 0.0
    %879 = vmatpush1.msra.mxu0 0.0
    %880 = vmatprep.subr.mxu0 0.0
    %881 = vmatpush1.msra.mxu0 0.0
    %882 = vmatprep.subr.mxu0 0.0
    %883 = vmatpush1.msra.mxu0 0.0
    %884 = vmatprep.subr.mxu0 0.0
    %885 = vmatpush1.msra.mxu0 0.0
    %886 = vmatprep.subr.mxu0 0.0
    %887 = vmatpush1.msra.mxu0 0.0
    %888 = vmatprep.subr.mxu0 0.0
    %889 = vmatpush1.msra.mxu0 0.0
    %890 = vmatprep.subr.mxu0 0.0
    %891 = vmatpush1.msra.mxu0 0.0
    %892 = vmatprep.subr.mxu0 0.0
    %893 = vmatpush1.msra.mxu0 0.0
    %894 = vmatprep.subr.mxu0 0.0
    %895 = vmatpush1.msra.mxu0 0.0
    %896 = vmatprep.subr.mxu0 0.0
    %897 = vmatpush1.msra.mxu0 0.0
    %898 = vmatprep.subr.mxu0 0.0
    %899 = vmatpush1.msra.mxu0 0.0
    %900 = vmatprep.subr.mxu0 0.0
    %901 = vmatpush1.msra.mxu0 0.0
    %902 = vmatprep.subr.mxu0 0.0
    %903 = vmatpush1.msra.mxu0 0.0
    %904 = vmatprep.subr.mxu0 0.0
    %905 = vmatpush1.msra.mxu0 0.0
    %906 = vmatprep.subr.mxu0 0.0
    %907 = vmatpush1.msra.mxu0 0.0
    %908 = vmatprep.subr.mxu0 0.0
    %909 = vmatpush1.msra.mxu0 0.0
    %910 = vmatprep.subr.mxu0 0.0
    %911 = vmatpush1.msra.mxu0 0.0
    %912 = vmatprep.subr.mxu0 0.0
    %913 = vmatpush1.msra.mxu0 0.0
    %914 = vmatprep.subr.mxu0 0.0
    %915 = vmatpush1.msra.mxu0 0.0
    %916 = vmatprep.subr.mxu0 0.0
    %917 = vmatpush1.msra.mxu0 0.0
    %918 = vmatprep.subr.mxu0 0.0
    %919 = vmatpush1.msra.mxu0 0.0
    %920 = vmatprep.subr.mxu0 0.0
    %921 = vmatpush1.msra.mxu0 0.0
    %922 = vmatprep.subr.mxu0 0.0
    %923 = vmatpush1.msra.mxu0 0.0
    %924 = vmatprep.subr.mxu0 0.0
    %925 = vmatpush1.msra.mxu0 0.0
    %926 = vmatprep.subr.mxu0 0.0
    %927 = vmatpush1.msra.mxu0 0.0
    %928 = vmatprep.mubr.f32.mxu0 0.0
    %929 = vmatmul.mubr.f32.gmra.mrb[0].mxu0 %v859
    %v930 = vpop.f32.mrb[0].mxu0
    %v931 = vadd.f32 0.0, %v930
    %v932 = vpop.f32.mrb[0].mxu0
    %933 = vmatprep.mubr.f32.mxu0 0.0
    %934 = vmatmul.mubr.f32.gmra.mrb[0].mxu0 %v862
    %v935 = vpop.f32.mrb[0].mxu0
    %v936 = vadd.f32 0.0, %v935
    %v937 = vpop.f32.mrb[0].mxu0
    %938 = vdwg.mxu0
    %v940 = vsel %vm595, %v682, 0
    %v943 = vsel %vm595, %v683, 0
    %945 = vmatprep.subr.mxu0 0.0
    %946 = vmatpush1.msra.mxu0 %v853
    %947 = vmatprep.subr.mxu0 0.0
    %948 = vmatpush1.msra.mxu0 %v855
    %949 = vmatprep.subr.mxu0 0.0
    %950 = vmatpush1.msra.mxu0 0.0
    %951 = vmatprep.subr.mxu0 0.0
    %952 = vmatpush1.msra.mxu0 0.0
    %953 = vmatprep.subr.mxu0 0.0
    %954 = vmatpush1.msra.mxu0 0.0
    %955 = vmatprep.subr.mxu0 0.0
    %956 = vmatpush1.msra.mxu0 0.0
    %957 = vmatprep.subr.mxu0 0.0
    %958 = vmatpush1.msra.mxu0 0.0
    %959 = vmatprep.subr.mxu0 0.0
    %960 = vmatpush1.msra.mxu0 0.0
    %961 = vmatprep.subr.mxu0 0.0
    %962 = vmatpush1.msra.mxu0 0.0
    %963 = vmatprep.subr.mxu0 0.0
    %964 = vmatpush1.msra.mxu0 0.0
    %965 = vmatprep.subr.mxu0 0.0
    %966 = vmatpush1.msra.mxu0 0.0
    %967 = vmatprep.subr.mxu0 0.0
    %968 = vmatpush1.msra.mxu0 0.0
    %969 = vmatprep.subr.mxu0 0.0
    %970 = vmatpush1.msra.mxu0 0.0
    %971 = vmatprep.subr.mxu0 0.0
    %972 = vmatpush1.msra.mxu0 0.0
    %973 = vmatprep.subr.mxu0 0.0
    %974 = vmatpush1.msra.mxu0 0.0
    %975 = vmatprep.subr.mxu0 0.0
    %976 = vmatpush1.msra.mxu0 0.0
    %977 = vmatprep.subr.mxu0 0.0
    %978 = vmatpush1.msra.mxu0 0.0
    %979 = vmatprep.subr.mxu0 0.0
    %980 = vmatpush1.msra.mxu0 0.0
    %981 = vmatprep.subr.mxu0 0.0
    %982 = vmatpush1.msra.mxu0 0.0
    %983 = vmatprep.subr.mxu0 0.0
    %984 = vmatpush1.msra.mxu0 0.0
    %985 = vmatprep.subr.mxu0 0.0
    %986 = vmatpush1.msra.mxu0 0.0
    %987 = vmatprep.subr.mxu0 0.0
    %988 = vmatpush1.msra.mxu0 0.0
    %989 = vmatprep.subr.mxu0 0.0
    %990 = vmatpush1.msra.mxu0 0.0
    %991 = vmatprep.subr.mxu0 0.0
    %992 = vmatpush1.msra.mxu0 0.0
    %993 = vmatprep.subr.mxu0 0.0
    %994 = vmatpush1.msra.mxu0 0.0
    %995 = vmatprep.subr.mxu0 0.0
    %996 = vmatpush1.msra.mxu0 0.0
    %997 = vmatprep.subr.mxu0 0.0
    %998 = vmatpush1.msra.mxu0 0.0
    %999 = vmatprep.subr.mxu0 0.0
    %1000 = vmatpush1.msra.mxu0 0.0
    %1001 = vmatprep.subr.mxu0 0.0
    %1002 = vmatpush1.msra.mxu0 0.0
    %1003 = vmatprep.subr.mxu0 0.0
    %1004 = vmatpush1.msra.mxu0 0.0
    %1005 = vmatprep.subr.mxu0 0.0
    %1006 = vmatpush1.msra.mxu0 0.0
    %1007 = vmatprep.subr.mxu0 0.0
    %1008 = vmatpush1.msra.mxu0 0.0
    %1009 = vmatprep.mubr.f32.mxu0 0.0
    %1010 = vmatmul.mubr.f32.gmra.mrb[0].mxu0 %v940
    %v1011 = vpop.f32.mrb[0].mxu0
    %v1012 = vadd.f32 0.0, %v1011
    %v1013 = vpop.f32.mrb[0].mxu0
    %1014 = vmatprep.mubr.f32.mxu0 0.0
    %1015 = vmatmul.mubr.f32.gmra.mrb[0].mxu0 %v943
    %v1016 = vpop.f32.mrb[0].mxu0
    %v1017 = vadd.f32 0.0, %v1016
    %v1018 = vpop.f32.mrb[0].mxu0
    %1019 = vdwg.mxu0
    %1022 = vrot.lane.b32.xlu0 %v844, 8
    %v1023 = vpop.permute.xlu0 %1022
    %1024 = vrot.lane.b32.xlu0 %v849, 8
    %v1025 = vpop.permute.xlu0 %1024
    %1030 = vrot.lane.b32.xlu0 %v931, 16
    %v1031 = vpop.permute.xlu0 %1030
    %1032 = vrot.lane.b32.xlu0 %v936, 16
    %v1033 = vpop.permute.xlu0 %1032
    %1038 = vrot.lane.b32.xlu0 %v1012, 24
    %v1039 = vpop.permute.xlu0 %1038
    %1040 = vrot.lane.b32.xlu0 %v1017, 24
    %v1041 = vpop.permute.xlu0 %1040
    %v1044 = vsel %vm250, %v763, %v1023
    %v1045 = vsel %vm250, %v768, %v1025
    %v1046 = vsel %vm595, %v1044, %v1031
    %v1047 = vsel %vm595, %v1045, %v1033
    %vm1048 = vcmask 195584
    %v1049 = vsel %vm1048, %v1046, %v1039
    %v1050 = vsel %vm1048, %v1047, %v1041
    %v1051 = vld [vmem:[%s3] sm:$0xff]
    %v1052 = vld [vmem:[%s3 + $0x8] sm:$0xff]
    %v1053 = vld [vmem:[%s3 + $0x10] sm:$0xff]
    %v1054 = vld [vmem:[%s3 + $0x18] sm:$0xff]
    %v1056 = vsel %vm65, %v1049, 0
    %v1059 = vsel %vm65, %v1050, 0
    %1061 = vmatprep.subr.mxu0 0.0
    %1062 = vmatpush1.msra.mxu0 %v1051
    %1063 = vmatprep.subr.mxu0 0.0
    %1064 = vmatpush1.msra.mxu0 %v1052
    %1065 = vmatprep.subr.mxu0 0.0
    %1066 = vmatpush1.msra.mxu0 %v1053
    %1067 = vmatprep.subr.mxu0 0.0
    %1068 = vmatpush1.msra.mxu0 %v1054
    %1069 = vmatprep.subr.mxu0 0.0
    %1070 = vmatpush1.msra.mxu0 0.0
    %1071 = vmatprep.subr.mxu0 0.0
    %1072 = vmatpush1.msra.mxu0 0.0
    %1073 = vmatprep.subr.mxu0 0.0
    %1074 = vmatpush1.msra.mxu0 0.0
    %1075 = vmatprep.subr.mxu0 0.0
    %1076 = vmatpush1.msra.mxu0 0.0
    %1077 = vmatprep.subr.mxu0 0.0
    %1078 = vmatpush1.msra.mxu0 0.0
    %1079 = vmatprep.subr.mxu0 0.0
    %1080 = vmatpush1.msra.mxu0 0.0
    %1081 = vmatprep.subr.mxu0 0.0
    %1082 = vmatpush1.msra.mxu0 0.0
    %1083 = vmatprep.subr.mxu0 0.0
    %1084 = vmatpush1.msra.mxu0 0.0
    %1085 = vmatprep.subr.mxu0 0.0
    %1086 = vmatpush1.msra.mxu0 0.0
    %1087 = vmatprep.subr.mxu0 0.0
    %1088 = vmatpush1.msra.mxu0 0.0
    %1089 = vmatprep.subr.mxu0 0.0
    %1090 = vmatpush1.msra.mxu0 0.0
    %1091 = vmatprep.subr.mxu0 0.0
    %1092 = vmatpush1.msra.mxu0 0.0
    %1093 = vmatprep.subr.mxu0 0.0
    %1094 = vmatpush1.msra.mxu0 0.0
    %1095 = vmatprep.subr.mxu0 0.0
    %1096 = vmatpush1.msra.mxu0 0.0
    %1097 = vmatprep.subr.mxu0 0.0
    %1098 = vmatpush1.msra.mxu0 0.0
    %1099 = vmatprep.subr.mxu0 0.0
    %1100 = vmatpush1.msra.mxu0 0.0
    %1101 = vmatprep.subr.mxu0 0.0
    %1102 = vmatpush1.msra.mxu0 0.0
    %1103 = vmatprep.subr.mxu0 0.0
    %1104 = vmatpush1.msra.mxu0 0.0
    %1105 = vmatprep.subr.mxu0 0.0
    %1106 = vmatpush1.msra.mxu0 0.0
    %1107 = vmatprep.subr.mxu0 0.0
    %1108 = vmatpush1.msra.mxu0 0.0
    %1109 = vmatprep.subr.mxu0 0.0
    %1110 = vmatpush1.msra.mxu0 0.0
    %1111 = vmatprep.subr.mxu0 0.0
    %1112 = vmatpush1.msra.mxu0 0.0
    %1113 = vmatprep.subr.mxu0 0.0
    %1114 = vmatpush1.msra.mxu0 0.0
    %1115 = vmatprep.subr.mxu0 0.0
    %1116 = vmatpush1.msra.mxu0 0.0
    %1117 = vmatprep.subr.mxu0 0.0
    %1118 = vmatpush1.msra.mxu0 0.0
    %1119 = vmatprep.subr.mxu0 0.0
    %1120 = vmatpush1.msra.mxu0 0.0
    %1121 = vmatprep.subr.mxu0 0.0
    %1122 = vmatpush1.msra.mxu0 0.0
    %1123 = vmatprep.subr.mxu0 0.0
    %1124 = vmatpush1.msra.mxu0 0.0
    %1125 = vmatprep.mubr.f32.mxu0 0.0
    %1126 = vmatmul.mubr.f32.gmra.mrb[0].mxu0 %v1056
    %v1127 = vpop.f32.mrb[0].mxu0
    %v1128 = vadd.f32 0.0, %v1127
    %v1129 = vpop.f32.mrb[0].mxu0
    %1130 = vmatprep.mubr.f32.mxu0 0.0
    %1131 = vmatmul.mubr.f32.gmra.mrb[0].mxu0 %v1059
    %v1132 = vpop.f32.mrb[0].mxu0
    %v1133 = vadd.f32 0.0, %v1132
    %v1134 = vpop.f32.mrb[0].mxu0
    %1135 = vdwg.mxu0
    %v1136 = vadd.f32 %v44, %v1128
    %v1137 = vadd.f32 %v45, %v1133
    %v1138 = vld [vmem:[%s4] sm:$0x1]
    %v1139 = vmul.f32 %v1136, %v1136
    %v1140 = vmul.f32 %v1137, %v1137
    %v1141 = vsel %vm65, %v1139, 0.0
    %1142 = vadd.xlane.f32.xlu0 %v1141
    %v1143 = vpop.xlane.xlu0 %1142
    %v1144 = vsel %vm65, %v1140, 0.0
    %1145 = vadd.xlane.f32.xlu0 %v1144
    %v1146 = vpop.xlane.xlu0 %1145
    %v1147 = vmul.f32 %v1143, %v72
    %v1148 = vmul.f32 %v1146, %v72
    %v1149 = vadd.f32 %v1147, 1e-06
    %v1150 = vadd.f32 %v1148, 1e-06
    %v1151 = vrsqrt.pop %v1149
    %v1152 = vrsqrt.pop %v1150
    %v1153 = vmul.f32 %v1136, %v1151
    %v1154 = vmul.f32 %v1137, %v1152
    %v1156 = vlaneseq
    %v1157 = vshrl.u32 %v1156, 7
    %v1158 = vsub.s32 0, %v1157
    %v1159 = vrot.slane %v1138, %v1158
    %v1161 = vmul.f32 %v1153, %v1159
    %v1162 = vmul.f32 %v1154, %v1159
    %v1163 = vld [vmem:[%s5] sm:$0xff]
    %v1164 = vld [vmem:[%s5 + $0x8] sm:$0xff]
    %v1165 = vld [vmem:[%s5 + $0x10] sm:$0xff]
    %v1166 = vld [vmem:[%s5 + $0x18] sm:$0xff]
    %v1168 = vsel %vm65, %v1161, 0
    %v1171 = vsel %vm65, %v1162, 0
    %1173 = vmatprep.subr.mxu0 0.0
    %1174 = vmatpush1.msra.mxu0 %v1163
    %1175 = vmatprep.subr.mxu0 0.0
    %1176 = vmatpush1.msra.mxu0 %v1164
    %1177 = vmatprep.subr.mxu0 0.0
    %1178 = vmatpush1.msra.mxu0 %v1165
    %1179 = vmatprep.subr.mxu0 0.0
    %1180 = vmatpush1.msra.mxu0 %v1166
    %1181 = vmatprep.subr.mxu0 0.0
    %1182 = vmatpush1.msra.mxu0 0.0
    %1183 = vmatprep.subr.mxu0 0.0
    %1184 = vmatpush1.msra.mxu0 0.0
    %1185 = vmatprep.subr.mxu0 0.0
    %1186 = vmatpush1.msra.mxu0 0.0
    %1187 = vmatprep.subr.mxu0 0.0
    %1188 = vmatpush1.msra.mxu0 0.0
    %1189 = vmatprep.subr.mxu0 0.0
    %1190 = vmatpush1.msra.mxu0 0.0
    %1191 = vmatprep.subr.mxu0 0.0
    %1192 = vmatpush1.msra.mxu0 0.0
    %1193 = vmatprep.subr.mxu0 0.0
    %1194 = vmatpush1.msra.mxu0 0.0
    %1195 = vmatprep.subr.mxu0 0.0
    %1196 = vmatpush1.msra.mxu0 0.0
    %1197 = vmatprep.subr.mxu0 0.0
    %1198 = vmatpush1.msra.mxu0 0.0
    %1199 = vmatprep.subr.mxu0 0.0
    %1200 = vmatpush1.msra.mxu0 0.0
    %1201 = vmatprep.subr.mxu0 0.0
    %1202 = vmatpush1.msra.mxu0 0.0
    %1203 = vmatprep.subr.mxu0 0.0
    %1204 = vmatpush1.msra.mxu0 0.0
    %1205 = vmatprep.subr.mxu0 0.0
    %1206 = vmatpush1.msra.mxu0 0.0
    %1207 = vmatprep.subr.mxu0 0.0
    %1208 = vmatpush1.msra.mxu0 0.0
    %1209 = vmatprep.subr.mxu0 0.0
    %1210 = vmatpush1.msra.mxu0 0.0
    %1211 = vmatprep.subr.mxu0 0.0
    %1212 = vmatpush1.msra.mxu0 0.0
    %1213 = vmatprep.subr.mxu0 0.0
    %1214 = vmatpush1.msra.mxu0 0.0
    %1215 = vmatprep.subr.mxu0 0.0
    %1216 = vmatpush1.msra.mxu0 0.0
    %1217 = vmatprep.subr.mxu0 0.0
    %1218 = vmatpush1.msra.mxu0 0.0
    %1219 = vmatprep.subr.mxu0 0.0
    %1220 = vmatpush1.msra.mxu0 0.0
    %1221 = vmatprep.subr.mxu0 0.0
    %1222 = vmatpush1.msra.mxu0 0.0
    %1223 = vmatprep.subr.mxu0 0.0
    %1224 = vmatpush1.msra.mxu0 0.0
    %1225 = vmatprep.subr.mxu0 0.0
    %1226 = vmatpush1.msra.mxu0 0.0
    %1227 = vmatprep.subr.mxu0 0.0
    %1228 = vmatpush1.msra.mxu0 0.0
    %1229 = vmatprep.subr.mxu0 0.0
    %1230 = vmatpush1.msra.mxu0 0.0
    %1231 = vmatprep.subr.mxu0 0.0
    %1232 = vmatpush1.msra.mxu0 0.0
    %1233 = vmatprep.subr.mxu0 0.0
    %1234 = vmatpush1.msra.mxu0 0.0
    %1235 = vmatprep.subr.mxu0 0.0
    %1236 = vmatpush1.msra.mxu0 0.0
    %1237 = vmatprep.mubr.f32.mxu0 0.0
    %1238 = vmatmul.mubr.f32.gmra.mrb[0].mxu0 %v1168
    %v1239 = vpop.f32.mrb[0].mxu0
    %v1240 = vadd.f32 0.0, %v1239
    %v1241 = vpop.f32.mrb[0].mxu0
    %1242 = vmatprep.mubr.f32.mxu0 0.0
    %1243 = vmatmul.mubr.f32.gmra.mrb[0].mxu0 %v1171
    %v1244 = vpop.f32.mrb[0].mxu0
    %v1245 = vadd.f32 0.0, %v1244
    %v1246 = vpop.f32.mrb[0].mxu0
    %1247 = vdwg.mxu0
    %v1248 = vmul.f32 %v1240, 0.5
    %v1249 = vmul.f32 %v1245, 0.5
    %v1250 = vmul.f32 %v1240, 0.70710677
    %v1251 = vmul.f32 %v1245, 0.70710677
    %v1252 = verf.f32.pop %v1250
    %v1253 = verf.f32.pop %v1251
    %v1254 = vadd.f32 %v1252, 1.0
    %v1255 = vadd.f32 %v1253, 1.0
    %v1256 = vmul.f32 %v1248, %v1254
    %v1257 = vmul.f32 %v1249, %v1255
    %1260 = vrot.lane.b32.xlu0 %v1240, 64
    %v1261 = vpop.permute.xlu0 %1260
    %1262 = vrot.lane.b32.xlu0 %v1245, 64
    %v1263 = vpop.permute.xlu0 %1262
    %v1266 = vmul.f32 %v1256, %v1261
    %v1267 = vmul.f32 %v1257, %v1263
    %v1268 = vld [vmem:[%s6] sm:$0xff]
    %v1269 = vld [vmem:[%s6 + $0x8] sm:$0xff]
    %v1270 = vld [vmem:[%s6 + $0x10] sm:$0xff]
    %v1271 = vld [vmem:[%s6 + $0x18] sm:$0xff]
    %v1272 = vld [vmem:[%s6 + $0x20] sm:$0xff]
    %v1273 = vld [vmem:[%s6 + $0x28] sm:$0xff]
    %v1274 = vld [vmem:[%s6 + $0x30] sm:$0xff]
    %v1275 = vld [vmem:[%s6 + $0x38] sm:$0xff]
    %vm1276 = vcmask 523264
    %v1278 = vsel %vm1276, %v1266, 0
    %v1281 = vsel %vm1276, %v1267, 0
    %1283 = vmatprep.subr.mxu0 0.0
    %1284 = vmatpush1.msra.mxu0 %v1268
    %1285 = vmatprep.subr.mxu0 0.0
    %1286 = vmatpush1.msra.mxu0 %v1269
    %1287 = vmatprep.subr.mxu0 0.0
    %1288 = vmatpush1.msra.mxu0 %v1270
    %1289 = vmatprep.subr.mxu0 0.0
    %1290 = vmatpush1.msra.mxu0 %v1271
    %1291 = vmatprep.subr.mxu0 0.0
    %1292 = vmatpush1.msra.mxu0 %v1272
    %1293 = vmatprep.subr.mxu0 0.0
    %1294 = vmatpush1.msra.mxu0 %v1273
    %1295 = vmatprep.subr.mxu0 0.0
    %1296 = vmatpush1.msra.mxu0 %v1274
    %1297 = vmatprep.subr.mxu0 0.0
    %1298 = vmatpush1.msra.mxu0 %v1275
    %1299 = vmatprep.subr.mxu0 0.0
    %1300 = vmatpush1.msra.mxu0 0.0
    %1301 = vmatprep.subr.mxu0 0.0
    %1302 = vmatpush1.msra.mxu0 0.0
    %1303 = vmatprep.subr.mxu0 0.0
    %1304 = vmatpush1.msra.mxu0 0.0
    %1305 = vmatprep.subr.mxu0 0.0
    %1306 = vmatpush1.msra.mxu0 0.0
    %1307 = vmatprep.subr.mxu0 0.0
    %1308 = vmatpush1.msra.mxu0 0.0
    %1309 = vmatprep.subr.mxu0 0.0
    %1310 = vmatpush1.msra.mxu0 0.0
    %1311 = vmatprep.subr.mxu0 0.0
    %1312 = vmatpush1.msra.mxu0 0.0
    %1313 = vmatprep.subr.mxu0 0.0
    %1314 = vmatpush1.msra.mxu0 0.0
    %1315 = vmatprep.subr.mxu0 0.0
    %1316 = vmatpush1.msra.mxu0 0.0
    %1317 = vmatprep.subr.mxu0 0.0
    %1318 = vmatpush1.msra.mxu0 0.0
    %1319 = vmatprep.subr.mxu0 0.0
    %1320 = vmatpush1.msra.mxu0 0.0
    %1321 = vmatprep.subr.mxu0 0.0
    %1322 = vmatpush1.msra.mxu0 0.0
    %1323 = vmatprep.subr.mxu0 0.0
    %1324 = vmatpush1.msra.mxu0 0.0
    %1325 = vmatprep.subr.mxu0 0.0
    %1326 = vmatpush1.msra.mxu0 0.0
    %1327 = vmatprep.subr.mxu0 0.0
    %1328 = vmatpush1.msra.mxu0 0.0
    %1329 = vmatprep.subr.mxu0 0.0
    %1330 = vmatpush1.msra.mxu0 0.0
    %1331 = vmatprep.subr.mxu0 0.0
    %1332 = vmatpush1.msra.mxu0 0.0
    %1333 = vmatprep.subr.mxu0 0.0
    %1334 = vmatpush1.msra.mxu0 0.0
    %1335 = vmatprep.subr.mxu0 0.0
    %1336 = vmatpush1.msra.mxu0 0.0
    %1337 = vmatprep.subr.mxu0 0.0
    %1338 = vmatpush1.msra.mxu0 0.0
    %1339 = vmatprep.subr.mxu0 0.0
    %1340 = vmatpush1.msra.mxu0 0.0
    %1341 = vmatprep.subr.mxu0 0.0
    %1342 = vmatpush1.msra.mxu0 0.0
    %1343 = vmatprep.subr.mxu0 0.0
    %1344 = vmatpush1.msra.mxu0 0.0
    %1345 = vmatprep.subr.mxu0 0.0
    %1346 = vmatpush1.msra.mxu0 0.0
    %1347 = vmatprep.mubr.f32.mxu0 0.0
    %1348 = vmatmul.mubr.f32.gmra.mrb[0].mxu0 %v1278
    %v1349 = vpop.f32.mrb[0].mxu0
    %v1350 = vadd.f32 0.0, %v1349
    %v1351 = vpop.f32.mrb[0].mxu0
    %1352 = vmatprep.mubr.f32.mxu0 0.0
    %1353 = vmatmul.mubr.f32.gmra.mrb[0].mxu0 %v1281
    %v1354 = vpop.f32.mrb[0].mxu0
    %v1355 = vadd.f32 0.0, %v1354
    %v1356 = vpop.f32.mrb[0].mxu0
    %1357 = vdwg.mxu0
    %v1358 = vadd.f32 %v1136, %v1350
    %v1359 = vadd.f32 %v1137, %v1355
    %s1360 = scalar_lea.vmem %s1, 1
    %v1361 = vld [vmem:[%s1360] sm:$0x1]
    %v1362 = vmul.f32 %v1358, %v1358
    %v1363 = vmul.f32 %v1359, %v1359
    %v1364 = vsel %vm65, %v1362, 0.0
    %1365 = vadd.xlane.f32.xlu0 %v1364
    %v1366 = vpop.xlane.xlu0 %1365
    %v1367 = vsel %vm65, %v1363, 0.0
    %1368 = vadd.xlane.f32.xlu0 %v1367
    %v1369 = vpop.xlane.xlu0 %1368
    %v1370 = vmul.f32 %v1366, %v72
    %v1371 = vmul.f32 %v1369, %v72
    %v1372 = vadd.f32 %v1370, 1e-06
    %v1373 = vadd.f32 %v1371, 1e-06
    %v1374 = vrsqrt.pop %v1372
    %v1375 = vrsqrt.pop %v1373
    %v1376 = vmul.f32 %v1358, %v1374
    %v1377 = vmul.f32 %v1359, %v1375
    %v1379 = vlaneseq
    %v1380 = vshrl.u32 %v1379, 7
    %v1381 = vsub.s32 0, %v1380
    %v1382 = vrot.slane %v1361, %v1381
    %v1384 = vmul.f32 %v1376, %v1382
    %v1385 = vmul.f32 %v1377, %v1382
    %s1386 = scalar_lea.vmem %s2, 32
    %v1387 = vld [vmem:[%s1386] sm:$0xff]
    %v1388 = vld [vmem:[%s1386 + $0x8] sm:$0xff]
    %v1389 = vld [vmem:[%s1386 + $0x10] sm:$0xff]
    %v1390 = vld [vmem:[%s1386 + $0x18] sm:$0xff]
    %v1392 = vsel %vm65, %v1384, 0
    %v1395 = vsel %vm65, %v1385, 0
    %1397 = vmatprep.subr.mxu0 0.0
    %1398 = vmatpush1.msra.mxu0 %v1387
    %1399 = vmatprep.subr.mxu0 0.0
    %1400 = vmatpush1.msra.mxu0 %v1388
    %1401 = vmatprep.subr.mxu0 0.0
    %1402 = vmatpush1.msra.mxu0 %v1389
    %1403 = vmatprep.subr.mxu0 0.0
    %1404 = vmatpush1.msra.mxu0 %v1390
    %1405 = vmatprep.subr.mxu0 0.0
    %1406 = vmatpush1.msra.mxu0 0.0
    %1407 = vmatprep.subr.mxu0 0.0
    %1408 = vmatpush1.msra.mxu0 0.0
    %1409 = vmatprep.subr.mxu0 0.0
    %1410 = vmatpush1.msra.mxu0 0.0
    %1411 = vmatprep.subr.mxu0 0.0
    %1412 = vmatpush1.msra.mxu0 0.0
    %1413 = vmatprep.subr.mxu0 0.0
    %1414 = vmatpush1.msra.mxu0 0.0
    %1415 = vmatprep.subr.mxu0 0.0
    %1416 = vmatpush1.msra.mxu0 0.0
    %1417 = vmatprep.subr.mxu0 0.0
    %1418 = vmatpush1.msra.mxu0 0.0
    %1419 = vmatprep.subr.mxu0 0.0
    %1420 = vmatpush1.msra.mxu0 0.0
    %1421 = vmatprep.subr.mxu0 0.0
    %1422 = vmatpush1.msra.mxu0 0.0
    %1423 = vmatprep.subr.mxu0 0.0
    %1424 = vmatpush1.msra.mxu0 0.0
    %1425 = vmatprep.subr.mxu0 0.0
    %1426 = vmatpush1.msra.mxu0 0.0
    %1427 = vmatprep.subr.mxu0 0.0
    %1428 = vmatpush1.msra.mxu0 0.0
    %1429 = vmatprep.subr.mxu0 0.0
    %1430 = vmatpush1.msra.mxu0 0.0
    %1431 = vmatprep.subr.mxu0 0.0
    %1432 = vmatpush1.msra.mxu0 0.0
    %1433 = vmatprep.subr.mxu0 0.0
    %1434 = vmatpush1.msra.mxu0 0.0
    %1435 = vmatprep.subr.mxu0 0.0
    %1436 = vmatpush1.msra.mxu0 0.0
    %1437 = vmatprep.subr.mxu0 0.0
    %1438 = vmatpush1.msra.mxu0 0.0
    %1439 = vmatprep.subr.mxu0 0.0
    %1440 = vmatpush1.msra.mxu0 0.0
    %1441 = vmatprep.subr.mxu0 0.0
    %1442 = vmatpush1.msra.mxu0 0.0
    %1443 = vmatprep.subr.mxu0 0.0
    %1444 = vmatpush1.msra.mxu0 0.0
    %1445 = vmatprep.subr.mxu0 0.0
    %1446 = vmatpush1.msra.mxu0 0.0
    %1447 = vmatprep.subr.mxu0 0.0
    %1448 = vmatpush1.msra.mxu0 0.0
    %1449 = vmatprep.subr.mxu0 0.0
    %1450 = vmatpush1.msra.mxu0 0.0
    %1451 = vmatprep.subr.mxu0 0.0
    %1452 = vmatpush1.msra.mxu0 0.0
    %1453 = vmatprep.subr.mxu0 0.0
    %1454 = vmatpush1.msra.mxu0 0.0
    %1455 = vmatprep.subr.mxu0 0.0
    %1456 = vmatpush1.msra.mxu0 0.0
    %1457 = vmatprep.subr.mxu0 0.0
    %1458 = vmatpush1.msra.mxu0 0.0
    %1459 = vmatprep.subr.mxu0 0.0
    %1460 = vmatpush1.msra.mxu0 0.0
    %1461 = vmatprep.mubr.f32.mxu0 0.0
    %1462 = vmatmul.mubr.f32.gmra.mrb[0].mxu0 %v1392
    %v1463 = vpop.f32.mrb[0].mxu0
    %v1464 = vadd.f32 0.0, %v1463
    %v1465 = vpop.f32.mrb[0].mxu0
    %1466 = vmatprep.mubr.f32.mxu0 0.0
    %1467 = vmatmul.mubr.f32.gmra.mrb[0].mxu0 %v1395
    %v1468 = vpop.f32.mrb[0].mxu0
    %v1469 = vadd.f32 0.0, %v1468
    %v1470 = vpop.f32.mrb[0].mxu0
    %1471 = vdwg.mxu0
    %v1472 = vmul.f32 %v1464, %v177
    %v1473 = vmul.f32 %v1469, %v179
    %1476 = vrot.lane.b32.xlu0 %v1472, 96
    %v1477 = vpop.permute.xlu0 %1476
    %1478 = vrot.lane.b32.xlu0 %v1473, 96
    %v1479 = vpop.permute.xlu0 %1478
    %v1482 = vadd.f32 %v1472, %v1477
    %v1483 = vadd.f32 %v1473, %v1479
    %v1484 = vmul.f32 %v1464, %v195
    %v1485 = vmul.f32 %v1469, %v197
    %v1486 = vmul.f32 %v1464, %v203
    %v1487 = vmul.f32 %v1469, %v205
    %1490 = vrot.lane.b32.xlu0 %v1486, 112
    %v1491 = vpop.permute.xlu0 %1490
    %1492 = vrot.lane.b32.xlu0 %v1487, 112
    %v1493 = vpop.permute.xlu0 %1492
    %v1496 = vadd.f32 %v1484, %v1491
    %v1497 = vadd.f32 %v1485, %v1493
    %1500 = vrot.lane.b32.xlu0 %v1482, 120
    %v1501 = vpop.permute.xlu0 %1500
    %1502 = vrot.lane.b32.xlu0 %v1483, 120
    %v1503 = vpop.permute.xlu0 %1502
    %1504 = vrot.lane.b32.xlu0 %v1482, 112
    %v1505 = vpop.permute.xlu0 %1504
    %1506 = vrot.lane.b32.xlu0 %v1483, 112
    %v1507 = vpop.permute.xlu0 %1506
    %1508 = vrot.lane.b32.xlu0 %v1482, 104
    %v1509 = vpop.permute.xlu0 %1508
    %1510 = vrot.lane.b32.xlu0 %v1483, 104
    %v1511 = vpop.permute.xlu0 %1510
    %1514 = vrot.lane.b32.xlu0 %v1496, 120
    %v1515 = vpop.permute.xlu0 %1514
    %1516 = vrot.lane.b32.xlu0 %v1497, 120
    %v1517 = vpop.permute.xlu0 %1516
    %1520 = vrot.lane.b32.xlu0 %v1464, 120
    %v1521 = vpop.permute.xlu0 %1520
    %1522 = vrot.lane.b32.xlu0 %v1469, 120
    %v1523 = vpop.permute.xlu0 %1522
    %1524 = vrot.lane.b32.xlu0 %v1496, 64
    %v1525 = vpop.permute.xlu0 %1524
    %1526 = vrot.lane.b32.xlu0 %v1497, 64
    %v1527 = vpop.permute.xlu0 %1526
    %v1528 = vsel %vm250, %v1482, 0
    %v1530 = vsel %vm250, %v1483, 0
    %v1532 = vsel %vm250, %v1525, 0
    %v1534 = vsel %vm250, %v1527, 0
    %1536 = vmatprep.subr.mxu0 0.0
    %1537 = vmatpush1.xpose.msra.mxu0 %v1532
    %1538 = vmatprep.subr.mxu0 0.0
    %1539 = vmatpush1.xpose.msra.mxu0 %v1534
    %1540 = vmatprep.subr.mxu0 0.0
    %1541 = vmatpush1.xpose.msra.mxu0 0.0
    %1542 = vmatprep.subr.mxu0 0.0
    %1543 = vmatpush1.xpose.msra.mxu0 0.0
    %1544 = vmatprep.subr.mxu0 0.0
    %1545 = vmatpush1.xpose.msra.mxu0 0.0
    %1546 = vmatprep.subr.mxu0 0.0
    %1547 = vmatpush1.xpose.msra.mxu0 0.0
    %1548 = vmatprep.subr.mxu0 0.0
    %1549 = vmatpush1.xpose.msra.mxu0 0.0
    %1550 = vmatprep.subr.mxu0 0.0
    %1551 = vmatpush1.xpose.msra.mxu0 0.0
    %1552 = vmatprep.subr.mxu0 0.0
    %1553 = vmatpush1.xpose.msra.mxu0 0.0
    %1554 = vmatprep.subr.mxu0 0.0
    %1555 = vmatpush1.xpose.msra.mxu0 0.0
    %1556 = vmatprep.subr.mxu0 0.0
    %1557 = vmatpush1.xpose.msra.mxu0 0.0
    %1558 = vmatprep.subr.mxu0 0.0
    %1559 = vmatpush1.xpose.msra.mxu0 0.0
    %1560 = vmatprep.subr.mxu0 0.0
    %1561 = vmatpush1.xpose.msra.mxu0 0.0
    %1562 = vmatprep.subr.mxu0 0.0
    %1563 = vmatpush1.xpose.msra.mxu0 0.0
    %1564 = vmatprep.subr.mxu0 0.0
    %1565 = vmatpush1.xpose.msra.mxu0 0.0
    %1566 = vmatprep.subr.mxu0 0.0
    %1567 = vmatpush1.xpose.msra.mxu0 0.0
    %1568 = vmatprep.subr.mxu0 0.0
    %1569 = vmatpush1.xpose.msra.mxu0 0.0
    %1570 = vmatprep.subr.mxu0 0.0
    %1571 = vmatpush1.xpose.msra.mxu0 0.0
    %1572 = vmatprep.subr.mxu0 0.0
    %1573 = vmatpush1.xpose.msra.mxu0 0.0
    %1574 = vmatprep.subr.mxu0 0.0
    %1575 = vmatpush1.xpose.msra.mxu0 0.0
    %1576 = vmatprep.subr.mxu0 0.0
    %1577 = vmatpush1.xpose.msra.mxu0 0.0
    %1578 = vmatprep.subr.mxu0 0.0
    %1579 = vmatpush1.xpose.msra.mxu0 0.0
    %1580 = vmatprep.subr.mxu0 0.0
    %1581 = vmatpush1.xpose.msra.mxu0 0.0
    %1582 = vmatprep.subr.mxu0 0.0
    %1583 = vmatpush1.xpose.msra.mxu0 0.0
    %1584 = vmatprep.subr.mxu0 0.0
    %1585 = vmatpush1.xpose.msra.mxu0 0.0
    %1586 = vmatprep.subr.mxu0 0.0
    %1587 = vmatpush1.xpose.msra.mxu0 0.0
    %1588 = vmatprep.subr.mxu0 0.0
    %1589 = vmatpush1.xpose.msra.mxu0 0.0
    %1590 = vmatprep.subr.mxu0 0.0
    %1591 = vmatpush1.xpose.msra.mxu0 0.0
    %1592 = vmatprep.subr.mxu0 0.0
    %1593 = vmatpush1.xpose.msra.mxu0 0.0
    %1594 = vmatprep.subr.mxu0 0.0
    %1595 = vmatpush1.xpose.msra.mxu0 0.0
    %1596 = vmatprep.subr.mxu0 0.0
    %1597 = vmatpush1.xpose.msra.mxu0 0.0
    %1598 = vmatprep.subr.mxu0 0.0
    %1599 = vmatpush1.xpose.msra.mxu0 0.0
    %1600 = vmatprep.mubr.f32.mxu0 0.0
    %1601 = vmatmul.mubr.f32.gmra.mrb[0].mxu0 %v1528
    %v1602 = vpop.f32.mrb[0].mxu0
    %v1603 = vadd.f32 0.0, %v1602
    %v1604 = vpop.f32.mrb[0].mxu0
    %1605 = vmatprep.mubr.f32.mxu0 0.0
    %1606 = vmatmul.mubr.f32.gmra.mrb[0].mxu0 %v1530
    %v1607 = vpop.f32.mrb[0].mxu0
    %v1608 = vadd.f32 0.0, %v1607
    %v1609 = vpop.f32.mrb[0].mxu0
    %1610 = vdwg.mxu0
    %v1611 = vsel %vm250, %v1501, 0
    %v1613 = vsel %vm250, %v1503, 0
    %1615 = vmatprep.subr.mxu0 0.0
    %1616 = vmatpush1.xpose.msra.mxu0 %v1532
    %1617 = vmatprep.subr.mxu0 0.0
    %1618 = vmatpush1.xpose.msra.mxu0 %v1534
    %1619 = vmatprep.subr.mxu0 0.0
    %1620 = vmatpush1.xpose.msra.mxu0 0.0
    %1621 = vmatprep.subr.mxu0 0.0
    %1622 = vmatpush1.xpose.msra.mxu0 0.0
    %1623 = vmatprep.subr.mxu0 0.0
    %1624 = vmatpush1.xpose.msra.mxu0 0.0
    %1625 = vmatprep.subr.mxu0 0.0
    %1626 = vmatpush1.xpose.msra.mxu0 0.0
    %1627 = vmatprep.subr.mxu0 0.0
    %1628 = vmatpush1.xpose.msra.mxu0 0.0
    %1629 = vmatprep.subr.mxu0 0.0
    %1630 = vmatpush1.xpose.msra.mxu0 0.0
    %1631 = vmatprep.subr.mxu0 0.0
    %1632 = vmatpush1.xpose.msra.mxu0 0.0
    %1633 = vmatprep.subr.mxu0 0.0
    %1634 = vmatpush1.xpose.msra.mxu0 0.0
    %1635 = vmatprep.subr.mxu0 0.0
    %1636 = vmatpush1.xpose.msra.mxu0 0.0
    %1637 = vmatprep.subr.mxu0 0.0
    %1638 = vmatpush1.xpose.msra.mxu0 0.0
    %1639 = vmatprep.subr.mxu0 0.0
    %1640 = vmatpush1.xpose.msra.mxu0 0.0
    %1641 = vmatprep.subr.mxu0 0.0
    %1642 = vmatpush1.xpose.msra.mxu0 0.0
    %1643 = vmatprep.subr.mxu0 0.0
    %1644 = vmatpush1.xpose.msra.mxu0 0.0
    %1645 = vmatprep.subr.mxu0 0.0
    %1646 = vmatpush1.xpose.msra.mxu0 0.0
    %1647 = vmatprep.subr.mxu0 0.0
    %1648 = vmatpush1.xpose.msra.mxu0 0.0
    %1649 = vmatprep.subr.mxu0 0.0
    %1650 = vmatpush1.xpose.msra.mxu0 0.0
    %1651 = vmatprep.subr.mxu0 0.0
    %1652 = vmatpush1.xpose.msra.mxu0 0.0
    %1653 = vmatprep.subr.mxu0 0.0
    %1654 = vmatpush1.xpose.msra.mxu0 0.0
    %1655 = vmatprep.subr.mxu0 0.0
    %1656 = vmatpush1.xpose.msra.mxu0 0.0
    %1657 = vmatprep.subr.mxu0 0.0
    %1658 = vmatpush1.xpose.msra.mxu0 0.0
    %1659 = vmatprep.subr.mxu0 0.0
    %1660 = vmatpush1.xpose.msra.mxu0 0.0
    %1661 = vmatprep.subr.mxu0 0.0
    %1662 = vmatpush1.xpose.msra.mxu0 0.0
    %1663 = vmatprep.subr.mxu0 0.0
    %1664 = vmatpush1.xpose.msra.mxu0 0.0
    %1665 = vmatprep.subr.mxu0 0.0
    %1666 = vmatpush1.xpose.msra.mxu0 0.0
    %1667 = vmatprep.subr.mxu0 0.0
    %1668 = vmatpush1.xpose.msra.mxu0 0.0
    %1669 = vmatprep.subr.mxu0 0.0
    %1670 = vmatpush1.xpose.msra.mxu0 0.0
    %1671 = vmatprep.subr.mxu0 0.0
    %1672 = vmatpush1.xpose.msra.mxu0 0.0
    %1673 = vmatprep.subr.mxu0 0.0
    %1674 = vmatpush1.xpose.msra.mxu0 0.0
    %1675 = vmatprep.subr.mxu0 0.0
    %1676 = vmatpush1.xpose.msra.mxu0 0.0
    %1677 = vmatprep.subr.mxu0 0.0
    %1678 = vmatpush1.xpose.msra.mxu0 0.0
    %1679 = vmatprep.mubr.f32.mxu0 0.0
    %1680 = vmatmul.mubr.f32.gmra.mrb[0].mxu0 %v1611
    %v1681 = vpop.f32.mrb[0].mxu0
    %v1682 = vadd.f32 0.0, %v1681
    %v1683 = vpop.f32.mrb[0].mxu0
    %1684 = vmatprep.mubr.f32.mxu0 0.0
    %1685 = vmatmul.mubr.f32.gmra.mrb[0].mxu0 %v1613
    %v1686 = vpop.f32.mrb[0].mxu0
    %v1687 = vadd.f32 0.0, %v1686
    %v1688 = vpop.f32.mrb[0].mxu0
    %1689 = vdwg.mxu0
    %1690 = vrot.lane.b32.xlu0 %v1515, 64
    %v1691 = vpop.permute.xlu0 %1690
    %1692 = vrot.lane.b32.xlu0 %v1517, 64
    %v1693 = vpop.permute.xlu0 %1692
    %v1694 = vsel %vm250, %v1505, 0
    %v1696 = vsel %vm250, %v1507, 0
    %v1698 = vsel %vm250, %v1691, 0
    %v1700 = vsel %vm250, %v1693, 0
    %1702 = vmatprep.subr.mxu0 0.0
    %1703 = vmatpush1.xpose.msra.mxu0 %v1698
    %1704 = vmatprep.subr.mxu0 0.0
    %1705 = vmatpush1.xpose.msra.mxu0 %v1700
    %1706 = vmatprep.subr.mxu0 0.0
    %1707 = vmatpush1.xpose.msra.mxu0 0.0
    %1708 = vmatprep.subr.mxu0 0.0
    %1709 = vmatpush1.xpose.msra.mxu0 0.0
    %1710 = vmatprep.subr.mxu0 0.0
    %1711 = vmatpush1.xpose.msra.mxu0 0.0
    %1712 = vmatprep.subr.mxu0 0.0
    %1713 = vmatpush1.xpose.msra.mxu0 0.0
    %1714 = vmatprep.subr.mxu0 0.0
    %1715 = vmatpush1.xpose.msra.mxu0 0.0
    %1716 = vmatprep.subr.mxu0 0.0
    %1717 = vmatpush1.xpose.msra.mxu0 0.0
    %1718 = vmatprep.subr.mxu0 0.0
    %1719 = vmatpush1.xpose.msra.mxu0 0.0
    %1720 = vmatprep.subr.mxu0 0.0
    %1721 = vmatpush1.xpose.msra.mxu0 0.0
    %1722 = vmatprep.subr.mxu0 0.0
    %1723 = vmatpush1.xpose.msra.mxu0 0.0
    %1724 = vmatprep.subr.mxu0 0.0
    %1725 = vmatpush1.xpose.msra.mxu0 0.0
    %1726 = vmatprep.subr.mxu0 0.0
    %1727 = vmatpush1.xpose.msra.mxu0 0.0
    %1728 = vmatprep.subr.mxu0 0.0
    %1729 = vmatpush1.xpose.msra.mxu0 0.0
    %1730 = vmatprep.subr.mxu0 0.0
    %1731 = vmatpush1.xpose.msra.mxu0 0.0
    %1732 = vmatprep.subr.mxu0 0.0
    %1733 = vmatpush1.xpose.msra.mxu0 0.0
    %1734 = vmatprep.subr.mxu0 0.0
    %1735 = vmatpush1.xpose.msra.mxu0 0.0
    %1736 = vmatprep.subr.mxu0 0.0
    %1737 = vmatpush1.xpose.msra.mxu0 0.0
    %1738 = vmatprep.subr.mxu0 0.0
    %1739 = vmatpush1.xpose.msra.mxu0 0.0
    %1740 = vmatprep.subr.mxu0 0.0
    %1741 = vmatpush1.xpose.msra.mxu0 0.0
    %1742 = vmatprep.subr.mxu0 0.0
    %1743 = vmatpush1.xpose.msra.mxu0 0.0
    %1744 = vmatprep.subr.mxu0 0.0
    %1745 = vmatpush1.xpose.msra.mxu0 0.0
    %1746 = vmatprep.subr.mxu0 0.0
    %1747 = vmatpush1.xpose.msra.mxu0 0.0
    %1748 = vmatprep.subr.mxu0 0.0
    %1749 = vmatpush1.xpose.msra.mxu0 0.0
    %1750 = vmatprep.subr.mxu0 0.0
    %1751 = vmatpush1.xpose.msra.mxu0 0.0
    %1752 = vmatprep.subr.mxu0 0.0
    %1753 = vmatpush1.xpose.msra.mxu0 0.0
    %1754 = vmatprep.subr.mxu0 0.0
    %1755 = vmatpush1.xpose.msra.mxu0 0.0
    %1756 = vmatprep.subr.mxu0 0.0
    %1757 = vmatpush1.xpose.msra.mxu0 0.0
    %1758 = vmatprep.subr.mxu0 0.0
    %1759 = vmatpush1.xpose.msra.mxu0 0.0
    %1760 = vmatprep.subr.mxu0 0.0
    %1761 = vmatpush1.xpose.msra.mxu0 0.0
    %1762 = vmatprep.subr.mxu0 0.0
    %1763 = vmatpush1.xpose.msra.mxu0 0.0
    %1764 = vmatprep.subr.mxu0 0.0
    %1765 = vmatpush1.xpose.msra.mxu0 0.0
    %1766 = vmatprep.mubr.f32.mxu0 0.0
    %1767 = vmatmul.mubr.f32.gmra.mrb[0].mxu0 %v1694
    %v1768 = vpop.f32.mrb[0].mxu0
    %v1769 = vadd.f32 0.0, %v1768
    %v1770 = vpop.f32.mrb[0].mxu0
    %1771 = vmatprep.mubr.f32.mxu0 0.0
    %1772 = vmatmul.mubr.f32.gmra.mrb[0].mxu0 %v1696
    %v1773 = vpop.f32.mrb[0].mxu0
    %v1774 = vadd.f32 0.0, %v1773
    %v1775 = vpop.f32.mrb[0].mxu0
    %1776 = vdwg.mxu0
    %v1777 = vsel %vm250, %v1509, 0
    %v1779 = vsel %vm250, %v1511, 0
    %1781 = vmatprep.subr.mxu0 0.0
    %1782 = vmatpush1.xpose.msra.mxu0 %v1698
    %1783 = vmatprep.subr.mxu0 0.0
    %1784 = vmatpush1.xpose.msra.mxu0 %v1700
    %1785 = vmatprep.subr.mxu0 0.0
    %1786 = vmatpush1.xpose.msra.mxu0 0.0
    %1787 = vmatprep.subr.mxu0 0.0
    %1788 = vmatpush1.xpose.msra.mxu0 0.0
    %1789 = vmatprep.subr.mxu0 0.0
    %1790 = vmatpush1.xpose.msra.mxu0 0.0
    %1791 = vmatprep.subr.mxu0 0.0
    %1792 = vmatpush1.xpose.msra.mxu0 0.0
    %1793 = vmatprep.subr.mxu0 0.0
    %1794 = vmatpush1.xpose.msra.mxu0 0.0
    %1795 = vmatprep.subr.mxu0 0.0
    %1796 = vmatpush1.xpose.msra.mxu0 0.0
    %1797 = vmatprep.subr.mxu0 0.0
    %1798 = vmatpush1.xpose.msra.mxu0 0.0
    %1799 = vmatprep.subr.mxu0 0.0
    %1800 = vmatpush1.xpose.msra.mxu0 0.0
    %1801 = vmatprep.subr.mxu0 0.0
    %1802 = vmatpush1.xpose.msra.mxu0 0.0
    %1803 = vmatprep.subr.mxu0 0.0
    %1804 = vmatpush1.xpose.msra.mxu0 0.0
    %1805 = vmatprep.subr.mxu0 0.0
    %1806 = vmatpush1.xpose.msra.mxu0 0.0
    %1807 = vmatprep.subr.mxu0 0.0
    %1808 = vmatpush1.xpose.msra.mxu0 0.0
    %1809 = vmatprep.subr.mxu0 0.0
    %1810 = vmatpush1.xpose.msra.mxu0 0.0
    %1811 = vmatprep.subr.mxu0 0.0
    %1812 = vmatpush1.xpose.msra.mxu0 0.0
    %1813 = vmatprep.subr.mxu0 0.0
    %1814 = vmatpush1.xpose.msra.mxu0 0.0
    %1815 = vmatprep.subr.mxu0 0.0
    %1816 = vmatpush1.xpose.msra.mxu0 0.0
    %1817 = vmatprep.subr.mxu0 0.0
    %1818 = vmatpush1.xpose.msra.mxu0 0.0
    %1819 = vmatprep.subr.mxu0 0.0
    %1820 = vmatpush1.xpose.msra.mxu0 0.0
    %1821 = vmatprep.subr.mxu0 0.0
    %1822 = vmatpush1.xpose.msra.mxu0 0.0
    %1823 = vmatprep.subr.mxu0 0.0
    %1824 = vmatpush1.xpose.msra.mxu0 0.0
    %1825 = vmatprep.subr.mxu0 0.0
    %1826 = vmatpush1.xpose.msra.mxu0 0.0
    %1827 = vmatprep.subr.mxu0 0.0
    %1828 = vmatpush1.xpose.msra.mxu0 0.0
    %1829 = vmatprep.subr.mxu0 0.0
    %1830 = vmatpush1.xpose.msra.mxu0 0.0
    %1831 = vmatprep.subr.mxu0 0.0
    %1832 = vmatpush1.xpose.msra.mxu0 0.0
    %1833 = vmatprep.subr.mxu0 0.0
    %1834 = vmatpush1.xpose.msra.mxu0 0.0
    %1835 = vmatprep.subr.mxu0 0.0
    %1836 = vmatpush1.xpose.msra.mxu0 0.0
    %1837 = vmatprep.subr.mxu0 0.0
    %1838 = vmatpush1.xpose.msra.mxu0 0.0
    %1839 = vmatprep.subr.mxu0 0.0
    %1840 = vmatpush1.xpose.msra.mxu0 0.0
    %1841 = vmatprep.subr.mxu0 0.0
    %1842 = vmatpush1.xpose.msra.mxu0 0.0
    %1843 = vmatprep.subr.mxu0 0.0
    %1844 = vmatpush1.xpose.msra.mxu0 0.0
    %1845 = vmatprep.mubr.f32.mxu0 0.0
    %1846 = vmatmul.mubr.f32.gmra.mrb[0].mxu0 %v1777
    %v1847 = vpop.f32.mrb[0].mxu0
    %v1848 = vadd.f32 0.0, %v1847
    %v1849 = vpop.f32.mrb[0].mxu0
    %1850 = vmatprep.mubr.f32.mxu0 0.0
    %1851 = vmatmul.mubr.f32.gmra.mrb[0].mxu0 %v1779
    %v1852 = vpop.f32.mrb[0].mxu0
    %v1853 = vadd.f32 0.0, %v1852
    %v1854 = vpop.f32.mrb[0].mxu0
    %1855 = vdwg.mxu0
    %v1856 = vmul.f32 %v1603, 0.35355338
    %v1857 = vmul.f32 %v1608, 0.35355338
    %v1858 = vmul.f32 %v1682, 0.35355338
    %v1859 = vmul.f32 %v1687, 0.35355338
    %v1860 = vmul.f32 %v1769, 0.35355338
    %v1861 = vmul.f32 %v1774, 0.35355338
    %v1862 = vmul.f32 %v1848, 0.35355338
    %v1863 = vmul.f32 %v1853, 0.35355338
    %v1864 = vadd.f32 %v1856, %v60
    %v1865 = vadd.f32 %v1857, %v61
    %v1866 = vadd.f32 %v1858, %v60
    %v1867 = vadd.f32 %v1859, %v61
    %v1868 = vadd.f32 %v1860, %v60
    %v1869 = vadd.f32 %v1861, %v61
    %v1870 = vadd.f32 %v1862, %v60
    %v1871 = vadd.f32 %v1863, %v61
    %v1872 = vsel %vm595, %v1864, -inf
    %1873 = vmax.xlane.f32.xlu0 %v1872
    %v1874 = vpop.xlane.xlu0 %1873
    %v1875 = vsel %vm595, %v1865, -inf
    %1876 = vmax.xlane.f32.xlu0 %v1875
    %v1877 = vpop.xlane.xlu0 %1876
    %v1878 = vsel %vm595, %v1866, -inf
    %1879 = vmax.xlane.f32.xlu0 %v1878
    %v1880 = vpop.xlane.xlu0 %1879
    %v1881 = vsel %vm595, %v1867, -inf
    %1882 = vmax.xlane.f32.xlu0 %v1881
    %v1883 = vpop.xlane.xlu0 %1882
    %v1884 = vsel %vm595, %v1868, -inf
    %1885 = vmax.xlane.f32.xlu0 %v1884
    %v1886 = vpop.xlane.xlu0 %1885
    %v1887 = vsel %vm595, %v1869, -inf
    %1888 = vmax.xlane.f32.xlu0 %v1887
    %v1889 = vpop.xlane.xlu0 %1888
    %v1890 = vsel %vm595, %v1870, -inf
    %1891 = vmax.xlane.f32.xlu0 %v1890
    %v1892 = vpop.xlane.xlu0 %1891
    %v1893 = vsel %vm595, %v1871, -inf
    %1894 = vmax.xlane.f32.xlu0 %v1893
    %v1895 = vpop.xlane.xlu0 %1894
    %v1896 = vsub.f32 %v1864, %v1874
    %v1897 = vsub.f32 %v1865, %v1877
    %v1898 = vsub.f32 %v1866, %v1880
    %v1899 = vsub.f32 %v1867, %v1883
    %v1900 = vsub.f32 %v1868, %v1886
    %v1901 = vsub.f32 %v1869, %v1889
    %v1902 = vsub.f32 %v1870, %v1892
    %v1903 = vsub.f32 %v1871, %v1895
    %v1904 = vmul.f32 %v1896, 1.442695
    %v1905 = vpow.pop %v1904
    %v1906 = vmul.f32 %v1897, 1.442695
    %v1907 = vpow.pop %v1906
    %v1908 = vmul.f32 %v1898, 1.442695
    %v1909 = vpow.pop %v1908
    %v1910 = vmul.f32 %v1899, 1.442695
    %v1911 = vpow.pop %v1910
    %v1912 = vmul.f32 %v1900, 1.442695
    %v1913 = vpow.pop %v1912
    %v1914 = vmul.f32 %v1901, 1.442695
    %v1915 = vpow.pop %v1914
    %v1916 = vmul.f32 %v1902, 1.442695
    %v1917 = vpow.pop %v1916
    %v1918 = vmul.f32 %v1903, 1.442695
    %v1919 = vpow.pop %v1918
    %v1920 = vsel %vm595, %v1905, 0.0
    %1921 = vadd.xlane.f32.xlu0 %v1920
    %v1922 = vpop.xlane.xlu0 %1921
    %v1923 = vsel %vm595, %v1907, 0.0
    %1924 = vadd.xlane.f32.xlu0 %v1923
    %v1925 = vpop.xlane.xlu0 %1924
    %v1926 = vsel %vm595, %v1909, 0.0
    %1927 = vadd.xlane.f32.xlu0 %v1926
    %v1928 = vpop.xlane.xlu0 %1927
    %v1929 = vsel %vm595, %v1911, 0.0
    %1930 = vadd.xlane.f32.xlu0 %v1929
    %v1931 = vpop.xlane.xlu0 %1930
    %v1932 = vsel %vm595, %v1913, 0.0
    %1933 = vadd.xlane.f32.xlu0 %v1932
    %v1934 = vpop.xlane.xlu0 %1933
    %v1935 = vsel %vm595, %v1915, 0.0
    %1936 = vadd.xlane.f32.xlu0 %v1935
    %v1937 = vpop.xlane.xlu0 %1936
    %v1938 = vsel %vm595, %v1917, 0.0
    %1939 = vadd.xlane.f32.xlu0 %v1938
    %v1940 = vpop.xlane.xlu0 %1939
    %v1941 = vsel %vm595, %v1919, 0.0
    %1942 = vadd.xlane.f32.xlu0 %v1941
    %v1943 = vpop.xlane.xlu0 %1942
    %v1944 = vrcp.pop %v1922
    %v1945 = vrcp.pop %v1925
    %v1946 = vrcp.pop %v1928
    %v1947 = vrcp.pop %v1931
    %v1948 = vrcp.pop %v1934
    %v1949 = vrcp.pop %v1937
    %v1950 = vrcp.pop %v1940
    %v1951 = vrcp.pop %v1943
    %v1952 = vmul.f32 %v1905, %v1944
    %v1953 = vmul.f32 %v1907, %v1945
    %v1954 = vmul.f32 %v1909, %v1946
    %v1955 = vmul.f32 %v1911, %v1947
    %v1956 = vmul.f32 %v1913, %v1948
    %v1957 = vmul.f32 %v1915, %v1949
    %v1958 = vmul.f32 %v1917, %v1950
    %v1959 = vmul.f32 %v1919, %v1951
    %1960 = vrot.lane.b32.xlu0 %v1464, 32
    %v1961 = vpop.permute.xlu0 %1960
    %1962 = vrot.lane.b32.xlu0 %v1469, 32
    %v1963 = vpop.permute.xlu0 %1962
    %v1967 = vsel %vm595, %v1952, 0
    %v1970 = vsel %vm595, %v1953, 0
    %1972 = vmatprep.subr.mxu0 0.0
    %1973 = vmatpush1.msra.mxu0 %v1961
    %1974 = vmatprep.subr.mxu0 0.0
    %1975 = vmatpush1.msra.mxu0 %v1963
    %1976 = vmatprep.subr.mxu0 0.0
    %1977 = vmatpush1.msra.mxu0 0.0
    %1978 = vmatprep.subr.mxu0 0.0
    %1979 = vmatpush1.msra.mxu0 0.0
    %1980 = vmatprep.subr.mxu0 0.0
    %1981 = vmatpush1.msra.mxu0 0.0
    %1982 = vmatprep.subr.mxu0 0.0
    %1983 = vmatpush1.msra.mxu0 0.0
    %1984 = vmatprep.subr.mxu0 0.0
    %1985 = vmatpush1.msra.mxu0 0.0
    %1986 = vmatprep.subr.mxu0 0.0
    %1987 = vmatpush1.msra.mxu0 0.0
    %1988 = vmatprep.subr.mxu0 0.0
    %1989 = vmatpush1.msra.mxu0 0.0
    %1990 = vmatprep.subr.mxu0 0.0
    %1991 = vmatpush1.msra.mxu0 0.0
    %1992 = vmatprep.subr.mxu0 0.0
    %1993 = vmatpush1.msra.mxu0 0.0
    %1994 = vmatprep.subr.mxu0 0.0
    %1995 = vmatpush1.msra.mxu0 0.0
    %1996 = vmatprep.subr.mxu0 0.0
    %1997 = vmatpush1.msra.mxu0 0.0
    %1998 = vmatprep.subr.mxu0 0.0
    %1999 = vmatpush1.msra.mxu0 0.0
    %2000 = vmatprep.subr.mxu0 0.0
    %2001 = vmatpush1.msra.mxu0 0.0
    %2002 = vmatprep.subr.mxu0 0.0
    %2003 = vmatpush1.msra.mxu0 0.0
    %2004 = vmatprep.subr.mxu0 0.0
    %2005 = vmatpush1.msra.mxu0 0.0
    %2006 = vmatprep.subr.mxu0 0.0
    %2007 = vmatpush1.msra.mxu0 0.0
    %2008 = vmatprep.subr.mxu0 0.0
    %2009 = vmatpush1.msra.mxu0 0.0
    %2010 = vmatprep.subr.mxu0 0.0
    %2011 = vmatpush1.msra.mxu0 0.0
    %2012 = vmatprep.subr.mxu0 0.0
    %2013 = vmatpush1.msra.mxu0 0.0
    %2014 = vmatprep.subr.mxu0 0.0
    %2015 = vmatpush1.msra.mxu0 0.0
    %2016 = vmatprep.subr.mxu0 0.0
    %2017 = vmatpush1.msra.mxu0 0.0
    %2018 = vmatprep.subr.mxu0 0.0
    %2019 = vmatpush1.msra.mxu0 0.0
    %2020 = vmatprep.subr.mxu0 0.0
    %2021 = vmatpush1.msra.mxu0 0.0
    %2022 = vmatprep.subr.mxu0 0.0
    %2023 = vmatpush1.msra.mxu0 0.0
    %2024 = vmatprep.subr.mxu0 0.0
    %2025 = vmatpush1.msra.mxu0 0.0
    %2026 = vmatprep.subr.mxu0 0.0
    %2027 = vmatpush1.msra.mxu0 0.0
    %2028 = vmatprep.subr.mxu0 0.0
    %2029 = vmatpush1.msra.mxu0 0.0
    %2030 = vmatprep.subr.mxu0 0.0
    %2031 = vmatpush1.msra.mxu0 0.0
    %2032 = vmatprep.subr.mxu0 0.0
    %2033 = vmatpush1.msra.mxu0 0.0
    %2034 = vmatprep.subr.mxu0 0.0
    %2035 = vmatpush1.msra.mxu0 0.0
    %2036 = vmatprep.mubr.f32.mxu0 0.0
    %2037 = vmatmul.mubr.f32.gmra.mrb[0].mxu0 %v1967
    %v2038 = vpop.f32.mrb[0].mxu0
    %v2039 = vadd.f32 0.0, %v2038
    %v2040 = vpop.f32.mrb[0].mxu0
    %2041 = vmatprep.mubr.f32.mxu0 0.0
    %2042 = vmatmul.mubr.f32.gmra.mrb[0].mxu0 %v1970
    %v2043 = vpop.f32.mrb[0].mxu0
    %v2044 = vadd.f32 0.0, %v2043
    %v2045 = vpop.f32.mrb[0].mxu0
    %2046 = vdwg.mxu0
    %v2048 = vsel %vm595, %v1954, 0
    %v2051 = vsel %vm595, %v1955, 0
    %2053 = vmatprep.subr.mxu0 0.0
    %2054 = vmatpush1.msra.mxu0 %v1961
    %2055 = vmatprep.subr.mxu0 0.0
    %2056 = vmatpush1.msra.mxu0 %v1963
    %2057 = vmatprep.subr.mxu0 0.0
    %2058 = vmatpush1.msra.mxu0 0.0
    %2059 = vmatprep.subr.mxu0 0.0
    %2060 = vmatpush1.msra.mxu0 0.0
    %2061 = vmatprep.subr.mxu0 0.0
    %2062 = vmatpush1.msra.mxu0 0.0
    %2063 = vmatprep.subr.mxu0 0.0
    %2064 = vmatpush1.msra.mxu0 0.0
    %2065 = vmatprep.subr.mxu0 0.0
    %2066 = vmatpush1.msra.mxu0 0.0
    %2067 = vmatprep.subr.mxu0 0.0
    %2068 = vmatpush1.msra.mxu0 0.0
    %2069 = vmatprep.subr.mxu0 0.0
    %2070 = vmatpush1.msra.mxu0 0.0
    %2071 = vmatprep.subr.mxu0 0.0
    %2072 = vmatpush1.msra.mxu0 0.0
    %2073 = vmatprep.subr.mxu0 0.0
    %2074 = vmatpush1.msra.mxu0 0.0
    %2075 = vmatprep.subr.mxu0 0.0
    %2076 = vmatpush1.msra.mxu0 0.0
    %2077 = vmatprep.subr.mxu0 0.0
    %2078 = vmatpush1.msra.mxu0 0.0
    %2079 = vmatprep.subr.mxu0 0.0
    %2080 = vmatpush1.msra.mxu0 0.0
    %2081 = vmatprep.subr.mxu0 0.0
    %2082 = vmatpush1.msra.mxu0 0.0
    %2083 = vmatprep.subr.mxu0 0.0
    %2084 = vmatpush1.msra.mxu0 0.0
    %2085 = vmatprep.subr.mxu0 0.0
    %2086 = vmatpush1.msra.mxu0 0.0
    %2087 = vmatprep.subr.mxu0 0.0
    %2088 = vmatpush1.msra.mxu0 0.0
    %2089 = vmatprep.subr.mxu0 0.0
    %2090 = vmatpush1.msra.mxu0 0.0
    %2091 = vmatprep.subr.mxu0 0.0
    %2092 = vmatpush1.msra.mxu0 0.0
    %2093 = vmatprep.subr.mxu0 0.0
    %2094 = vmatpush1.msra.mxu0 0.0
    %2095 = vmatprep.subr.mxu0 0.0
    %2096 = vmatpush1.msra.mxu0 0.0
    %2097 = vmatprep.subr.mxu0 0.0
    %2098 = vmatpush1.msra.mxu0 0.0
    %2099 = vmatprep.subr.mxu0 0.0
    %2100 = vmatpush1.msra.mxu0 0.0
    %2101 = vmatprep.subr.mxu0 0.0
    %2102 = vmatpush1.msra.mxu0 0.0
    %2103 = vmatprep.subr.mxu0 0.0
    %2104 = vmatpush1.msra.mxu0 0.0
    %2105 = vmatprep.subr.mxu0 0.0
    %2106 = vmatpush1.msra.mxu0 0.0
    %2107 = vmatprep.subr.mxu0 0.0
    %2108 = vmatpush1.msra.mxu0 0.0
    %2109 = vmatprep.subr.mxu0 0.0
    %2110 = vmatpush1.msra.mxu0 0.0
    %2111 = vmatprep.subr.mxu0 0.0
    %2112 = vmatpush1.msra.mxu0 0.0
    %2113 = vmatprep.subr.mxu0 0.0
    %2114 = vmatpush1.msra.mxu0 0.0
    %2115 = vmatprep.subr.mxu0 0.0
    %2116 = vmatpush1.msra.mxu0 0.0
    %2117 = vmatprep.mubr.f32.mxu0 0.0
    %2118 = vmatmul.mubr.f32.gmra.mrb[0].mxu0 %v2048
    %v2119 = vpop.f32.mrb[0].mxu0
    %v2120 = vadd.f32 0.0, %v2119
    %v2121 = vpop.f32.mrb[0].mxu0
    %2122 = vmatprep.mubr.f32.mxu0 0.0
    %2123 = vmatmul.mubr.f32.gmra.mrb[0].mxu0 %v2051
    %v2124 = vpop.f32.mrb[0].mxu0
    %v2125 = vadd.f32 0.0, %v2124
    %v2126 = vpop.f32.mrb[0].mxu0
    %2127 = vdwg.mxu0
    %2128 = vrot.lane.b32.xlu0 %v1521, 32
    %v2129 = vpop.permute.xlu0 %2128
    %2130 = vrot.lane.b32.xlu0 %v1523, 32
    %v2131 = vpop.permute.xlu0 %2130
    %v2135 = vsel %vm595, %v1956, 0
    %v2138 = vsel %vm595, %v1957, 0
    %2140 = vmatprep.subr.mxu0 0.0
    %2141 = vmatpush1.msra.mxu0 %v2129
    %2142 = vmatprep.subr.mxu0 0.0
    %2143 = vmatpush1.msra.mxu0 %v2131
    %2144 = vmatprep.subr.mxu0 0.0
    %2145 = vmatpush1.msra.mxu0 0.0
    %2146 = vmatprep.subr.mxu0 0.0
    %2147 = vmatpush1.msra.mxu0 0.0
    %2148 = vmatprep.subr.mxu0 0.0
    %2149 = vmatpush1.msra.mxu0 0.0
    %2150 = vmatprep.subr.mxu0 0.0
    %2151 = vmatpush1.msra.mxu0 0.0
    %2152 = vmatprep.subr.mxu0 0.0
    %2153 = vmatpush1.msra.mxu0 0.0
    %2154 = vmatprep.subr.mxu0 0.0
    %2155 = vmatpush1.msra.mxu0 0.0
    %2156 = vmatprep.subr.mxu0 0.0
    %2157 = vmatpush1.msra.mxu0 0.0
    %2158 = vmatprep.subr.mxu0 0.0
    %2159 = vmatpush1.msra.mxu0 0.0
    %2160 = vmatprep.subr.mxu0 0.0
    %2161 = vmatpush1.msra.mxu0 0.0
    %2162 = vmatprep.subr.mxu0 0.0
    %2163 = vmatpush1.msra.mxu0 0.0
    %2164 = vmatprep.subr.mxu0 0.0
    %2165 = vmatpush1.msra.mxu0 0.0
    %2166 = vmatprep.subr.mxu0 0.0
    %2167 = vmatpush1.msra.mxu0 0.0
    %2168 = vmatprep.subr.mxu0 0.0
    %2169 = vmatpush1.msra.mxu0 0.0
    %2170 = vmatprep.subr.mxu0 0.0
    %2171 = vmatpush1.msra.mxu0 0.0
    %2172 = vmatprep.subr.mxu0 0.0
    %2173 = vmatpush1.msra.mxu0 0.0
    %2174 = vmatprep.subr.mxu0 0.0
    %2175 = vmatpush1.msra.mxu0 0.0
    %2176 = vmatprep.subr.mxu0 0.0
    %2177 = vmatpush1.msra.mxu0 0.0
    %2178 = vmatprep.subr.mxu0 0.0
    %2179 = vmatpush1.msra.mxu0 0.0
    %2180 = vmatprep.subr.mxu0 0.0
    %2181 = vmatpush1.msra.mxu0 0.0
    %2182 = vmatprep.subr.mxu0 0.0
    %2183 = vmatpush1.msra.mxu0 0.0
    %2184 = vmatprep.subr.mxu0 0.0
    %2185 = vmatpush1.msra.mxu0 0.0
    %2186 = vmatprep.subr.mxu0 0.0
    %2187 = vmatpush1.msra.mxu0 0.0
    %2188 = vmatprep.subr.mxu0 0.0
    %2189 = vmatpush1.msra.mxu0 0.0
    %2190 = vmatprep.subr.mxu0 0.0
    %2191 = vmatpush1.msra.mxu0 0.0
    %2192 = vmatprep.subr.mxu0 0.0
    %2193 = vmatpush1.msra.mxu0 0.0
    %2194 = vmatprep.subr.mxu0 0.0
    %2195 = vmatpush1.msra.mxu0 0.0
    %2196 = vmatprep.subr.mxu0 0.0
    %2197 = vmatpush1.msra.mxu0 0.0
    %2198 = vmatprep.subr.mxu0 0.0
    %2199 = vmatpush1.msra.mxu0 0.0
    %2200 = vmatprep.subr.mxu0 0.0
    %2201 = vmatpush1.msra.mxu0 0.0
    %2202 = vmatprep.subr.mxu0 0.0
    %2203 = vmatpush1.msra.mxu0 0.0
    %2204 = vmatprep.mubr.f32.mxu0 0.0
    %2205 = vmatmul.mubr.f32.gmra.mrb[0].mxu0 %v2135
    %v2206 = vpop.f32.mrb[0].mxu0
    %v2207 = vadd.f32 0.0, %v2206
    %v2208 = vpop.f32.mrb[0].mxu0
    %2209 = vmatprep.mubr.f32.mxu0 0.0
    %2210 = vmatmul.mubr.f32.gmra.mrb[0].mxu0 %v2138
    %v2211 = vpop.f32.mrb[0].mxu0
    %v2212 = vadd.f32 0.0, %v2211
    %v2213 = vpop.f32.mrb[0].mxu0
    %2214 = vdwg.mxu0
    %v2216 = vsel %vm595, %v1958, 0
    %v2219 = vsel %vm595, %v1959, 0
    %2221 = vmatprep.subr.mxu0 0.0
    %2222 = vmatpush1.msra.mxu0 %v2129
    %2223 = vmatprep.subr.mxu0 0.0
    %2224 = vmatpush1.msra.mxu0 %v2131
    %2225 = vmatprep.subr.mxu0 0.0
    %2226 = vmatpush1.msra.mxu0 0.0
    %2227 = vmatprep.subr.mxu0 0.0
    %2228 = vmatpush1.msra.mxu0 0.0
    %2229 = vmatprep.subr.mxu0 0.0
    %2230 = vmatpush1.msra.mxu0 0.0
    %2231 = vmatprep.subr.mxu0 0.0
    %2232 = vmatpush1.msra.mxu0 0.0
    %2233 = vmatprep.subr.mxu0 0.0
    %2234 = vmatpush1.msra.mxu0 0.0
    %2235 = vmatprep.subr.mxu0 0.0
    %2236 = vmatpush1.msra.mxu0 0.0
    %2237 = vmatprep.subr.mxu0 0.0
    %2238 = vmatpush1.msra.mxu0 0.0
    %2239 = vmatprep.subr.mxu0 0.0
    %2240 = vmatpush1.msra.mxu0 0.0
    %2241 = vmatprep.subr.mxu0 0.0
    %2242 = vmatpush1.msra.mxu0 0.0
    %2243 = vmatprep.subr.mxu0 0.0
    %2244 = vmatpush1.msra.mxu0 0.0
    %2245 = vmatprep.subr.mxu0 0.0
    %2246 = vmatpush1.msra.mxu0 0.0
    %2247 = vmatprep.subr.mxu0 0.0
    %2248 = vmatpush1.msra.mxu0 0.0
    %2249 = vmatprep.subr.mxu0 0.0
    %2250 = vmatpush1.msra.mxu0 0.0
    %2251 = vmatprep.subr.mxu0 0.0
    %2252 = vmatpush1.msra.mxu0 0.0
    %2253 = vmatprep.subr.mxu0 0.0
    %2254 = vmatpush1.msra.mxu0 0.0
    %2255 = vmatprep.subr.mxu0 0.0
    %2256 = vmatpush1.msra.mxu0 0.0
    %2257 = vmatprep.subr.mxu0 0.0
    %2258 = vmatpush1.msra.mxu0 0.0
    %2259 = vmatprep.subr.mxu0 0.0
    %2260 = vmatpush1.msra.mxu0 0.0
    %2261 = vmatprep.subr.mxu0 0.0
    %2262 = vmatpush1.msra.mxu0 0.0
    %2263 = vmatprep.subr.mxu0 0.0
    %2264 = vmatpush1.msra.mxu0 0.0
    %2265 = vmatprep.subr.mxu0 0.0
    %2266 = vmatpush1.msra.mxu0 0.0
    %2267 = vmatprep.subr.mxu0 0.0
    %2268 = vmatpush1.msra.mxu0 0.0
    %2269 = vmatprep.subr.mxu0 0.0
    %2270 = vmatpush1.msra.mxu0 0.0
    %2271 = vmatprep.subr.mxu0 0.0
    %2272 = vmatpush1.msra.mxu0 0.0
    %2273 = vmatprep.subr.mxu0 0.0
    %2274 = vmatpush1.msra.mxu0 0.0
    %2275 = vmatprep.subr.mxu0 0.0
    %2276 = vmatpush1.msra.mxu0 0.0
    %2277 = vmatprep.subr.mxu0 0.0
    %2278 = vmatpush1.msra.mxu0 0.0
    %2279 = vmatprep.subr.mxu0 0.0
    %2280 = vmatpush1.msra.mxu0 0.0
    %2281 = vmatprep.subr.mxu0 0.0
    %2282 = vmatpush1.msra.mxu0 0.0
    %2283 = vmatprep.subr.mxu0 0.0
    %2284 = vmatpush1.msra.mxu0 0.0
    %2285 = vmatprep.mubr.f32.mxu0 0.0
    %2286 = vmatmul.mubr.f32.gmra.mrb[0].mxu0 %v2216
    %v2287 = vpop.f32.mrb[0].mxu0
    %v2288 = vadd.f32 0.0, %v2287
    %v2289 = vpop.f32.mrb[0].mxu0
    %2290 = vmatprep.mubr.f32.mxu0 0.0
    %2291 = vmatmul.mubr.f32.gmra.mrb[0].mxu0 %v2219
    %v2292 = vpop.f32.mrb[0].mxu0
    %v2293 = vadd.f32 0.0, %v2292
    %v2294 = vpop.f32.mrb[0].mxu0
    %2295 = vdwg.mxu0
    %2298 = vrot.lane.b32.xlu0 %v2120, 8
    %v2299 = vpop.permute.xlu0 %2298
    %2300 = vrot.lane.b32.xlu0 %v2125, 8
    %v2301 = vpop.permute.xlu0 %2300
    %2306 = vrot.lane.b32.xlu0 %v2207, 16
    %v2307 = vpop.permute.xlu0 %2306
    %2308 = vrot.lane.b32.xlu0 %v2212, 16
    %v2309 = vpop.permute.xlu0 %2308
    %2314 = vrot.lane.b32.xlu0 %v2288, 24
    %v2315 = vpop.permute.xlu0 %2314
    %2316 = vrot.lane.b32.xlu0 %v2293, 24
    %v2317 = vpop.permute.xlu0 %2316
    %v2320 = vsel %vm250, %v2039, %v2299
    %v2321 = vsel %vm250, %v2044, %v2301
    %v2322 = vsel %vm595, %v2320, %v2307
    %v2323 = vsel %vm595, %v2321, %v2309
    %v2324 = vsel %vm1048, %v2322, %v2315
    %v2325 = vsel %vm1048, %v2323, %v2317
    %s2326 = scalar_lea.vmem %s3, 32
    %v2327 = vld [vmem:[%s2326] sm:$0xff]
    %v2328 = vld [vmem:[%s2326 + $0x8] sm:$0xff]
    %v2329 = vld [vmem:[%s2326 + $0x10] sm:$0xff]
    %v2330 = vld [vmem:[%s2326 + $0x18] sm:$0xff]
    %v2332 = vsel %vm65, %v2324, 0
    %v2335 = vsel %vm65, %v2325, 0
    %2337 = vmatprep.subr.mxu0 0.0
    %2338 = vmatpush1.msra.mxu0 %v2327
    %2339 = vmatprep.subr.mxu0 0.0
    %2340 = vmatpush1.msra.mxu0 %v2328
    %2341 = vmatprep.subr.mxu0 0.0
    %2342 = vmatpush1.msra.mxu0 %v2329
    %2343 = vmatprep.subr.mxu0 0.0
    %2344 = vmatpush1.msra.mxu0 %v2330
    %2345 = vmatprep.subr.mxu0 0.0
    %2346 = vmatpush1.msra.mxu0 0.0
    %2347 = vmatprep.subr.mxu0 0.0
    %2348 = vmatpush1.msra.mxu0 0.0
    %2349 = vmatprep.subr.mxu0 0.0
    %2350 = vmatpush1.msra.mxu0 0.0
    %2351 = vmatprep.subr.mxu0 0.0
    %2352 = vmatpush1.msra.mxu0 0.0
    %2353 = vmatprep.subr.mxu0 0.0
    %2354 = vmatpush1.msra.mxu0 0.0
    %2355 = vmatprep.subr.mxu0 0.0
    %2356 = vmatpush1.msra.mxu0 0.0
    %2357 = vmatprep.subr.mxu0 0.0
    %2358 = vmatpush1.msra.mxu0 0.0
    %2359 = vmatprep.subr.mxu0 0.0
    %2360 = vmatpush1.msra.mxu0 0.0
    %2361 = vmatprep.subr.mxu0 0.0
    %2362 = vmatpush1.msra.mxu0 0.0
    %2363 = vmatprep.subr.mxu0 0.0
    %2364 = vmatpush1.msra.mxu0 0.0
    %2365 = vmatprep.subr.mxu0 0.0
    %2366 = vmatpush1.msra.mxu0 0.0
    %2367 = vmatprep.subr.mxu0 0.0
    %2368 = vmatpush1.msra.mxu0 0.0
    %2369 = vmatprep.subr.mxu0 0.0
    %2370 = vmatpush1.msra.mxu0 0.0
    %2371 = vmatprep.subr.mxu0 0.0
    %2372 = vmatpush1.msra.mxu0 0.0
    %2373 = vmatprep.subr.mxu0 0.0
    %2374 = vmatpush1.msra.mxu0 0.0
    %2375 = vmatprep.subr.mxu0 0.0
    %2376 = vmatpush1.msra.mxu0 0.0
    %2377 = vmatprep.subr.mxu0 0.0
    %2378 = vmatpush1.msra.mxu0 0.0
    %2379 = vmatprep.subr.mxu0 0.0
    %2380 = vmatpush1.msra.mxu0 0.0
    %2381 = vmatprep.subr.mxu0 0.0
    %2382 = vmatpush1.msra.mxu0 0.0
    %2383 = vmatprep.subr.mxu0 0.0
    %2384 = vmatpush1.msra.mxu0 0.0
    %2385 = vmatprep.subr.mxu0 0.0
    %2386 = vmatpush1.msra.mxu0 0.0
    %2387 = vmatprep.subr.mxu0 0.0
    %2388 = vmatpush1.msra.mxu0 0.0
    %2389 = vmatprep.subr.mxu0 0.0
    %2390 = vmatpush1.msra.mxu0 0.0
    %2391 = vmatprep.subr.mxu0 0.0
    %2392 = vmatpush1.msra.mxu0 0.0
    %2393 = vmatprep.subr.mxu0 0.0
    %2394 = vmatpush1.msra.mxu0 0.0
    %2395 = vmatprep.subr.mxu0 0.0
    %2396 = vmatpush1.msra.mxu0 0.0
    %2397 = vmatprep.subr.mxu0 0.0
    %2398 = vmatpush1.msra.mxu0 0.0
    %2399 = vmatprep.subr.mxu0 0.0
    %2400 = vmatpush1.msra.mxu0 0.0
    %2401 = vmatprep.mubr.f32.mxu0 0.0
    %2402 = vmatmul.mubr.f32.gmra.mrb[0].mxu0 %v2332
    %v2403 = vpop.f32.mrb[0].mxu0
    %v2404 = vadd.f32 0.0, %v2403
    %v2405 = vpop.f32.mrb[0].mxu0
    %2406 = vmatprep.mubr.f32.mxu0 0.0
    %2407 = vmatmul.mubr.f32.gmra.mrb[0].mxu0 %v2335
    %v2408 = vpop.f32.mrb[0].mxu0
    %v2409 = vadd.f32 0.0, %v2408
    %v2410 = vpop.f32.mrb[0].mxu0
    %2411 = vdwg.mxu0
    %v2412 = vadd.f32 %v1358, %v2404
    %v2413 = vadd.f32 %v1359, %v2409
    %s2414 = scalar_lea.vmem %s4, 1
    %v2415 = vld [vmem:[%s2414] sm:$0x1]
    %v2416 = vmul.f32 %v2412, %v2412
    %v2417 = vmul.f32 %v2413, %v2413
    %v2418 = vsel %vm65, %v2416, 0.0
    %2419 = vadd.xlane.f32.xlu0 %v2418
    %v2420 = vpop.xlane.xlu0 %2419
    %v2421 = vsel %vm65, %v2417, 0.0
    %2422 = vadd.xlane.f32.xlu0 %v2421
    %v2423 = vpop.xlane.xlu0 %2422
    %v2424 = vmul.f32 %v2420, %v72
    %v2425 = vmul.f32 %v2423, %v72
    %v2426 = vadd.f32 %v2424, 1e-06
    %v2427 = vadd.f32 %v2425, 1e-06
    %v2428 = vrsqrt.pop %v2426
    %v2429 = vrsqrt.pop %v2427
    %v2430 = vmul.f32 %v2412, %v2428
    %v2431 = vmul.f32 %v2413, %v2429
    %v2433 = vlaneseq
    %v2434 = vshrl.u32 %v2433, 7
    %v2435 = vsub.s32 0, %v2434
    %v2436 = vrot.slane %v2415, %v2435
    %v2438 = vmul.f32 %v2430, %v2436
    %v2439 = vmul.f32 %v2431, %v2436
    %s2440 = scalar_lea.vmem %s5, 32
    %v2441 = vld [vmem:[%s2440] sm:$0xff]
    %v2442 = vld [vmem:[%s2440 + $0x8] sm:$0xff]
    %v2443 = vld [vmem:[%s2440 + $0x10] sm:$0xff]
    %v2444 = vld [vmem:[%s2440 + $0x18] sm:$0xff]
    %v2446 = vsel %vm65, %v2438, 0
    %v2449 = vsel %vm65, %v2439, 0
    %2451 = vmatprep.subr.mxu0 0.0
    %2452 = vmatpush1.msra.mxu0 %v2441
    %2453 = vmatprep.subr.mxu0 0.0
    %2454 = vmatpush1.msra.mxu0 %v2442
    %2455 = vmatprep.subr.mxu0 0.0
    %2456 = vmatpush1.msra.mxu0 %v2443
    %2457 = vmatprep.subr.mxu0 0.0
    %2458 = vmatpush1.msra.mxu0 %v2444
    %2459 = vmatprep.subr.mxu0 0.0
    %2460 = vmatpush1.msra.mxu0 0.0
    %2461 = vmatprep.subr.mxu0 0.0
    %2462 = vmatpush1.msra.mxu0 0.0
    %2463 = vmatprep.subr.mxu0 0.0
    %2464 = vmatpush1.msra.mxu0 0.0
    %2465 = vmatprep.subr.mxu0 0.0
    %2466 = vmatpush1.msra.mxu0 0.0
    %2467 = vmatprep.subr.mxu0 0.0
    %2468 = vmatpush1.msra.mxu0 0.0
    %2469 = vmatprep.subr.mxu0 0.0
    %2470 = vmatpush1.msra.mxu0 0.0
    %2471 = vmatprep.subr.mxu0 0.0
    %2472 = vmatpush1.msra.mxu0 0.0
    %2473 = vmatprep.subr.mxu0 0.0
    %2474 = vmatpush1.msra.mxu0 0.0
    %2475 = vmatprep.subr.mxu0 0.0
    %2476 = vmatpush1.msra.mxu0 0.0
    %2477 = vmatprep.subr.mxu0 0.0
    %2478 = vmatpush1.msra.mxu0 0.0
    %2479 = vmatprep.subr.mxu0 0.0
    %2480 = vmatpush1.msra.mxu0 0.0
    %2481 = vmatprep.subr.mxu0 0.0
    %2482 = vmatpush1.msra.mxu0 0.0
    %2483 = vmatprep.subr.mxu0 0.0
    %2484 = vmatpush1.msra.mxu0 0.0
    %2485 = vmatprep.subr.mxu0 0.0
    %2486 = vmatpush1.msra.mxu0 0.0
    %2487 = vmatprep.subr.mxu0 0.0
    %2488 = vmatpush1.msra.mxu0 0.0
    %2489 = vmatprep.subr.mxu0 0.0
    %2490 = vmatpush1.msra.mxu0 0.0
    %2491 = vmatprep.subr.mxu0 0.0
    %2492 = vmatpush1.msra.mxu0 0.0
    %2493 = vmatprep.subr.mxu0 0.0
    %2494 = vmatpush1.msra.mxu0 0.0
    %2495 = vmatprep.subr.mxu0 0.0
    %2496 = vmatpush1.msra.mxu0 0.0
    %2497 = vmatprep.subr.mxu0 0.0
    %2498 = vmatpush1.msra.mxu0 0.0
    %2499 = vmatprep.subr.mxu0 0.0
    %2500 = vmatpush1.msra.mxu0 0.0
    %2501 = vmatprep.subr.mxu0 0.0
    %2502 = vmatpush1.msra.mxu0 0.0
    %2503 = vmatprep.subr.mxu0 0.0
    %2504 = vmatpush1.msra.mxu0 0.0
    %2505 = vmatprep.subr.mxu0 0.0
    %2506 = vmatpush1.msra.mxu0 0.0
    %2507 = vmatprep.subr.mxu0 0.0
    %2508 = vmatpush1.msra.mxu0 0.0
    %2509 = vmatprep.subr.mxu0 0.0
    %2510 = vmatpush1.msra.mxu0 0.0
    %2511 = vmatprep.subr.mxu0 0.0
    %2512 = vmatpush1.msra.mxu0 0.0
    %2513 = vmatprep.subr.mxu0 0.0
    %2514 = vmatpush1.msra.mxu0 0.0
    %2515 = vmatprep.mubr.f32.mxu0 0.0
    %2516 = vmatmul.mubr.f32.gmra.mrb[0].mxu0 %v2446
    %v2517 = vpop.f32.mrb[0].mxu0
    %v2518 = vadd.f32 0.0, %v2517
    %v2519 = vpop.f32.mrb[0].mxu0
    %2520 = vmatprep.mubr.f32.mxu0 0.0
    %2521 = vmatmul.mubr.f32.gmra.mrb[0].mxu0 %v2449
    %v2522 = vpop.f32.mrb[0].mxu0
    %v2523 = vadd.f32 0.0, %v2522
    %v2524 = vpop.f32.mrb[0].mxu0
    %2525 = vdwg.mxu0
    %v2526 = vmul.f32 %v2518, 0.5
    %v2527 = vmul.f32 %v2523, 0.5
    %v2528 = vmul.f32 %v2518, 0.70710677
    %v2529 = vmul.f32 %v2523, 0.70710677
    %v2530 = verf.f32.pop %v2528
    %v2531 = verf.f32.pop %v2529
    %v2532 = vadd.f32 %v2530, 1.0
    %v2533 = vadd.f32 %v2531, 1.0
    %v2534 = vmul.f32 %v2526, %v2532
    %v2535 = vmul.f32 %v2527, %v2533
    %2538 = vrot.lane.b32.xlu0 %v2518, 64
    %v2539 = vpop.permute.xlu0 %2538
    %2540 = vrot.lane.b32.xlu0 %v2523, 64
    %v2541 = vpop.permute.xlu0 %2540
    %v2544 = vmul.f32 %v2534, %v2539
    %v2545 = vmul.f32 %v2535, %v2541
    %s2546 = scalar_lea.vmem %s6, 64
    %v2547 = vld [vmem:[%s2546] sm:$0xff]
    %v2548 = vld [vmem:[%s2546 + $0x8] sm:$0xff]
    %v2549 = vld [vmem:[%s2546 + $0x10] sm:$0xff]
    %v2550 = vld [vmem:[%s2546 + $0x18] sm:$0xff]
    %v2551 = vld [vmem:[%s2546 + $0x20] sm:$0xff]
    %v2552 = vld [vmem:[%s2546 + $0x28] sm:$0xff]
    %v2553 = vld [vmem:[%s2546 + $0x30] sm:$0xff]
    %v2554 = vld [vmem:[%s2546 + $0x38] sm:$0xff]
    %v2556 = vsel %vm1276, %v2544, 0
    %v2559 = vsel %vm1276, %v2545, 0
    %2561 = vmatprep.subr.mxu0 0.0
    %2562 = vmatpush1.msra.mxu0 %v2547
    %2563 = vmatprep.subr.mxu0 0.0
    %2564 = vmatpush1.msra.mxu0 %v2548
    %2565 = vmatprep.subr.mxu0 0.0
    %2566 = vmatpush1.msra.mxu0 %v2549
    %2567 = vmatprep.subr.mxu0 0.0
    %2568 = vmatpush1.msra.mxu0 %v2550
    %2569 = vmatprep.subr.mxu0 0.0
    %2570 = vmatpush1.msra.mxu0 %v2551
    %2571 = vmatprep.subr.mxu0 0.0
    %2572 = vmatpush1.msra.mxu0 %v2552
    %2573 = vmatprep.subr.mxu0 0.0
    %2574 = vmatpush1.msra.mxu0 %v2553
    %2575 = vmatprep.subr.mxu0 0.0
    %2576 = vmatpush1.msra.mxu0 %v2554
    %2577 = vmatprep.subr.mxu0 0.0
    %2578 = vmatpush1.msra.mxu0 0.0
    %2579 = vmatprep.subr.mxu0 0.0
    %2580 = vmatpush1.msra.mxu0 0.0
    %2581 = vmatprep.subr.mxu0 0.0
    %2582 = vmatpush1.msra.mxu0 0.0
    %2583 = vmatprep.subr.mxu0 0.0
    %2584 = vmatpush1.msra.mxu0 0.0
    %2585 = vmatprep.subr.mxu0 0.0
    %2586 = vmatpush1.msra.mxu0 0.0
    %2587 = vmatprep.subr.mxu0 0.0
    %2588 = vmatpush1.msra.mxu0 0.0
    %2589 = vmatprep.subr.mxu0 0.0
    %2590 = vmatpush1.msra.mxu0 0.0
    %2591 = vmatprep.subr.mxu0 0.0
    %2592 = vmatpush1.msra.mxu0 0.0
    %2593 = vmatprep.subr.mxu0 0.0
    %2594 = vmatpush1.msra.mxu0 0.0
    %2595 = vmatprep.subr.mxu0 0.0
    %2596 = vmatpush1.msra.mxu0 0.0
    %2597 = vmatprep.subr.mxu0 0.0
    %2598 = vmatpush1.msra.mxu0 0.0
    %2599 = vmatprep.subr.mxu0 0.0
    %2600 = vmatpush1.msra.mxu0 0.0
    %2601 = vmatprep.subr.mxu0 0.0
    %2602 = vmatpush1.msra.mxu0 0.0
    %2603 = vmatprep.subr.mxu0 0.0
    %2604 = vmatpush1.msra.mxu0 0.0
    %2605 = vmatprep.subr.mxu0 0.0
    %2606 = vmatpush1.msra.mxu0 0.0
    %2607 = vmatprep.subr.mxu0 0.0
    %2608 = vmatpush1.msra.mxu0 0.0
    %2609 = vmatprep.subr.mxu0 0.0
    %2610 = vmatpush1.msra.mxu0 0.0
    %2611 = vmatprep.subr.mxu0 0.0
    %2612 = vmatpush1.msra.mxu0 0.0
    %2613 = vmatprep.subr.mxu0 0.0
    %2614 = vmatpush1.msra.mxu0 0.0
    %2615 = vmatprep.subr.mxu0 0.0
    %2616 = vmatpush1.msra.mxu0 0.0
    %2617 = vmatprep.subr.mxu0 0.0
    %2618 = vmatpush1.msra.mxu0 0.0
    %2619 = vmatprep.subr.mxu0 0.0
    %2620 = vmatpush1.msra.mxu0 0.0
    %2621 = vmatprep.subr.mxu0 0.0
    %2622 = vmatpush1.msra.mxu0 0.0
    %2623 = vmatprep.subr.mxu0 0.0
    %2624 = vmatpush1.msra.mxu0 0.0
    %2625 = vmatprep.mubr.f32.mxu0 0.0
    %2626 = vmatmul.mubr.f32.gmra.mrb[0].mxu0 %v2556
    %v2627 = vpop.f32.mrb[0].mxu0
    %v2628 = vadd.f32 0.0, %v2627
    %v2629 = vpop.f32.mrb[0].mxu0
    %2630 = vmatprep.mubr.f32.mxu0 0.0
    %2631 = vmatmul.mubr.f32.gmra.mrb[0].mxu0 %v2559
    %v2632 = vpop.f32.mrb[0].mxu0
    %v2633 = vadd.f32 0.0, %v2632
    %v2634 = vpop.f32.mrb[0].mxu0
    %2635 = vdwg.mxu0
    %v2636 = vadd.f32 %v2412, %v2628
    %v2637 = vadd.f32 %v2413, %v2633
    %v2638 = vld [vmem:[%s7] sm:$0x1]
    %v2639 = vmul.f32 %v2636, %v2636
    %v2640 = vmul.f32 %v2637, %v2637
    %v2641 = vsel %vm65, %v2639, 0.0
    %2642 = vadd.xlane.f32.xlu0 %v2641
    %v2643 = vpop.xlane.xlu0 %2642
    %v2644 = vsel %vm65, %v2640, 0.0
    %2645 = vadd.xlane.f32.xlu0 %v2644
    %v2646 = vpop.xlane.xlu0 %2645
    %v2647 = vmul.f32 %v2643, %v72
    %v2648 = vmul.f32 %v2646, %v72
    %v2649 = vadd.f32 %v2647, 1e-06
    %v2650 = vadd.f32 %v2648, 1e-06
    %v2651 = vrsqrt.pop %v2649
    %v2652 = vrsqrt.pop %v2650
    %v2653 = vmul.f32 %v2636, %v2651
    %v2654 = vmul.f32 %v2637, %v2652
    %v2656 = vlaneseq
    %v2657 = vshrl.u32 %v2656, 7
    %v2658 = vsub.s32 0, %v2657
    %v2659 = vrot.slane %v2638, %v2658
    %v2661 = vmul.f32 %v2653, %v2659
    %v2662 = vmul.f32 %v2654, %v2659
    %2663 = vst.msk [vmem:[#allocation5] sm:$0xff] %vm65, %v2661
    %2664 = vst.msk [vmem:[#allocation5 + $0x8] sm:$0xff] %vm65, %v2662
    // Predicated region
    $region38: #{tpu_custom_call.1} parent=1 // pred_check
      _
    $region39: #{tpu_custom_call.1} parent=1 // pred_check_branch
      %2666 = sbr.rel (0) target = $region41
    $region40: #{tpu_custom_call.1} parent=1 // pred_region
      %s2668 = ssub.s32 256, 256
      %2669 = vsyncadd [#allocation4], %s2668
      %s2670 = sshll.u32 [#allocation5], 4
      %s2671 = int_to_ptr.vmem [resolvable:$true] %s2670
      %2676 = dma.vmem_to_hbm [thread:$0]  %s2671, 256, %s8, [#allocation4], 128, 128, 8
    $region41: #{tpu_custom_call.1} parent=1 // pred_fallthru
      _
    // Predicated region
    $region42: #{tpu_custom_call.1} parent=1 // pred_check
      _
    $region43: #{tpu_custom_call.1} parent=1 // pred_check_branch
      %2678 = sbr.rel (0) target = $region45
    $region44: #{tpu_custom_call.1} parent=1 // pred_region
      %2679 = dma.done [#allocation4], 256
    $region45: #{tpu_custom_call.1} parent=1 // pred_fallthru
      _
    %2680 = vsyncpa [#allocation3], 1
    %2681 = vsyncpa [#allocation4], 1

</llo_original>
